<compile_context>
chip_gen: v7x
topology: tpu7x:2x2x1
jax: 0.10.0
libtpu: 0.0.40
codegen_flags: <defaults>
</compile_context>

<pallas_src>
import functools

import jax
import jax.numpy as jnp
from jax.experimental import pallas as pl
from jax.experimental.pallas import tpu as pltpu


# Tap order = (kd, kh, kw) row-major, matching the conv-weight column order.
_TAPS = tuple((dd, dh, dw) for dd in (-1, 0, 1)
              for dh in (-1, 0, 1) for dw in (-1, 0, 1))


def _sublane_tile(dtype):
    """Rows per packed sublane tile for `dtype` (f32 -> 8, bf16 -> 16)."""
    return 8 * (4 // jnp.dtype(dtype).itemsize)


def _round_up(x, m):
    return (x + m - 1) // m * m


# ----------------------------- in-kernel helpers ------------------------------
def _gn_swish(x, gmat_ref, gamma_ref, beta_ref, eps):
    """GroupNorm + Swish on a (C, S) f32 tile.

    Reduce over S first (cheap lane reductions to (C, 1)), then combine
    channels of the same group with the tiny precomputed matrix
    gmat[c, c'] = 1/(Cg*S) if c, c' share a group else 0.  No extra (C, S)
    intermediates beyond the normalized output itself.
    """
    s1 = jnp.sum(x, axis=1, keepdims=True)                         # (C, 1)
    s2 = jnp.sum(x * x, axis=1, keepdims=True)                     # (C, 1)
    mean = jnp.dot(gmat_ref[...], s1, preferred_element_type=jnp.float32)
    ex2 = jnp.dot(gmat_ref[...], s2, preferred_element_type=jnp.float32)
    var = jnp.maximum(ex2 - mean * mean, 0.0)                      # robustness
    inv = jax.lax.rsqrt(var + eps)
    y = (x - mean) * inv * gamma_ref[...] + beta_ref[...]
    return y * jax.nn.sigmoid(y)                                   # Swish


def _pad_rows(a, rows):
    """Zero-pad a (C, S) value to (rows, S) along the sublane axis."""
    c = a.shape[0]
    if rows == c:
        return a
    return jnp.concatenate([a, jnp.zeros((rows - c, a.shape[1]), a.dtype)],
                           axis=0)


def _build_patches(h, masks_ref, p_ref, spatial, c_pad, mm_dtype):
    """Write the 27 'same'-padded 3x3x3 tap slabs of h (C, S) into p_ref.

    Tap t occupies rows [t*c_pad, (t+1)*c_pad) of the scratch (tile-aligned,
    full-tile stores).  Each tap is an XLU lane rotation (pltpu.roll) of h plus
    a boundary mask zeroing positions whose true neighbour is outside the
    D*H*W volume (exactly equivalent to zero padding).
    """
    D, H, W = spatial
    C, S = h.shape
    if c_pad > C:
        # Pad once; the zero rows roll/mask to zero, so every tap slab is
        # already the full c_pad rows -> unmasked full-tile stores.
        h = jnp.concatenate([h, jnp.zeros((c_pad - C, S), h.dtype)], axis=0)
    for t, (dd, dh, dw) in enumerate(_TAPS):
        if (dd, dh, dw) == (0, 0, 0):
            slab = h.astype(mm_dtype)                       # centre tap: mask == 1
        else:
            off = (dd * H * W + dh * W + dw) % S            # flat neighbour offset
            rolled = pltpu.roll(h, shift=(S - off) % S, axis=1)   # XLU rotate
            slab = rolled.astype(mm_dtype) * masks_ref[t:t + 1, :]
        p_ref[t * c_pad:(t + 1) * c_pad, :] = slab


# --------------------------------- the kernel ----------------------------------
def _resnet_block_kernel(x_ref, masks_ref,
                         gm1_ref, g1w_ref, g1b_ref, w1_ref, b1_ref,
                         gm2_ref, g2w_ref, g2b_ref, w2r_ref, b2r_ref,
                         o_ref, p_ref,
                         *, spatial, eps, mm_dtype, cin_pad, cout_pad):
    x = x_ref[0].astype(jnp.float32)                                # (Cin, S)

    # ---- block1: GroupNorm -> Swish -> Conv3d(3, pad=1) ----------------------
    h = _gn_swish(x, gm1_ref, g1w_ref, g1b_ref, eps)
    _build_patches(h, masks_ref, p_ref, spatial, cin_pad, mm_dtype)
    n1 = 27 * cin_pad
    h1 = jnp.dot(w1_ref[...], p_ref[0:n1, :],
                 preferred_element_type=jnp.float32) + b1_ref[...]  # (Cout, S)

    # ---- block2: GroupNorm -> Swish -> Conv3d(3, pad=1) (+ fused residual) ---
    h2 = _gn_swish(h1, gm2_ref, g2w_ref, g2b_ref, eps)
    _build_patches(h2, masks_ref, p_ref, spatial, cout_pad, mm_dtype)
    n2 = 27 * cout_pad
    # Residual 1x1x1 conv: x appended as extra K rows -> single MXU matmul.
    p_ref[n2:n2 + cin_pad, :] = _pad_rows(x_ref[0].astype(mm_dtype), cin_pad)
    acc = jnp.dot(w2r_ref[...], p_ref[0:n2 + cin_pad, :],
                  preferred_element_type=jnp.float32) + b2r_ref[...]

    o_ref[0] = acc.astype(o_ref.dtype)                              # lane-dense store


# --------------------------- wrapper-side constants ----------------------------
def _tap_masks(D, H, W):
    """(27, S) 0/1 validity masks for each 3x3x3 tap (0 where padding)."""
    s = jnp.arange(D * H * W, dtype=jnp.int32)
    d = s // (H * W)
    h = (s // W) % H
    w = s % W
    rows = []
    for dd, dh, dw in _TAPS:
        ok = ((d + dd >= 0) & (d + dd < D) &
              (h + dh >= 0) & (h + dh < H) &
              (w + dw >= 0) & (w + dw < W))
        rows.append(ok)
    return jnp.stack(rows, axis=0).astype(jnp.float32)


def _group_mean_matrix(C, groups, S):
    """(C, C) matrix averaging per-channel sums within each GroupNorm group."""
    cg = C // groups
    gid = jnp.arange(C, dtype=jnp.int32) // cg
    same = (gid[:, None] == gid[None, :]).astype(jnp.float32)
    return same / float(cg * S)


# ------------------------------- module forward --------------------------------
def resnet_bloc_with_attn(x, p, groups, *, matmul_dtype=jnp.bfloat16, eps=1e-5):
    """Forward of ResnetBlocWithAttn (== ResnetBlock; attn branch never runs)."""
    B, Cin, D, H, W = x.shape
    Cout = p["conv1_w"].shape[0]
    S = D * H * W

    tile = _sublane_tile(matmul_dtype)
    cin_pad = _round_up(Cin, tile)
    cout_pad = _round_up(Cout, tile)
    n_scratch = max(27 * cin_pad, 27 * cout_pad + cin_pad)

    x2 = x.reshape(B, Cin, S)                    # free reshape, no transpose

    # Boundary masks in the matmul dtype so the tap multiply/store stay there.
    masks = _tap_masks(D, H, W).astype(matmul_dtype)
    gm1 = _group_mean_matrix(Cin, groups, S)
    gm2 = _group_mean_matrix(Cout, groups, S)

    # Conv weights -> (Cout, 27, C), zero-pad C to the tile-aligned slab rows,
    # column order (kd, kh, kw, ci) matches _TAPS / the patch-scratch rows.
    def conv_w(w, c_pad):
        co, ci = w.shape[0], w.shape[1]
        w = w.transpose(0, 2, 3, 4, 1).reshape(co, 27, ci)
        if c_pad > ci:
            w = jnp.pad(w, ((0, 0), (0, 0), (0, c_pad - ci)))
        return w.reshape(co, 27 * c_pad)

    w1 = conv_w(p["conv1_w"], cin_pad).astype(matmul_dtype)
    w2 = conv_w(p["conv2_w"], cout_pad)

    # Residual 1x1x1 conv (identity when dim == dim_out) folded into conv2.
    if "res_w" in p:
        wr = p["res_w"].reshape(Cout, Cin)
        rb = p["res_b"]
    else:
        wr = jnp.eye(Cout, Cin, dtype=jnp.float32)
        rb = jnp.zeros((Cout,), jnp.float32)
    if cin_pad > Cin:
        wr = jnp.pad(wr, ((0, 0), (0, cin_pad - Cin)))
    w2r = jnp.concatenate([w2, wr], axis=1).astype(matmul_dtype)

    col = lambda v: v.reshape(-1, 1).astype(jnp.float32)
    g1w, g1b = col(p["gn1_w"]), col(p["gn1_b"])
    g2w, g2b = col(p["gn2_w"]), col(p["gn2_b"])
    b1 = col(p["conv1_b"])
    b2r = col(p["conv2_b"] + rb)                 # conv2 + residual biases fused

    def bcast(shape):
        return pl.BlockSpec(shape, lambda b: (0,) * len(shape))

    # Raise the scoped-VMEM limit only when the estimated footprint needs it.
    mm_sz = jnp.dtype(matmul_dtype).itemsize
    io_sz = jnp.dtype(x.dtype).itemsize
    est = (2 * ((Cin + Cout) * S * io_sz                          # x / out blocks
                + (27 * S + w1.size + w2r.size + 2 * Cout) * mm_sz
                + (gm1.size + gm2.size + 2 * (Cin + Cout)) * 4)
           + n_scratch * S * mm_sz                                # patch scratch
           + 4 * max(Cin, Cout) * S * 4)                          # live f32 activations
    vmem_limit = None if est < (24 << 20) else min(int(est) + (8 << 20), 96 << 20)

    cost = pl.CostEstimate(
        flops=2 * B * S * Cout * (27 * Cin + 27 * Cout + Cin),
        transcendentals=B * S * (Cin + Cout),                     # two Swish sigmoids
        bytes_accessed=int(B * (Cin + Cout) * S * io_sz
                           + (w1.size + w2r.size + 27 * S) * mm_sz))

    out = pl.pallas_call(
        functools.partial(_resnet_block_kernel, spatial=(D, H, W), eps=eps,
                          mm_dtype=matmul_dtype, cin_pad=cin_pad,
                          cout_pad=cout_pad),
        out_shape=jax.ShapeDtypeStruct((B, Cout, S), x.dtype),
        grid=(B,),
        in_specs=[
            pl.BlockSpec((1, Cin, S), lambda b: (b, 0, 0)),           # x (per batch)
            bcast((27, S)),                                           # tap masks
            bcast((Cin, Cin)), bcast((Cin, 1)), bcast((Cin, 1)),      # GN1
            bcast((Cout, 27 * cin_pad)), bcast((Cout, 1)),            # conv1
            bcast((Cout, Cout)), bcast((Cout, 1)), bcast((Cout, 1)),  # GN2
            bcast((Cout, 27 * cout_pad + cin_pad)), bcast((Cout, 1)), # conv2 + res
        ],
        out_specs=pl.BlockSpec((1, Cout, S), lambda b: (b, 0, 0)),
        scratch_shapes=[pltpu.VMEM((n_scratch, S), matmul_dtype)],   # ONE reused patch scratch
        compiler_params=pltpu.CompilerParams(
            dimension_semantics=("parallel",),        # B grid steps across TCs
            vmem_limit_bytes=vmem_limit),
        cost_estimate=cost,
    )(x2, masks, gm1, g1w, g1b, w1, b1, gm2, g2w, g2b, w2r, b2r)

    return out.reshape(B, Cout, D, H, W)


# ------------------------------- pure-JAX reference -----------------------------
def _ref_gn_swish(x, gamma, beta, groups, eps=1e-5):
    B, C, D, H, W = x.shape
    xg = x.reshape(B, groups, -1)
    mean = xg.mean(axis=2, keepdims=True)
    var = ((xg - mean) ** 2).mean(axis=2, keepdims=True)
    xn = ((xg - mean) / jnp.sqrt(var + eps)).reshape(B, C, D, H, W)
    y = xn * gamma[None, :, None, None, None] + beta[None, :, None, None, None]
    return y * jax.nn.sigmoid(y)


def _ref_conv3d(x, w, b, pad):
    out = jax.lax.conv_general_dilated(
        x, w, window_strides=(1, 1, 1), padding=[(pad, pad)] * 3,
        dimension_numbers=("NCDHW", "OIDHW", "NCDHW"),
        precision=jax.lax.Precision.HIGHEST)
    return out + b[None, :, None, None, None]


def _ref_forward(x, p, groups):
    h = _ref_conv3d(_ref_gn_swish(x, p["gn1_w"], p["gn1_b"], groups),
                    p["conv1_w"], p["conv1_b"], 1)
    h = _ref_conv3d(_ref_gn_swish(h, p["gn2_w"], p["gn2_b"], groups),
                    p["conv2_w"], p["conv2_b"], 1)
    return h + _ref_conv3d(x, p["res_w"], p["res_b"], 0)


# --------------------------------------- main -----------------------------------
if __name__ == "__main__":
    B, dim, dim_out, groups = 2, 8, 16, 4        # norm_groups divides dim & dim_out
    D = H = W = 8

    key = jax.random.PRNGKey(0)
    ks = jax.random.split(key, 11)
    params = {
        "gn1_w": 1.0 + 0.1 * jax.random.normal(ks[0], (dim,), jnp.float32),
        "gn1_b": 0.1 * jax.random.normal(ks[1], (dim,), jnp.float32),
        "conv1_w": 0.1 * jax.random.normal(ks[2], (dim_out, dim, 3, 3, 3), jnp.float32),
        "conv1_b": 0.1 * jax.random.normal(ks[3], (dim_out,), jnp.float32),
        "gn2_w": 1.0 + 0.1 * jax.random.normal(ks[4], (dim_out,), jnp.float32),
        "gn2_b": 0.1 * jax.random.normal(ks[5], (dim_out,), jnp.float32),
        "conv2_w": 0.1 * jax.random.normal(ks[6], (dim_out, dim_out, 3, 3, 3), jnp.float32),
        "conv2_b": 0.1 * jax.random.normal(ks[7], (dim_out,), jnp.float32),
        "res_w": 0.1 * jax.random.normal(ks[8], (dim_out, dim, 1, 1, 1), jnp.float32),
        "res_b": 0.1 * jax.random.normal(ks[9], (dim_out,), jnp.float32),
    }
    x = jax.random.normal(ks[10], (B, dim, D, H, W), jnp.float32)

    ref = _ref_forward(x, params, groups)

    # f32 MXU operands: tight correctness check.
    fwd_f32 = jax.jit(functools.partial(resnet_bloc_with_attn, groups=groups,
                                        matmul_dtype=jnp.float32))
    out = jax.block_until_ready(fwd_f32(x, params))
    assert out.shape == (B, dim_out, D, H, W), out.shape
    err = float(jnp.max(jnp.abs(out - ref)))
    assert jnp.allclose(out, ref, atol=1e-2, rtol=1e-2), f"f32 max abs err {err}"

    # bf16 MXU operands + bf16 tap math (recommended on v6e/v7x), f32 accumulation.
    fwd_bf16 = jax.jit(functools.partial(resnet_bloc_with_attn, groups=groups,
                                         matmul_dtype=jnp.bfloat16))
    out_bf16 = jax.block_until_ready(fwd_bf16(x, params))
    err_bf16 = float(jnp.max(jnp.abs(out_bf16 - ref)))
    assert jnp.allclose(out_bf16, ref, atol=5e-2, rtol=5e-2), \
        f"bf16 max abs err {err_bf16}"

    print("KERNEL_OK")
</pallas_src>

<mosaic_0001>
module attributes {stable_mosaic.version = 11 : i64} {
  func.func @_resnet_block_kernel(%arg0: i32, %arg1: memref<1x8x512xf32, #tpu.memory_space<vmem>>, %arg2: memref<27x512xf32, #tpu.memory_space<vmem>>, %arg3: memref<8x8xf32, #tpu.memory_space<vmem>>, %arg4: memref<8x1xf32, #tpu.memory_space<vmem>>, %arg5: memref<8x1xf32, #tpu.memory_space<vmem>>, %arg6: memref<16x216xf32, #tpu.memory_space<vmem>>, %arg7: memref<16x1xf32, #tpu.memory_space<vmem>>, %arg8: memref<16x16xf32, #tpu.memory_space<vmem>>, %arg9: memref<16x1xf32, #tpu.memory_space<vmem>>, %arg10: memref<16x1xf32, #tpu.memory_space<vmem>>, %arg11: memref<16x440xf32, #tpu.memory_space<vmem>>, %arg12: memref<16x1xf32, #tpu.memory_space<vmem>>, %arg13: memref<1x16x512xf32, #tpu.memory_space<vmem>>, %arg14: memref<440x512xf32, #tpu.memory_space<vmem>>) attributes {dimension_semantics = [#tpu.dimension_semantics<parallel>], iteration_bounds = array<i64: 2>, scalar_prefetch = 0 : i64, scratch_operands = 1 : i64, tpu.core_type = #tpu.core_type<tc>, window_params = [{transform_indices = @transform_0, window_bounds = array<i64: 1, 8, 512>}, {pipeline_mode = #tpu.pipeline_mode<synchronous>, transform_indices = @transform_1, window_bounds = array<i64: 27, 512>}, {pipeline_mode = #tpu.pipeline_mode<synchronous>, transform_indices = @transform_2, window_bounds = array<i64: 8, 8>}, {pipeline_mode = #tpu.pipeline_mode<synchronous>, transform_indices = @transform_3, window_bounds = array<i64: 8, 1>}, {pipeline_mode = #tpu.pipeline_mode<synchronous>, transform_indices = @transform_4, window_bounds = array<i64: 8, 1>}, {pipeline_mode = #tpu.pipeline_mode<synchronous>, transform_indices = @transform_5, window_bounds = array<i64: 16, 216>}, {pipeline_mode = #tpu.pipeline_mode<synchronous>, transform_indices = @transform_6, window_bounds = array<i64: 16, 1>}, {pipeline_mode = #tpu.pipeline_mode<synchronous>, transform_indices = @transform_7, window_bounds = array<i64: 16, 16>}, {pipeline_mode = #tpu.pipeline_mode<synchronous>, transform_indices = @transform_8, window_bounds = array<i64: 16, 1>}, {pipeline_mode = #tpu.pipeline_mode<synchronous>, transform_indices = @transform_9, window_bounds = array<i64: 16, 1>}, {pipeline_mode = #tpu.pipeline_mode<synchronous>, transform_indices = @transform_10, window_bounds = array<i64: 16, 440>}, {pipeline_mode = #tpu.pipeline_mode<synchronous>, transform_indices = @transform_11, window_bounds = array<i64: 16, 1>}, {transform_indices = @transform_12, window_bounds = array<i64: 1, 16, 512>}]} {
    %c0 = arith.constant 0 : index
    %c0_0 = arith.constant 0 : index
    %c0_1 = arith.constant 0 : index
    %0 = vector.load %arg1[%c0, %c0_0, %c0_1] : memref<1x8x512xf32, #tpu.memory_space<vmem>>, vector<1x8x512xf32>
    %1 = vector.shape_cast %0 : vector<1x8x512xf32> to vector<8x512xf32>
    %cst = arith.constant dense<0.000000e+00> : vector<8xf32>
    %2 = vector.multi_reduction <add>, %1, %cst [1] : vector<8x512xf32> to vector<8xf32>
    %3 = vector.shape_cast %2 : vector<8xf32> to vector<8x1xf32>
    %4 = arith.mulf %1, %1 : vector<8x512xf32>
    %cst_2 = arith.constant dense<0.000000e+00> : vector<8xf32>
    %5 = vector.multi_reduction <add>, %4, %cst_2 [1] : vector<8x512xf32> to vector<8xf32>
    %6 = vector.shape_cast %5 : vector<8xf32> to vector<8x1xf32>
    %c0_3 = arith.constant 0 : index
    %c0_4 = arith.constant 0 : index
    %7 = vector.load %arg3[%c0_3, %c0_4] : memref<8x8xf32, #tpu.memory_space<vmem>>, vector<8x8xf32>
    %cst_5 = arith.constant dense<0.000000e+00> : vector<8x1xf32>
    %8 = tpu.matmul %7, %3, %cst_5 {dimension_numbers = #tpu.dot_dimension_numbers<[1], [0], [0], [1], [0, 0, 1, 1], [], []>} : vector<8x8xf32>, vector<8x1xf32>, vector<8x1xf32> -> vector<8x1xf32>
    %c0_6 = arith.constant 0 : index
    %c0_7 = arith.constant 0 : index
    %9 = vector.load %arg3[%c0_6, %c0_7] : memref<8x8xf32, #tpu.memory_space<vmem>>, vector<8x8xf32>
    %cst_8 = arith.constant dense<0.000000e+00> : vector<8x1xf32>
    %10 = tpu.matmul %9, %6, %cst_8 {dimension_numbers = #tpu.dot_dimension_numbers<[1], [0], [0], [1], [0, 0, 1, 1], [], []>} : vector<8x8xf32>, vector<8x1xf32>, vector<8x1xf32> -> vector<8x1xf32>
    %11 = arith.mulf %8, %8 : vector<8x1xf32>
    %12 = arith.subf %10, %11 : vector<8x1xf32>
    %cst_9 = arith.constant 0.000000e+00 : f32
    %13 = vector.broadcast %cst_9 : f32 to vector<8x1xf32>
    %14 = arith.maximumf %12, %13 : vector<8x1xf32>
    %cst_10 = arith.constant 9.99999974E-6 : f32
    %15 = vector.broadcast %cst_10 : f32 to vector<8x1xf32>
    %16 = arith.addf %14, %15 : vector<8x1xf32>
    %17 = math.rsqrt %16 : vector<8x1xf32>
    %18 = vector.broadcast %8 : vector<8x1xf32> to vector<8x512xf32>
    %19 = arith.subf %1, %18 : vector<8x512xf32>
    %20 = vector.broadcast %17 : vector<8x1xf32> to vector<8x512xf32>
    %21 = arith.mulf %19, %20 : vector<8x512xf32>
    %c0_11 = arith.constant 0 : index
    %c0_12 = arith.constant 0 : index
    %22 = vector.load %arg4[%c0_11, %c0_12] : memref<8x1xf32, #tpu.memory_space<vmem>>, vector<8x1xf32>
    %23 = vector.broadcast %22 : vector<8x1xf32> to vector<8x512xf32>
    %24 = arith.mulf %21, %23 : vector<8x512xf32>
    %c0_13 = arith.constant 0 : index
    %c0_14 = arith.constant 0 : index
    %25 = vector.load %arg5[%c0_13, %c0_14] : memref<8x1xf32, #tpu.memory_space<vmem>>, vector<8x1xf32>
    %26 = vector.broadcast %25 : vector<8x1xf32> to vector<8x512xf32>
    %27 = arith.addf %24, %26 : vector<8x512xf32>
    %28 = arith.negf %27 : vector<8x512xf32>
    %29 = math.exp %28 : vector<8x512xf32>
    %cst_15 = arith.constant 1.000000e+00 : f32
    %30 = vector.broadcast %cst_15 : f32 to vector<8x512xf32>
    %31 = arith.addf %30, %29 : vector<8x512xf32>
    %32 = arith.divf %30, %31 : vector<8x512xf32>
    %33 = arith.mulf %27, %32 : vector<8x512xf32>
    %c73_i32 = arith.constant 73 : i32
    %34 = tpu.dynamic_rotate %33 by %c73_i32 dim 1 : vector<8x512xf32>, i32 -> vector<8x512xf32>
    %c0_16 = arith.constant 0 : index
    %c0_17 = arith.constant 0 : index
    %35 = vector.load %arg2[%c0_16, %c0_17] : memref<27x512xf32, #tpu.memory_space<vmem>>, vector<1x512xf32>
    %36 = vector.broadcast %35 : vector<1x512xf32> to vector<8x512xf32>
    %37 = arith.mulf %34, %36 : vector<8x512xf32>
    %c0_18 = arith.constant 0 : index
    %c0_19 = arith.constant 0 : index
    %38 = vector.load %arg14[%c0_18, %c0_19] : memref<440x512xf32, #tpu.memory_space<vmem>>, vector<8x512xf32>
    tpu.vector_store %arg14[%c0_18, %c0_19], %37 {strides = array<i32>} : memref<440x512xf32, #tpu.memory_space<vmem>>, vector<8x512xf32>,
    %c72_i32 = arith.constant 72 : i32
    %39 = tpu.dynamic_rotate %33 by %c72_i32 dim 1 : vector<8x512xf32>, i32 -> vector<8x512xf32>
    %c1 = arith.constant 1 : index
    %c0_20 = arith.constant 0 : index
    %40 = vector.load %arg2[%c1, %c0_20] : memref<27x512xf32, #tpu.memory_space<vmem>>, vector<1x512xf32>
    %41 = vector.broadcast %40 : vector<1x512xf32> to vector<8x512xf32>
    %42 = arith.mulf %39, %41 : vector<8x512xf32>
    %c8 = arith.constant 8 : index
    %c0_21 = arith.constant 0 : index
    %43 = vector.load %arg14[%c8, %c0_21] : memref<440x512xf32, #tpu.memory_space<vmem>>, vector<8x512xf32>
    tpu.vector_store %arg14[%c8, %c0_21], %42 {strides = array<i32>} : memref<440x512xf32, #tpu.memory_space<vmem>>, vector<8x512xf32>,
    %c71_i32 = arith.constant 71 : i32
    %44 = tpu.dynamic_rotate %33 by %c71_i32 dim 1 : vector<8x512xf32>, i32 -> vector<8x512xf32>
    %c2 = arith.constant 2 : index
    %c0_22 = arith.constant 0 : index
    %45 = vector.load %arg2[%c2, %c0_22] : memref<27x512xf32, #tpu.memory_space<vmem>>, vector<1x512xf32>
    %46 = vector.broadcast %45 : vector<1x512xf32> to vector<8x512xf32>
    %47 = arith.mulf %44, %46 : vector<8x512xf32>
    %c16 = arith.constant 16 : index
    %c0_23 = arith.constant 0 : index
    %48 = vector.load %arg14[%c16, %c0_23] : memref<440x512xf32, #tpu.memory_space<vmem>>, vector<8x512xf32>
    tpu.vector_store %arg14[%c16, %c0_23], %47 {strides = array<i32>} : memref<440x512xf32, #tpu.memory_space<vmem>>, vector<8x512xf32>,
    %c65_i32 = arith.constant 65 : i32
    %49 = tpu.dynamic_rotate %33 by %c65_i32 dim 1 : vector<8x512xf32>, i32 -> vector<8x512xf32>
    %c3 = arith.constant 3 : index
    %c0_24 = arith.constant 0 : index
    %50 = vector.load %arg2[%c3, %c0_24] : memref<27x512xf32, #tpu.memory_space<vmem>>, vector<1x512xf32>
    %51 = vector.broadcast %50 : vector<1x512xf32> to vector<8x512xf32>
    %52 = arith.mulf %49, %51 : vector<8x512xf32>
    %c24 = arith.constant 24 : index
    %c0_25 = arith.constant 0 : index
    %53 = vector.load %arg14[%c24, %c0_25] : memref<440x512xf32, #tpu.memory_space<vmem>>, vector<8x512xf32>
    tpu.vector_store %arg14[%c24, %c0_25], %52 {strides = array<i32>} : memref<440x512xf32, #tpu.memory_space<vmem>>, vector<8x512xf32>,
    %c64_i32 = arith.constant 64 : i32
    %54 = tpu.dynamic_rotate %33 by %c64_i32 dim 1 : vector<8x512xf32>, i32 -> vector<8x512xf32>
    %c4 = arith.constant 4 : index
    %c0_26 = arith.constant 0 : index
    %55 = vector.load %arg2[%c4, %c0_26] : memref<27x512xf32, #tpu.memory_space<vmem>>, vector<1x512xf32>
    %56 = vector.broadcast %55 : vector<1x512xf32> to vector<8x512xf32>
    %57 = arith.mulf %54, %56 : vector<8x512xf32>
    %c32 = arith.constant 32 : index
    %c0_27 = arith.constant 0 : index
    %58 = vector.load %arg14[%c32, %c0_27] : memref<440x512xf32, #tpu.memory_space<vmem>>, vector<8x512xf32>
    tpu.vector_store %arg14[%c32, %c0_27], %57 {strides = array<i32>} : memref<440x512xf32, #tpu.memory_space<vmem>>, vector<8x512xf32>,
    %c63_i32 = arith.constant 63 : i32
    %59 = tpu.dynamic_rotate %33 by %c63_i32 dim 1 : vector<8x512xf32>, i32 -> vector<8x512xf32>
    %c5 = arith.constant 5 : index
    %c0_28 = arith.constant 0 : index
    %60 = vector.load %arg2[%c5, %c0_28] : memref<27x512xf32, #tpu.memory_space<vmem>>, vector<1x512xf32>
    %61 = vector.broadcast %60 : vector<1x512xf32> to vector<8x512xf32>
    %62 = arith.mulf %59, %61 : vector<8x512xf32>
    %c40 = arith.constant 40 : index
    %c0_29 = arith.constant 0 : index
    %63 = vector.load %arg14[%c40, %c0_29] : memref<440x512xf32, #tpu.memory_space<vmem>>, vector<8x512xf32>
    tpu.vector_store %arg14[%c40, %c0_29], %62 {strides = array<i32>} : memref<440x512xf32, #tpu.memory_space<vmem>>, vector<8x512xf32>,
    %c57_i32 = arith.constant 57 : i32
    %64 = tpu.dynamic_rotate %33 by %c57_i32 dim 1 : vector<8x512xf32>, i32 -> vector<8x512xf32>
    %c6 = arith.constant 6 : index
    %c0_30 = arith.constant 0 : index
    %65 = vector.load %arg2[%c6, %c0_30] : memref<27x512xf32, #tpu.memory_space<vmem>>, vector<1x512xf32>
    %66 = vector.broadcast %65 : vector<1x512xf32> to vector<8x512xf32>
    %67 = arith.mulf %64, %66 : vector<8x512xf32>
    %c48 = arith.constant 48 : index
    %c0_31 = arith.constant 0 : index
    %68 = vector.load %arg14[%c48, %c0_31] : memref<440x512xf32, #tpu.memory_space<vmem>>, vector<8x512xf32>
    tpu.vector_store %arg14[%c48, %c0_31], %67 {strides = array<i32>} : memref<440x512xf32, #tpu.memory_space<vmem>>, vector<8x512xf32>,
    %c56_i32 = arith.constant 56 : i32
    %69 = tpu.dynamic_rotate %33 by %c56_i32 dim 1 : vector<8x512xf32>, i32 -> vector<8x512xf32>
    %c7 = arith.constant 7 : index
    %c0_32 = arith.constant 0 : index
    %70 = vector.load %arg2[%c7, %c0_32] : memref<27x512xf32, #tpu.memory_space<vmem>>, vector<1x512xf32>
    %71 = vector.broadcast %70 : vector<1x512xf32> to vector<8x512xf32>
    %72 = arith.mulf %69, %71 : vector<8x512xf32>
    %c56 = arith.constant 56 : index
    %c0_33 = arith.constant 0 : index
    %73 = vector.load %arg14[%c56, %c0_33] : memref<440x512xf32, #tpu.memory_space<vmem>>, vector<8x512xf32>
    tpu.vector_store %arg14[%c56, %c0_33], %72 {strides = array<i32>} : memref<440x512xf32, #tpu.memory_space<vmem>>, vector<8x512xf32>,
    %c55_i32 = arith.constant 55 : i32
    %74 = tpu.dynamic_rotate %33 by %c55_i32 dim 1 : vector<8x512xf32>, i32 -> vector<8x512xf32>
    %c8_34 = arith.constant 8 : index
    %c0_35 = arith.constant 0 : index
    %75 = vector.load %arg2[%c8_34, %c0_35] : memref<27x512xf32, #tpu.memory_space<vmem>>, vector<1x512xf32>
    %76 = vector.broadcast %75 : vector<1x512xf32> to vector<8x512xf32>
    %77 = arith.mulf %74, %76 : vector<8x512xf32>
    %c64 = arith.constant 64 : index
    %c0_36 = arith.constant 0 : index
    %78 = vector.load %arg14[%c64, %c0_36] : memref<440x512xf32, #tpu.memory_space<vmem>>, vector<8x512xf32>
    tpu.vector_store %arg14[%c64, %c0_36], %77 {strides = array<i32>} : memref<440x512xf32, #tpu.memory_space<vmem>>, vector<8x512xf32>,
    %c9_i32 = arith.constant 9 : i32
    %79 = tpu.dynamic_rotate %33 by %c9_i32 dim 1 : vector<8x512xf32>, i32 -> vector<8x512xf32>
    %c9 = arith.constant 9 : index
    %c0_37 = arith.constant 0 : index
    %80 = vector.load %arg2[%c9, %c0_37] : memref<27x512xf32, #tpu.memory_space<vmem>>, vector<1x512xf32>
    %81 = vector.broadcast %80 : vector<1x512xf32> to vector<8x512xf32>
    %82 = arith.mulf %79, %81 : vector<8x512xf32>
    %c72 = arith.constant 72 : index
    %c0_38 = arith.constant 0 : index
    %83 = vector.load %arg14[%c72, %c0_38] : memref<440x512xf32, #tpu.memory_space<vmem>>, vector<8x512xf32>
    tpu.vector_store %arg14[%c72, %c0_38], %82 {strides = array<i32>} : memref<440x512xf32, #tpu.memory_space<vmem>>, vector<8x512xf32>,
    %c8_i32 = arith.constant 8 : i32
    %84 = tpu.dynamic_rotate %33 by %c8_i32 dim 1 : vector<8x512xf32>, i32 -> vector<8x512xf32>
    %c10 = arith.constant 10 : index
    %c0_39 = arith.constant 0 : index
    %85 = vector.load %arg2[%c10, %c0_39] : memref<27x512xf32, #tpu.memory_space<vmem>>, vector<1x512xf32>
    %86 = vector.broadcast %85 : vector<1x512xf32> to vector<8x512xf32>
    %87 = arith.mulf %84, %86 : vector<8x512xf32>
    %c80 = arith.constant 80 : index
    %c0_40 = arith.constant 0 : index
    %88 = vector.load %arg14[%c80, %c0_40] : memref<440x512xf32, #tpu.memory_space<vmem>>, vector<8x512xf32>
    tpu.vector_store %arg14[%c80, %c0_40], %87 {strides = array<i32>} : memref<440x512xf32, #tpu.memory_space<vmem>>, vector<8x512xf32>,
    %c7_i32 = arith.constant 7 : i32
    %89 = tpu.dynamic_rotate %33 by %c7_i32 dim 1 : vector<8x512xf32>, i32 -> vector<8x512xf32>
    %c11 = arith.constant 11 : index
    %c0_41 = arith.constant 0 : index
    %90 = vector.load %arg2[%c11, %c0_41] : memref<27x512xf32, #tpu.memory_space<vmem>>, vector<1x512xf32>
    %91 = vector.broadcast %90 : vector<1x512xf32> to vector<8x512xf32>
    %92 = arith.mulf %89, %91 : vector<8x512xf32>
    %c88 = arith.constant 88 : index
    %c0_42 = arith.constant 0 : index
    %93 = vector.load %arg14[%c88, %c0_42] : memref<440x512xf32, #tpu.memory_space<vmem>>, vector<8x512xf32>
    tpu.vector_store %arg14[%c88, %c0_42], %92 {strides = array<i32>} : memref<440x512xf32, #tpu.memory_space<vmem>>, vector<8x512xf32>,
    %c1_i32 = arith.constant 1 : i32
    %94 = tpu.dynamic_rotate %33 by %c1_i32 dim 1 : vector<8x512xf32>, i32 -> vector<8x512xf32>
    %c12 = arith.constant 12 : index
    %c0_43 = arith.constant 0 : index
    %95 = vector.load %arg2[%c12, %c0_43] : memref<27x512xf32, #tpu.memory_space<vmem>>, vector<1x512xf32>
    %96 = vector.broadcast %95 : vector<1x512xf32> to vector<8x512xf32>
    %97 = arith.mulf %94, %96 : vector<8x512xf32>
    %c96 = arith.constant 96 : index
    %c0_44 = arith.constant 0 : index
    %98 = vector.load %arg14[%c96, %c0_44] : memref<440x512xf32, #tpu.memory_space<vmem>>, vector<8x512xf32>
    tpu.vector_store %arg14[%c96, %c0_44], %97 {strides = array<i32>} : memref<440x512xf32, #tpu.memory_space<vmem>>, vector<8x512xf32>,
    %c104 = arith.constant 104 : index
    %c0_45 = arith.constant 0 : index
    %99 = vector.load %arg14[%c104, %c0_45] : memref<440x512xf32, #tpu.memory_space<vmem>>, vector<8x512xf32>
    tpu.vector_store %arg14[%c104, %c0_45], %33 {strides = array<i32>} : memref<440x512xf32, #tpu.memory_space<vmem>>, vector<8x512xf32>,
    %c511_i32 = arith.constant 511 : i32
    %100 = tpu.dynamic_rotate %33 by %c511_i32 dim 1 : vector<8x512xf32>, i32 -> vector<8x512xf32>
    %c14 = arith.constant 14 : index
    %c0_46 = arith.constant 0 : index
    %101 = vector.load %arg2[%c14, %c0_46] : memref<27x512xf32, #tpu.memory_space<vmem>>, vector<1x512xf32>
    %102 = vector.broadcast %101 : vector<1x512xf32> to vector<8x512xf32>
    %103 = arith.mulf %100, %102 : vector<8x512xf32>
    %c112 = arith.constant 112 : index
    %c0_47 = arith.constant 0 : index
    %104 = vector.load %arg14[%c112, %c0_47] : memref<440x512xf32, #tpu.memory_space<vmem>>, vector<8x512xf32>
    tpu.vector_store %arg14[%c112, %c0_47], %103 {strides = array<i32>} : memref<440x512xf32, #tpu.memory_space<vmem>>, vector<8x512xf32>,
    %c505_i32 = arith.constant 505 : i32
    %105 = tpu.dynamic_rotate %33 by %c505_i32 dim 1 : vector<8x512xf32>, i32 -> vector<8x512xf32>
    %c15 = arith.constant 15 : index
    %c0_48 = arith.constant 0 : index
    %106 = vector.load %arg2[%c15, %c0_48] : memref<27x512xf32, #tpu.memory_space<vmem>>, vector<1x512xf32>
    %107 = vector.broadcast %106 : vector<1x512xf32> to vector<8x512xf32>
    %108 = arith.mulf %105, %107 : vector<8x512xf32>
    %c120 = arith.constant 120 : index
    %c0_49 = arith.constant 0 : index
    %109 = vector.load %arg14[%c120, %c0_49] : memref<440x512xf32, #tpu.memory_space<vmem>>, vector<8x512xf32>
    tpu.vector_store %arg14[%c120, %c0_49], %108 {strides = array<i32>} : memref<440x512xf32, #tpu.memory_space<vmem>>, vector<8x512xf32>,
    %c504_i32 = arith.constant 504 : i32
    %110 = tpu.dynamic_rotate %33 by %c504_i32 dim 1 : vector<8x512xf32>, i32 -> vector<8x512xf32>
    %c16_50 = arith.constant 16 : index
    %c0_51 = arith.constant 0 : index
    %111 = vector.load %arg2[%c16_50, %c0_51] : memref<27x512xf32, #tpu.memory_space<vmem>>, vector<1x512xf32>
    %112 = vector.broadcast %111 : vector<1x512xf32> to vector<8x512xf32>
    %113 = arith.mulf %110, %112 : vector<8x512xf32>
    %c128 = arith.constant 128 : index
    %c0_52 = arith.constant 0 : index
    %114 = vector.load %arg14[%c128, %c0_52] : memref<440x512xf32, #tpu.memory_space<vmem>>, vector<8x512xf32>
    tpu.vector_store %arg14[%c128, %c0_52], %113 {strides = array<i32>} : memref<440x512xf32, #tpu.memory_space<vmem>>, vector<8x512xf32>,
    %c503_i32 = arith.constant 503 : i32
    %115 = tpu.dynamic_rotate %33 by %c503_i32 dim 1 : vector<8x512xf32>, i32 -> vector<8x512xf32>
    %c17 = arith.constant 17 : index
    %c0_53 = arith.constant 0 : index
    %116 = vector.load %arg2[%c17, %c0_53] : memref<27x512xf32, #tpu.memory_space<vmem>>, vector<1x512xf32>
    %117 = vector.broadcast %116 : vector<1x512xf32> to vector<8x512xf32>
    %118 = arith.mulf %115, %117 : vector<8x512xf32>
    %c136 = arith.constant 136 : index
    %c0_54 = arith.constant 0 : index
    %119 = vector.load %arg14[%c136, %c0_54] : memref<440x512xf32, #tpu.memory_space<vmem>>, vector<8x512xf32>
    tpu.vector_store %arg14[%c136, %c0_54], %118 {strides = array<i32>} : memref<440x512xf32, #tpu.memory_space<vmem>>, vector<8x512xf32>,
    %c457_i32 = arith.constant 457 : i32
    %120 = tpu.dynamic_rotate %33 by %c457_i32 dim 1 : vector<8x512xf32>, i32 -> vector<8x512xf32>
    %c18 = arith.constant 18 : index
    %c0_55 = arith.constant 0 : index
    %121 = vector.load %arg2[%c18, %c0_55] : memref<27x512xf32, #tpu.memory_space<vmem>>, vector<1x512xf32>
    %122 = vector.broadcast %121 : vector<1x512xf32> to vector<8x512xf32>
    %123 = arith.mulf %120, %122 : vector<8x512xf32>
    %c144 = arith.constant 144 : index
    %c0_56 = arith.constant 0 : index
    %124 = vector.load %arg14[%c144, %c0_56] : memref<440x512xf32, #tpu.memory_space<vmem>>, vector<8x512xf32>
    tpu.vector_store %arg14[%c144, %c0_56], %123 {strides = array<i32>} : memref<440x512xf32, #tpu.memory_space<vmem>>, vector<8x512xf32>,
    %c456_i32 = arith.constant 456 : i32
    %125 = tpu.dynamic_rotate %33 by %c456_i32 dim 1 : vector<8x512xf32>, i32 -> vector<8x512xf32>
    %c19 = arith.constant 19 : index
    %c0_57 = arith.constant 0 : index
    %126 = vector.load %arg2[%c19, %c0_57] : memref<27x512xf32, #tpu.memory_space<vmem>>, vector<1x512xf32>
    %127 = vector.broadcast %126 : vector<1x512xf32> to vector<8x512xf32>
    %128 = arith.mulf %125, %127 : vector<8x512xf32>
    %c152 = arith.constant 152 : index
    %c0_58 = arith.constant 0 : index
    %129 = vector.load %arg14[%c152, %c0_58] : memref<440x512xf32, #tpu.memory_space<vmem>>, vector<8x512xf32>
    tpu.vector_store %arg14[%c152, %c0_58], %128 {strides = array<i32>} : memref<440x512xf32, #tpu.memory_space<vmem>>, vector<8x512xf32>,
    %c455_i32 = arith.constant 455 : i32
    %130 = tpu.dynamic_rotate %33 by %c455_i32 dim 1 : vector<8x512xf32>, i32 -> vector<8x512xf32>
    %c20 = arith.constant 20 : index
    %c0_59 = arith.constant 0 : index
    %131 = vector.load %arg2[%c20, %c0_59] : memref<27x512xf32, #tpu.memory_space<vmem>>, vector<1x512xf32>
    %132 = vector.broadcast %131 : vector<1x512xf32> to vector<8x512xf32>
    %133 = arith.mulf %130, %132 : vector<8x512xf32>
    %c160 = arith.constant 160 : index
    %c0_60 = arith.constant 0 : index
    %134 = vector.load %arg14[%c160, %c0_60] : memref<440x512xf32, #tpu.memory_space<vmem>>, vector<8x512xf32>
    tpu.vector_store %arg14[%c160, %c0_60], %133 {strides = array<i32>} : memref<440x512xf32, #tpu.memory_space<vmem>>, vector<8x512xf32>,
    %c449_i32 = arith.constant 449 : i32
    %135 = tpu.dynamic_rotate %33 by %c449_i32 dim 1 : vector<8x512xf32>, i32 -> vector<8x512xf32>
    %c21 = arith.constant 21 : index
    %c0_61 = arith.constant 0 : index
    %136 = vector.load %arg2[%c21, %c0_61] : memref<27x512xf32, #tpu.memory_space<vmem>>, vector<1x512xf32>
    %137 = vector.broadcast %136 : vector<1x512xf32> to vector<8x512xf32>
    %138 = arith.mulf %135, %137 : vector<8x512xf32>
    %c168 = arith.constant 168 : index
    %c0_62 = arith.constant 0 : index
    %139 = vector.load %arg14[%c168, %c0_62] : memref<440x512xf32, #tpu.memory_space<vmem>>, vector<8x512xf32>
    tpu.vector_store %arg14[%c168, %c0_62], %138 {strides = array<i32>} : memref<440x512xf32, #tpu.memory_space<vmem>>, vector<8x512xf32>,
    %c448_i32 = arith.constant 448 : i32
    %140 = tpu.dynamic_rotate %33 by %c448_i32 dim 1 : vector<8x512xf32>, i32 -> vector<8x512xf32>
    %c22 = arith.constant 22 : index
    %c0_63 = arith.constant 0 : index
    %141 = vector.load %arg2[%c22, %c0_63] : memref<27x512xf32, #tpu.memory_space<vmem>>, vector<1x512xf32>
    %142 = vector.broadcast %141 : vector<1x512xf32> to vector<8x512xf32>
    %143 = arith.mulf %140, %142 : vector<8x512xf32>
    %c176 = arith.constant 176 : index
    %c0_64 = arith.constant 0 : index
    %144 = vector.load %arg14[%c176, %c0_64] : memref<440x512xf32, #tpu.memory_space<vmem>>, vector<8x512xf32>
    tpu.vector_store %arg14[%c176, %c0_64], %143 {strides = array<i32>} : memref<440x512xf32, #tpu.memory_space<vmem>>, vector<8x512xf32>,
    %c447_i32 = arith.constant 447 : i32
    %145 = tpu.dynamic_rotate %33 by %c447_i32 dim 1 : vector<8x512xf32>, i32 -> vector<8x512xf32>
    %c23 = arith.constant 23 : index
    %c0_65 = arith.constant 0 : index
    %146 = vector.load %arg2[%c23, %c0_65] : memref<27x512xf32, #tpu.memory_space<vmem>>, vector<1x512xf32>
    %147 = vector.broadcast %146 : vector<1x512xf32> to vector<8x512xf32>
    %148 = arith.mulf %145, %147 : vector<8x512xf32>
    %c184 = arith.constant 184 : index
    %c0_66 = arith.constant 0 : index
    %149 = vector.load %arg14[%c184, %c0_66] : memref<440x512xf32, #tpu.memory_space<vmem>>, vector<8x512xf32>
    tpu.vector_store %arg14[%c184, %c0_66], %148 {strides = array<i32>} : memref<440x512xf32, #tpu.memory_space<vmem>>, vector<8x512xf32>,
    %c441_i32 = arith.constant 441 : i32
    %150 = tpu.dynamic_rotate %33 by %c441_i32 dim 1 : vector<8x512xf32>, i32 -> vector<8x512xf32>
    %c24_67 = arith.constant 24 : index
    %c0_68 = arith.constant 0 : index
    %151 = vector.load %arg2[%c24_67, %c0_68] : memref<27x512xf32, #tpu.memory_space<vmem>>, vector<1x512xf32>
    %152 = vector.broadcast %151 : vector<1x512xf32> to vector<8x512xf32>
    %153 = arith.mulf %150, %152 : vector<8x512xf32>
    %c192 = arith.constant 192 : index
    %c0_69 = arith.constant 0 : index
    %154 = vector.load %arg14[%c192, %c0_69] : memref<440x512xf32, #tpu.memory_space<vmem>>, vector<8x512xf32>
    tpu.vector_store %arg14[%c192, %c0_69], %153 {strides = array<i32>} : memref<440x512xf32, #tpu.memory_space<vmem>>, vector<8x512xf32>,
    %c440_i32 = arith.constant 440 : i32
    %155 = tpu.dynamic_rotate %33 by %c440_i32 dim 1 : vector<8x512xf32>, i32 -> vector<8x512xf32>
    %c25 = arith.constant 25 : index
    %c0_70 = arith.constant 0 : index
    %156 = vector.load %arg2[%c25, %c0_70] : memref<27x512xf32, #tpu.memory_space<vmem>>, vector<1x512xf32>
    %157 = vector.broadcast %156 : vector<1x512xf32> to vector<8x512xf32>
    %158 = arith.mulf %155, %157 : vector<8x512xf32>
    %c200 = arith.constant 200 : index
    %c0_71 = arith.constant 0 : index
    %159 = vector.load %arg14[%c200, %c0_71] : memref<440x512xf32, #tpu.memory_space<vmem>>, vector<8x512xf32>
    tpu.vector_store %arg14[%c200, %c0_71], %158 {strides = array<i32>} : memref<440x512xf32, #tpu.memory_space<vmem>>, vector<8x512xf32>,
    %c439_i32 = arith.constant 439 : i32
    %160 = tpu.dynamic_rotate %33 by %c439_i32 dim 1 : vector<8x512xf32>, i32 -> vector<8x512xf32>
    %c26 = arith.constant 26 : index
    %c0_72 = arith.constant 0 : index
    %161 = vector.load %arg2[%c26, %c0_72] : memref<27x512xf32, #tpu.memory_space<vmem>>, vector<1x512xf32>
    %162 = vector.broadcast %161 : vector<1x512xf32> to vector<8x512xf32>
    %163 = arith.mulf %160, %162 : vector<8x512xf32>
    %c208 = arith.constant 208 : index
    %c0_73 = arith.constant 0 : index
    %164 = vector.load %arg14[%c208, %c0_73] : memref<440x512xf32, #tpu.memory_space<vmem>>, vector<8x512xf32>
    tpu.vector_store %arg14[%c208, %c0_73], %163 {strides = array<i32>} : memref<440x512xf32, #tpu.memory_space<vmem>>, vector<8x512xf32>,
    %c0_74 = arith.constant 0 : index
    %c0_75 = arith.constant 0 : index
    %165 = vector.load %arg6[%c0_74, %c0_75] : memref<16x216xf32, #tpu.memory_space<vmem>>, vector<16x216xf32>
    %c0_76 = arith.constant 0 : index
    %c0_77 = arith.constant 0 : index
    %166 = vector.load %arg14[%c0_76, %c0_77] : memref<440x512xf32, #tpu.memory_space<vmem>>, vector<216x512xf32>
    %cst_78 = arith.constant dense<0.000000e+00> : vector<16x512xf32>
    %167 = tpu.matmul %165, %166, %cst_78 {dimension_numbers = #tpu.dot_dimension_numbers<[1], [0], [0], [1], [0, 0, 1, 1], [], []>} : vector<16x216xf32>, vector<216x512xf32>, vector<16x512xf32> -> vector<16x512xf32>
    %c0_79 = arith.constant 0 : index
    %c0_80 = arith.constant 0 : index
    %168 = vector.load %arg7[%c0_79, %c0_80] : memref<16x1xf32, #tpu.memory_space<vmem>>, vector<16x1xf32>
    %169 = vector.broadcast %168 : vector<16x1xf32> to vector<16x512xf32>
    %170 = arith.addf %167, %169 : vector<16x512xf32>
    %cst_81 = arith.constant dense<0.000000e+00> : vector<16xf32>
    %171 = vector.multi_reduction <add>, %170, %cst_81 [1] : vector<16x512xf32> to vector<16xf32>
    %172 = vector.shape_cast %171 : vector<16xf32> to vector<16x1xf32>
    %173 = arith.mulf %170, %170 : vector<16x512xf32>
    %cst_82 = arith.constant dense<0.000000e+00> : vector<16xf32>
    %174 = vector.multi_reduction <add>, %173, %cst_82 [1] : vector<16x512xf32> to vector<16xf32>
    %175 = vector.shape_cast %174 : vector<16xf32> to vector<16x1xf32>
    %c0_83 = arith.constant 0 : index
    %c0_84 = arith.constant 0 : index
    %176 = vector.load %arg8[%c0_83, %c0_84] : memref<16x16xf32, #tpu.memory_space<vmem>>, vector<16x16xf32>
    %cst_85 = arith.constant dense<0.000000e+00> : vector<16x1xf32>
    %177 = tpu.matmul %176, %172, %cst_85 {dimension_numbers = #tpu.dot_dimension_numbers<[1], [0], [0], [1], [0, 0, 1, 1], [], []>} : vector<16x16xf32>, vector<16x1xf32>, vector<16x1xf32> -> vector<16x1xf32>
    %c0_86 = arith.constant 0 : index
    %c0_87 = arith.constant 0 : index
    %178 = vector.load %arg8[%c0_86, %c0_87] : memref<16x16xf32, #tpu.memory_space<vmem>>, vector<16x16xf32>
    %cst_88 = arith.constant dense<0.000000e+00> : vector<16x1xf32>
    %179 = tpu.matmul %178, %175, %cst_88 {dimension_numbers = #tpu.dot_dimension_numbers<[1], [0], [0], [1], [0, 0, 1, 1], [], []>} : vector<16x16xf32>, vector<16x1xf32>, vector<16x1xf32> -> vector<16x1xf32>
    %180 = arith.mulf %177, %177 : vector<16x1xf32>
    %181 = arith.subf %179, %180 : vector<16x1xf32>
    %cst_89 = arith.constant 0.000000e+00 : f32
    %182 = vector.broadcast %cst_89 : f32 to vector<16x1xf32>
    %183 = arith.maximumf %181, %182 : vector<16x1xf32>
    %cst_90 = arith.constant 9.99999974E-6 : f32
    %184 = vector.broadcast %cst_90 : f32 to vector<16x1xf32>
    %185 = arith.addf %183, %184 : vector<16x1xf32>
    %186 = math.rsqrt %185 : vector<16x1xf32>
    %187 = vector.broadcast %177 : vector<16x1xf32> to vector<16x512xf32>
    %188 = arith.subf %170, %187 : vector<16x512xf32>
    %189 = vector.broadcast %186 : vector<16x1xf32> to vector<16x512xf32>
    %190 = arith.mulf %188, %189 : vector<16x512xf32>
    %c0_91 = arith.constant 0 : index
    %c0_92 = arith.constant 0 : index
    %191 = vector.load %arg9[%c0_91, %c0_92] : memref<16x1xf32, #tpu.memory_space<vmem>>, vector<16x1xf32>
    %192 = vector.broadcast %191 : vector<16x1xf32> to vector<16x512xf32>
    %193 = arith.mulf %190, %192 : vector<16x512xf32>
    %c0_93 = arith.constant 0 : index
    %c0_94 = arith.constant 0 : index
    %194 = vector.load %arg10[%c0_93, %c0_94] : memref<16x1xf32, #tpu.memory_space<vmem>>, vector<16x1xf32>
    %195 = vector.broadcast %194 : vector<16x1xf32> to vector<16x512xf32>
    %196 = arith.addf %193, %195 : vector<16x512xf32>
    %197 = arith.negf %196 : vector<16x512xf32>
    %198 = math.exp %197 : vector<16x512xf32>
    %cst_95 = arith.constant 1.000000e+00 : f32
    %199 = vector.broadcast %cst_95 : f32 to vector<16x512xf32>
    %200 = arith.addf %199, %198 : vector<16x512xf32>
    %201 = arith.divf %199, %200 : vector<16x512xf32>
    %202 = arith.mulf %196, %201 : vector<16x512xf32>
    %c73_i32_96 = arith.constant 73 : i32
    %203 = tpu.dynamic_rotate %202 by %c73_i32_96 dim 1 : vector<16x512xf32>, i32 -> vector<16x512xf32>
    %c0_97 = arith.constant 0 : index
    %c0_98 = arith.constant 0 : index
    %204 = vector.load %arg2[%c0_97, %c0_98] : memref<27x512xf32, #tpu.memory_space<vmem>>, vector<1x512xf32>
    %205 = vector.broadcast %204 : vector<1x512xf32> to vector<16x512xf32>
    %206 = arith.mulf %203, %205 : vector<16x512xf32>
    %c0_99 = arith.constant 0 : index
    %c0_100 = arith.constant 0 : index
    %207 = vector.load %arg14[%c0_99, %c0_100] : memref<440x512xf32, #tpu.memory_space<vmem>>, vector<16x512xf32>
    tpu.vector_store %arg14[%c0_99, %c0_100], %206 {strides = array<i32>} : memref<440x512xf32, #tpu.memory_space<vmem>>, vector<16x512xf32>,
    %c72_i32_101 = arith.constant 72 : i32
    %208 = tpu.dynamic_rotate %202 by %c72_i32_101 dim 1 : vector<16x512xf32>, i32 -> vector<16x512xf32>
    %c1_102 = arith.constant 1 : index
    %c0_103 = arith.constant 0 : index
    %209 = vector.load %arg2[%c1_102, %c0_103] : memref<27x512xf32, #tpu.memory_space<vmem>>, vector<1x512xf32>
    %210 = vector.broadcast %209 : vector<1x512xf32> to vector<16x512xf32>
    %211 = arith.mulf %208, %210 : vector<16x512xf32>
    %c16_104 = arith.constant 16 : index
    %c0_105 = arith.constant 0 : index
    %212 = vector.load %arg14[%c16_104, %c0_105] : memref<440x512xf32, #tpu.memory_space<vmem>>, vector<16x512xf32>
    tpu.vector_store %arg14[%c16_104, %c0_105], %211 {strides = array<i32>} : memref<440x512xf32, #tpu.memory_space<vmem>>, vector<16x512xf32>,
    %c71_i32_106 = arith.constant 71 : i32
    %213 = tpu.dynamic_rotate %202 by %c71_i32_106 dim 1 : vector<16x512xf32>, i32 -> vector<16x512xf32>
    %c2_107 = arith.constant 2 : index
    %c0_108 = arith.constant 0 : index
    %214 = vector.load %arg2[%c2_107, %c0_108] : memref<27x512xf32, #tpu.memory_space<vmem>>, vector<1x512xf32>
    %215 = vector.broadcast %214 : vector<1x512xf32> to vector<16x512xf32>
    %216 = arith.mulf %213, %215 : vector<16x512xf32>
    %c32_109 = arith.constant 32 : index
    %c0_110 = arith.constant 0 : index
    %217 = vector.load %arg14[%c32_109, %c0_110] : memref<440x512xf32, #tpu.memory_space<vmem>>, vector<16x512xf32>
    tpu.vector_store %arg14[%c32_109, %c0_110], %216 {strides = array<i32>} : memref<440x512xf32, #tpu.memory_space<vmem>>, vector<16x512xf32>,
    %c65_i32_111 = arith.constant 65 : i32
    %218 = tpu.dynamic_rotate %202 by %c65_i32_111 dim 1 : vector<16x512xf32>, i32 -> vector<16x512xf32>
    %c3_112 = arith.constant 3 : index
    %c0_113 = arith.constant 0 : index
    %219 = vector.load %arg2[%c3_112, %c0_113] : memref<27x512xf32, #tpu.memory_space<vmem>>, vector<1x512xf32>
    %220 = vector.broadcast %219 : vector<1x512xf32> to vector<16x512xf32>
    %221 = arith.mulf %218, %220 : vector<16x512xf32>
    %c48_114 = arith.constant 48 : index
    %c0_115 = arith.constant 0 : index
    %222 = vector.load %arg14[%c48_114, %c0_115] : memref<440x512xf32, #tpu.memory_space<vmem>>, vector<16x512xf32>
    tpu.vector_store %arg14[%c48_114, %c0_115], %221 {strides = array<i32>} : memref<440x512xf32, #tpu.memory_space<vmem>>, vector<16x512xf32>,
    %c64_i32_116 = arith.constant 64 : i32
    %223 = tpu.dynamic_rotate %202 by %c64_i32_116 dim 1 : vector<16x512xf32>, i32 -> vector<16x512xf32>
    %c4_117 = arith.constant 4 : index
    %c0_118 = arith.constant 0 : index
    %224 = vector.load %arg2[%c4_117, %c0_118] : memref<27x512xf32, #tpu.memory_space<vmem>>, vector<1x512xf32>
    %225 = vector.broadcast %224 : vector<1x512xf32> to vector<16x512xf32>
    %226 = arith.mulf %223, %225 : vector<16x512xf32>
    %c64_119 = arith.constant 64 : index
    %c0_120 = arith.constant 0 : index
    %227 = vector.load %arg14[%c64_119, %c0_120] : memref<440x512xf32, #tpu.memory_space<vmem>>, vector<16x512xf32>
    tpu.vector_store %arg14[%c64_119, %c0_120], %226 {strides = array<i32>} : memref<440x512xf32, #tpu.memory_space<vmem>>, vector<16x512xf32>,
    %c63_i32_121 = arith.constant 63 : i32
    %228 = tpu.dynamic_rotate %202 by %c63_i32_121 dim 1 : vector<16x512xf32>, i32 -> vector<16x512xf32>
    %c5_122 = arith.constant 5 : index
    %c0_123 = arith.constant 0 : index
    %229 = vector.load %arg2[%c5_122, %c0_123] : memref<27x512xf32, #tpu.memory_space<vmem>>, vector<1x512xf32>
    %230 = vector.broadcast %229 : vector<1x512xf32> to vector<16x512xf32>
    %231 = arith.mulf %228, %230 : vector<16x512xf32>
    %c80_124 = arith.constant 80 : index
    %c0_125 = arith.constant 0 : index
    %232 = vector.load %arg14[%c80_124, %c0_125] : memref<440x512xf32, #tpu.memory_space<vmem>>, vector<16x512xf32>
    tpu.vector_store %arg14[%c80_124, %c0_125], %231 {strides = array<i32>} : memref<440x512xf32, #tpu.memory_space<vmem>>, vector<16x512xf32>,
    %c57_i32_126 = arith.constant 57 : i32
    %233 = tpu.dynamic_rotate %202 by %c57_i32_126 dim 1 : vector<16x512xf32>, i32 -> vector<16x512xf32>
    %c6_127 = arith.constant 6 : index
    %c0_128 = arith.constant 0 : index
    %234 = vector.load %arg2[%c6_127, %c0_128] : memref<27x512xf32, #tpu.memory_space<vmem>>, vector<1x512xf32>
    %235 = vector.broadcast %234 : vector<1x512xf32> to vector<16x512xf32>
    %236 = arith.mulf %233, %235 : vector<16x512xf32>
    %c96_129 = arith.constant 96 : index
    %c0_130 = arith.constant 0 : index
    %237 = vector.load %arg14[%c96_129, %c0_130] : memref<440x512xf32, #tpu.memory_space<vmem>>, vector<16x512xf32>
    tpu.vector_store %arg14[%c96_129, %c0_130], %236 {strides = array<i32>} : memref<440x512xf32, #tpu.memory_space<vmem>>, vector<16x512xf32>,
    %c56_i32_131 = arith.constant 56 : i32
    %238 = tpu.dynamic_rotate %202 by %c56_i32_131 dim 1 : vector<16x512xf32>, i32 -> vector<16x512xf32>
    %c7_132 = arith.constant 7 : index
    %c0_133 = arith.constant 0 : index
    %239 = vector.load %arg2[%c7_132, %c0_133] : memref<27x512xf32, #tpu.memory_space<vmem>>, vector<1x512xf32>
    %240 = vector.broadcast %239 : vector<1x512xf32> to vector<16x512xf32>
    %241 = arith.mulf %238, %240 : vector<16x512xf32>
    %c112_134 = arith.constant 112 : index
    %c0_135 = arith.constant 0 : index
    %242 = vector.load %arg14[%c112_134, %c0_135] : memref<440x512xf32, #tpu.memory_space<vmem>>, vector<16x512xf32>
    tpu.vector_store %arg14[%c112_134, %c0_135], %241 {strides = array<i32>} : memref<440x512xf32, #tpu.memory_space<vmem>>, vector<16x512xf32>,
    %c55_i32_136 = arith.constant 55 : i32
    %243 = tpu.dynamic_rotate %202 by %c55_i32_136 dim 1 : vector<16x512xf32>, i32 -> vector<16x512xf32>
    %c8_137 = arith.constant 8 : index
    %c0_138 = arith.constant 0 : index
    %244 = vector.load %arg2[%c8_137, %c0_138] : memref<27x512xf32, #tpu.memory_space<vmem>>, vector<1x512xf32>
    %245 = vector.broadcast %244 : vector<1x512xf32> to vector<16x512xf32>
    %246 = arith.mulf %243, %245 : vector<16x512xf32>
    %c128_139 = arith.constant 128 : index
    %c0_140 = arith.constant 0 : index
    %247 = vector.load %arg14[%c128_139, %c0_140] : memref<440x512xf32, #tpu.memory_space<vmem>>, vector<16x512xf32>
    tpu.vector_store %arg14[%c128_139, %c0_140], %246 {strides = array<i32>} : memref<440x512xf32, #tpu.memory_space<vmem>>, vector<16x512xf32>,
    %c9_i32_141 = arith.constant 9 : i32
    %248 = tpu.dynamic_rotate %202 by %c9_i32_141 dim 1 : vector<16x512xf32>, i32 -> vector<16x512xf32>
    %c9_142 = arith.constant 9 : index
    %c0_143 = arith.constant 0 : index
    %249 = vector.load %arg2[%c9_142, %c0_143] : memref<27x512xf32, #tpu.memory_space<vmem>>, vector<1x512xf32>
    %250 = vector.broadcast %249 : vector<1x512xf32> to vector<16x512xf32>
    %251 = arith.mulf %248, %250 : vector<16x512xf32>
    %c144_144 = arith.constant 144 : index
    %c0_145 = arith.constant 0 : index
    %252 = vector.load %arg14[%c144_144, %c0_145] : memref<440x512xf32, #tpu.memory_space<vmem>>, vector<16x512xf32>
    tpu.vector_store %arg14[%c144_144, %c0_145], %251 {strides = array<i32>} : memref<440x512xf32, #tpu.memory_space<vmem>>, vector<16x512xf32>,
    %c8_i32_146 = arith.constant 8 : i32
    %253 = tpu.dynamic_rotate %202 by %c8_i32_146 dim 1 : vector<16x512xf32>, i32 -> vector<16x512xf32>
    %c10_147 = arith.constant 10 : index
    %c0_148 = arith.constant 0 : index
    %254 = vector.load %arg2[%c10_147, %c0_148] : memref<27x512xf32, #tpu.memory_space<vmem>>, vector<1x512xf32>
    %255 = vector.broadcast %254 : vector<1x512xf32> to vector<16x512xf32>
    %256 = arith.mulf %253, %255 : vector<16x512xf32>
    %c160_149 = arith.constant 160 : index
    %c0_150 = arith.constant 0 : index
    %257 = vector.load %arg14[%c160_149, %c0_150] : memref<440x512xf32, #tpu.memory_space<vmem>>, vector<16x512xf32>
    tpu.vector_store %arg14[%c160_149, %c0_150], %256 {strides = array<i32>} : memref<440x512xf32, #tpu.memory_space<vmem>>, vector<16x512xf32>,
    %c7_i32_151 = arith.constant 7 : i32
    %258 = tpu.dynamic_rotate %202 by %c7_i32_151 dim 1 : vector<16x512xf32>, i32 -> vector<16x512xf32>
    %c11_152 = arith.constant 11 : index
    %c0_153 = arith.constant 0 : index
    %259 = vector.load %arg2[%c11_152, %c0_153] : memref<27x512xf32, #tpu.memory_space<vmem>>, vector<1x512xf32>
    %260 = vector.broadcast %259 : vector<1x512xf32> to vector<16x512xf32>
    %261 = arith.mulf %258, %260 : vector<16x512xf32>
    %c176_154 = arith.constant 176 : index
    %c0_155 = arith.constant 0 : index
    %262 = vector.load %arg14[%c176_154, %c0_155] : memref<440x512xf32, #tpu.memory_space<vmem>>, vector<16x512xf32>
    tpu.vector_store %arg14[%c176_154, %c0_155], %261 {strides = array<i32>} : memref<440x512xf32, #tpu.memory_space<vmem>>, vector<16x512xf32>,
    %c1_i32_156 = arith.constant 1 : i32
    %263 = tpu.dynamic_rotate %202 by %c1_i32_156 dim 1 : vector<16x512xf32>, i32 -> vector<16x512xf32>
    %c12_157 = arith.constant 12 : index
    %c0_158 = arith.constant 0 : index
    %264 = vector.load %arg2[%c12_157, %c0_158] : memref<27x512xf32, #tpu.memory_space<vmem>>, vector<1x512xf32>
    %265 = vector.broadcast %264 : vector<1x512xf32> to vector<16x512xf32>
    %266 = arith.mulf %263, %265 : vector<16x512xf32>
    %c192_159 = arith.constant 192 : index
    %c0_160 = arith.constant 0 : index
    %267 = vector.load %arg14[%c192_159, %c0_160] : memref<440x512xf32, #tpu.memory_space<vmem>>, vector<16x512xf32>
    tpu.vector_store %arg14[%c192_159, %c0_160], %266 {strides = array<i32>} : memref<440x512xf32, #tpu.memory_space<vmem>>, vector<16x512xf32>,
    %c208_161 = arith.constant 208 : index
    %c0_162 = arith.constant 0 : index
    %268 = vector.load %arg14[%c208_161, %c0_162] : memref<440x512xf32, #tpu.memory_space<vmem>>, vector<16x512xf32>
    tpu.vector_store %arg14[%c208_161, %c0_162], %202 {strides = array<i32>} : memref<440x512xf32, #tpu.memory_space<vmem>>, vector<16x512xf32>,
    %c511_i32_163 = arith.constant 511 : i32
    %269 = tpu.dynamic_rotate %202 by %c511_i32_163 dim 1 : vector<16x512xf32>, i32 -> vector<16x512xf32>
    %c14_164 = arith.constant 14 : index
    %c0_165 = arith.constant 0 : index
    %270 = vector.load %arg2[%c14_164, %c0_165] : memref<27x512xf32, #tpu.memory_space<vmem>>, vector<1x512xf32>
    %271 = vector.broadcast %270 : vector<1x512xf32> to vector<16x512xf32>
    %272 = arith.mulf %269, %271 : vector<16x512xf32>
    %c224 = arith.constant 224 : index
    %c0_166 = arith.constant 0 : index
    %273 = vector.load %arg14[%c224, %c0_166] : memref<440x512xf32, #tpu.memory_space<vmem>>, vector<16x512xf32>
    tpu.vector_store %arg14[%c224, %c0_166], %272 {strides = array<i32>} : memref<440x512xf32, #tpu.memory_space<vmem>>, vector<16x512xf32>,
    %c505_i32_167 = arith.constant 505 : i32
    %274 = tpu.dynamic_rotate %202 by %c505_i32_167 dim 1 : vector<16x512xf32>, i32 -> vector<16x512xf32>
    %c15_168 = arith.constant 15 : index
    %c0_169 = arith.constant 0 : index
    %275 = vector.load %arg2[%c15_168, %c0_169] : memref<27x512xf32, #tpu.memory_space<vmem>>, vector<1x512xf32>
    %276 = vector.broadcast %275 : vector<1x512xf32> to vector<16x512xf32>
    %277 = arith.mulf %274, %276 : vector<16x512xf32>
    %c240 = arith.constant 240 : index
    %c0_170 = arith.constant 0 : index
    %278 = vector.load %arg14[%c240, %c0_170] : memref<440x512xf32, #tpu.memory_space<vmem>>, vector<16x512xf32>
    tpu.vector_store %arg14[%c240, %c0_170], %277 {strides = array<i32>} : memref<440x512xf32, #tpu.memory_space<vmem>>, vector<16x512xf32>,
    %c504_i32_171 = arith.constant 504 : i32
    %279 = tpu.dynamic_rotate %202 by %c504_i32_171 dim 1 : vector<16x512xf32>, i32 -> vector<16x512xf32>
    %c16_172 = arith.constant 16 : index
    %c0_173 = arith.constant 0 : index
    %280 = vector.load %arg2[%c16_172, %c0_173] : memref<27x512xf32, #tpu.memory_space<vmem>>, vector<1x512xf32>
    %281 = vector.broadcast %280 : vector<1x512xf32> to vector<16x512xf32>
    %282 = arith.mulf %279, %281 : vector<16x512xf32>
    %c256 = arith.constant 256 : index
    %c0_174 = arith.constant 0 : index
    %283 = vector.load %arg14[%c256, %c0_174] : memref<440x512xf32, #tpu.memory_space<vmem>>, vector<16x512xf32>
    tpu.vector_store %arg14[%c256, %c0_174], %282 {strides = array<i32>} : memref<440x512xf32, #tpu.memory_space<vmem>>, vector<16x512xf32>,
    %c503_i32_175 = arith.constant 503 : i32
    %284 = tpu.dynamic_rotate %202 by %c503_i32_175 dim 1 : vector<16x512xf32>, i32 -> vector<16x512xf32>
    %c17_176 = arith.constant 17 : index
    %c0_177 = arith.constant 0 : index
    %285 = vector.load %arg2[%c17_176, %c0_177] : memref<27x512xf32, #tpu.memory_space<vmem>>, vector<1x512xf32>
    %286 = vector.broadcast %285 : vector<1x512xf32> to vector<16x512xf32>
    %287 = arith.mulf %284, %286 : vector<16x512xf32>
    %c272 = arith.constant 272 : index
    %c0_178 = arith.constant 0 : index
    %288 = vector.load %arg14[%c272, %c0_178] : memref<440x512xf32, #tpu.memory_space<vmem>>, vector<16x512xf32>
    tpu.vector_store %arg14[%c272, %c0_178], %287 {strides = array<i32>} : memref<440x512xf32, #tpu.memory_space<vmem>>, vector<16x512xf32>,
    %c457_i32_179 = arith.constant 457 : i32
    %289 = tpu.dynamic_rotate %202 by %c457_i32_179 dim 1 : vector<16x512xf32>, i32 -> vector<16x512xf32>
    %c18_180 = arith.constant 18 : index
    %c0_181 = arith.constant 0 : index
    %290 = vector.load %arg2[%c18_180, %c0_181] : memref<27x512xf32, #tpu.memory_space<vmem>>, vector<1x512xf32>
    %291 = vector.broadcast %290 : vector<1x512xf32> to vector<16x512xf32>
    %292 = arith.mulf %289, %291 : vector<16x512xf32>
    %c288 = arith.constant 288 : index
    %c0_182 = arith.constant 0 : index
    %293 = vector.load %arg14[%c288, %c0_182] : memref<440x512xf32, #tpu.memory_space<vmem>>, vector<16x512xf32>
    tpu.vector_store %arg14[%c288, %c0_182], %292 {strides = array<i32>} : memref<440x512xf32, #tpu.memory_space<vmem>>, vector<16x512xf32>,
    %c456_i32_183 = arith.constant 456 : i32
    %294 = tpu.dynamic_rotate %202 by %c456_i32_183 dim 1 : vector<16x512xf32>, i32 -> vector<16x512xf32>
    %c19_184 = arith.constant 19 : index
    %c0_185 = arith.constant 0 : index
    %295 = vector.load %arg2[%c19_184, %c0_185] : memref<27x512xf32, #tpu.memory_space<vmem>>, vector<1x512xf32>
    %296 = vector.broadcast %295 : vector<1x512xf32> to vector<16x512xf32>
    %297 = arith.mulf %294, %296 : vector<16x512xf32>
    %c304 = arith.constant 304 : index
    %c0_186 = arith.constant 0 : index
    %298 = vector.load %arg14[%c304, %c0_186] : memref<440x512xf32, #tpu.memory_space<vmem>>, vector<16x512xf32>
    tpu.vector_store %arg14[%c304, %c0_186], %297 {strides = array<i32>} : memref<440x512xf32, #tpu.memory_space<vmem>>, vector<16x512xf32>,
    %c455_i32_187 = arith.constant 455 : i32
    %299 = tpu.dynamic_rotate %202 by %c455_i32_187 dim 1 : vector<16x512xf32>, i32 -> vector<16x512xf32>
    %c20_188 = arith.constant 20 : index
    %c0_189 = arith.constant 0 : index
    %300 = vector.load %arg2[%c20_188, %c0_189] : memref<27x512xf32, #tpu.memory_space<vmem>>, vector<1x512xf32>
    %301 = vector.broadcast %300 : vector<1x512xf32> to vector<16x512xf32>
    %302 = arith.mulf %299, %301 : vector<16x512xf32>
    %c320 = arith.constant 320 : index
    %c0_190 = arith.constant 0 : index
    %303 = vector.load %arg14[%c320, %c0_190] : memref<440x512xf32, #tpu.memory_space<vmem>>, vector<16x512xf32>
    tpu.vector_store %arg14[%c320, %c0_190], %302 {strides = array<i32>} : memref<440x512xf32, #tpu.memory_space<vmem>>, vector<16x512xf32>,
    %c449_i32_191 = arith.constant 449 : i32
    %304 = tpu.dynamic_rotate %202 by %c449_i32_191 dim 1 : vector<16x512xf32>, i32 -> vector<16x512xf32>
    %c21_192 = arith.constant 21 : index
    %c0_193 = arith.constant 0 : index
    %305 = vector.load %arg2[%c21_192, %c0_193] : memref<27x512xf32, #tpu.memory_space<vmem>>, vector<1x512xf32>
    %306 = vector.broadcast %305 : vector<1x512xf32> to vector<16x512xf32>
    %307 = arith.mulf %304, %306 : vector<16x512xf32>
    %c336 = arith.constant 336 : index
    %c0_194 = arith.constant 0 : index
    %308 = vector.load %arg14[%c336, %c0_194] : memref<440x512xf32, #tpu.memory_space<vmem>>, vector<16x512xf32>
    tpu.vector_store %arg14[%c336, %c0_194], %307 {strides = array<i32>} : memref<440x512xf32, #tpu.memory_space<vmem>>, vector<16x512xf32>,
    %c448_i32_195 = arith.constant 448 : i32
    %309 = tpu.dynamic_rotate %202 by %c448_i32_195 dim 1 : vector<16x512xf32>, i32 -> vector<16x512xf32>
    %c22_196 = arith.constant 22 : index
    %c0_197 = arith.constant 0 : index
    %310 = vector.load %arg2[%c22_196, %c0_197] : memref<27x512xf32, #tpu.memory_space<vmem>>, vector<1x512xf32>
    %311 = vector.broadcast %310 : vector<1x512xf32> to vector<16x512xf32>
    %312 = arith.mulf %309, %311 : vector<16x512xf32>
    %c352 = arith.constant 352 : index
    %c0_198 = arith.constant 0 : index
    %313 = vector.load %arg14[%c352, %c0_198] : memref<440x512xf32, #tpu.memory_space<vmem>>, vector<16x512xf32>
    tpu.vector_store %arg14[%c352, %c0_198], %312 {strides = array<i32>} : memref<440x512xf32, #tpu.memory_space<vmem>>, vector<16x512xf32>,
    %c447_i32_199 = arith.constant 447 : i32
    %314 = tpu.dynamic_rotate %202 by %c447_i32_199 dim 1 : vector<16x512xf32>, i32 -> vector<16x512xf32>
    %c23_200 = arith.constant 23 : index
    %c0_201 = arith.constant 0 : index
    %315 = vector.load %arg2[%c23_200, %c0_201] : memref<27x512xf32, #tpu.memory_space<vmem>>, vector<1x512xf32>
    %316 = vector.broadcast %315 : vector<1x512xf32> to vector<16x512xf32>
    %317 = arith.mulf %314, %316 : vector<16x512xf32>
    %c368 = arith.constant 368 : index
    %c0_202 = arith.constant 0 : index
    %318 = vector.load %arg14[%c368, %c0_202] : memref<440x512xf32, #tpu.memory_space<vmem>>, vector<16x512xf32>
    tpu.vector_store %arg14[%c368, %c0_202], %317 {strides = array<i32>} : memref<440x512xf32, #tpu.memory_space<vmem>>, vector<16x512xf32>,
    %c441_i32_203 = arith.constant 441 : i32
    %319 = tpu.dynamic_rotate %202 by %c441_i32_203 dim 1 : vector<16x512xf32>, i32 -> vector<16x512xf32>
    %c24_204 = arith.constant 24 : index
    %c0_205 = arith.constant 0 : index
    %320 = vector.load %arg2[%c24_204, %c0_205] : memref<27x512xf32, #tpu.memory_space<vmem>>, vector<1x512xf32>
    %321 = vector.broadcast %320 : vector<1x512xf32> to vector<16x512xf32>
    %322 = arith.mulf %319, %321 : vector<16x512xf32>
    %c384 = arith.constant 384 : index
    %c0_206 = arith.constant 0 : index
    %323 = vector.load %arg14[%c384, %c0_206] : memref<440x512xf32, #tpu.memory_space<vmem>>, vector<16x512xf32>
    tpu.vector_store %arg14[%c384, %c0_206], %322 {strides = array<i32>} : memref<440x512xf32, #tpu.memory_space<vmem>>, vector<16x512xf32>,
    %c440_i32_207 = arith.constant 440 : i32
    %324 = tpu.dynamic_rotate %202 by %c440_i32_207 dim 1 : vector<16x512xf32>, i32 -> vector<16x512xf32>
    %c25_208 = arith.constant 25 : index
    %c0_209 = arith.constant 0 : index
    %325 = vector.load %arg2[%c25_208, %c0_209] : memref<27x512xf32, #tpu.memory_space<vmem>>, vector<1x512xf32>
    %326 = vector.broadcast %325 : vector<1x512xf32> to vector<16x512xf32>
    %327 = arith.mulf %324, %326 : vector<16x512xf32>
    %c400 = arith.constant 400 : index
    %c0_210 = arith.constant 0 : index
    %328 = vector.load %arg14[%c400, %c0_210] : memref<440x512xf32, #tpu.memory_space<vmem>>, vector<16x512xf32>
    tpu.vector_store %arg14[%c400, %c0_210], %327 {strides = array<i32>} : memref<440x512xf32, #tpu.memory_space<vmem>>, vector<16x512xf32>,
    %c439_i32_211 = arith.constant 439 : i32
    %329 = tpu.dynamic_rotate %202 by %c439_i32_211 dim 1 : vector<16x512xf32>, i32 -> vector<16x512xf32>
    %c26_212 = arith.constant 26 : index
    %c0_213 = arith.constant 0 : index
    %330 = vector.load %arg2[%c26_212, %c0_213] : memref<27x512xf32, #tpu.memory_space<vmem>>, vector<1x512xf32>
    %331 = vector.broadcast %330 : vector<1x512xf32> to vector<16x512xf32>
    %332 = arith.mulf %329, %331 : vector<16x512xf32>
    %c416 = arith.constant 416 : index
    %c0_214 = arith.constant 0 : index
    %333 = vector.load %arg14[%c416, %c0_214] : memref<440x512xf32, #tpu.memory_space<vmem>>, vector<16x512xf32>
    tpu.vector_store %arg14[%c416, %c0_214], %332 {strides = array<i32>} : memref<440x512xf32, #tpu.memory_space<vmem>>, vector<16x512xf32>,
    %c0_215 = arith.constant 0 : index
    %c0_216 = arith.constant 0 : index
    %c0_217 = arith.constant 0 : index
    %334 = vector.load %arg1[%c0_215, %c0_216, %c0_217] : memref<1x8x512xf32, #tpu.memory_space<vmem>>, vector<1x8x512xf32>
    %335 = vector.shape_cast %334 : vector<1x8x512xf32> to vector<8x512xf32>
    %c432 = arith.constant 432 : index
    %c0_218 = arith.constant 0 : index
    %336 = vector.load %arg14[%c432, %c0_218] : memref<440x512xf32, #tpu.memory_space<vmem>>, vector<8x512xf32>
    tpu.vector_store %arg14[%c432, %c0_218], %335 {strides = array<i32>} : memref<440x512xf32, #tpu.memory_space<vmem>>, vector<8x512xf32>,
    %c0_219 = arith.constant 0 : index
    %c0_220 = arith.constant 0 : index
    %337 = vector.load %arg11[%c0_219, %c0_220] : memref<16x440xf32, #tpu.memory_space<vmem>>, vector<16x440xf32>
    %c0_221 = arith.constant 0 : index
    %c0_222 = arith.constant 0 : index
    %338 = vector.load %arg14[%c0_221, %c0_222] : memref<440x512xf32, #tpu.memory_space<vmem>>, vector<440x512xf32>
    %cst_223 = arith.constant dense<0.000000e+00> : vector<16x512xf32>
    %339 = tpu.matmul %337, %338, %cst_223 {dimension_numbers = #tpu.dot_dimension_numbers<[1], [0], [0], [1], [0, 0, 1, 1], [], []>} : vector<16x440xf32>, vector<440x512xf32>, vector<16x512xf32> -> vector<16x512xf32>
    %c0_224 = arith.constant 0 : index
    %c0_225 = arith.constant 0 : index
    %340 = vector.load %arg12[%c0_224, %c0_225] : memref<16x1xf32, #tpu.memory_space<vmem>>, vector<16x1xf32>
    %341 = vector.broadcast %340 : vector<16x1xf32> to vector<16x512xf32>
    %342 = arith.addf %339, %341 : vector<16x512xf32>
    %c0_226 = arith.constant 0 : index
    %c0_227 = arith.constant 0 : index
    %c0_228 = arith.constant 0 : index
    %343 = vector.load %arg13[%c0_226, %c0_227, %c0_228] : memref<1x16x512xf32, #tpu.memory_space<vmem>>, vector<1x16x512xf32>
    %344 = vector.shape_cast %343 : vector<1x16x512xf32> to vector<16x512xf32>
    %345 = vector.shape_cast %342 : vector<16x512xf32> to vector<1x16x512xf32>
    tpu.vector_store %arg13[%c0_226, %c0_227, %c0_228], %345 {strides = array<i32>} : memref<1x16x512xf32, #tpu.memory_space<vmem>>, vector<1x16x512xf32>,
    return
  }
  func.func @transform_0(%arg0: i32) -> (i32, i32, i32) {
    %c0_i32 = arith.constant 0 : i32
    %c0_i32_0 = arith.constant 0 : i32
    %c0_i32_1 = arith.constant 0 : i32
    return %arg0, %c0_i32, %c0_i32_0 : i32, i32, i32
  }
  func.func @transform_1(%arg0: i32) -> (i32, i32) {
    %c0_i32 = arith.constant 0 : i32
    %c0_i32_0 = arith.constant 0 : i32
    %c0_i32_1 = arith.constant 0 : i32
    return %c0_i32, %c0_i32_0 : i32, i32
  }
  func.func @transform_2(%arg0: i32) -> (i32, i32) {
    %c0_i32 = arith.constant 0 : i32
    %c0_i32_0 = arith.constant 0 : i32
    %c0_i32_1 = arith.constant 0 : i32
    return %c0_i32, %c0_i32_0 : i32, i32
  }
  func.func @transform_3(%arg0: i32) -> (i32, i32) {
    %c0_i32 = arith.constant 0 : i32
    %c0_i32_0 = arith.constant 0 : i32
    %c0_i32_1 = arith.constant 0 : i32
    return %c0_i32, %c0_i32_0 : i32, i32
  }
  func.func @transform_4(%arg0: i32) -> (i32, i32) {
    %c0_i32 = arith.constant 0 : i32
    %c0_i32_0 = arith.constant 0 : i32
    %c0_i32_1 = arith.constant 0 : i32
    return %c0_i32, %c0_i32_0 : i32, i32
  }
  func.func @transform_5(%arg0: i32) -> (i32, i32) {
    %c0_i32 = arith.constant 0 : i32
    %c0_i32_0 = arith.constant 0 : i32
    %c0_i32_1 = arith.constant 0 : i32
    return %c0_i32, %c0_i32_0 : i32, i32
  }
  func.func @transform_6(%arg0: i32) -> (i32, i32) {
    %c0_i32 = arith.constant 0 : i32
    %c0_i32_0 = arith.constant 0 : i32
    %c0_i32_1 = arith.constant 0 : i32
    return %c0_i32, %c0_i32_0 : i32, i32
  }
  func.func @transform_7(%arg0: i32) -> (i32, i32) {
    %c0_i32 = arith.constant 0 : i32
    %c0_i32_0 = arith.constant 0 : i32
    %c0_i32_1 = arith.constant 0 : i32
    return %c0_i32, %c0_i32_0 : i32, i32
  }
  func.func @transform_8(%arg0: i32) -> (i32, i32) {
    %c0_i32 = arith.constant 0 : i32
    %c0_i32_0 = arith.constant 0 : i32
    %c0_i32_1 = arith.constant 0 : i32
    return %c0_i32, %c0_i32_0 : i32, i32
  }
  func.func @transform_9(%arg0: i32) -> (i32, i32) {
    %c0_i32 = arith.constant 0 : i32
    %c0_i32_0 = arith.constant 0 : i32
    %c0_i32_1 = arith.constant 0 : i32
    return %c0_i32, %c0_i32_0 : i32, i32
  }
  func.func @transform_10(%arg0: i32) -> (i32, i32) {
    %c0_i32 = arith.constant 0 : i32
    %c0_i32_0 = arith.constant 0 : i32
    %c0_i32_1 = arith.constant 0 : i32
    return %c0_i32, %c0_i32_0 : i32, i32
  }
  func.func @transform_11(%arg0: i32) -> (i32, i32) {
    %c0_i32 = arith.constant 0 : i32
    %c0_i32_0 = arith.constant 0 : i32
    %c0_i32_1 = arith.constant 0 : i32
    return %c0_i32, %c0_i32_0 : i32, i32
  }
  func.func @transform_12(%arg0: i32) -> (i32, i32, i32) {
    %c0_i32 = arith.constant 0 : i32
    %c0_i32_0 = arith.constant 0 : i32
    %c0_i32_1 = arith.constant 0 : i32
    return %arg0, %c0_i32, %c0_i32_0 : i32, i32, i32
  }
}

</mosaic_0001>

<llo_original>
// kernel: resnet_bloc_with_attn.1
$region0: #{resnet_bloc_with_attn.1}
  #allocation0 [shape = 'u32[]', space=smem, size = 0x4, offset = 0x4, fixed_abs, tag = 'smem constant byte address 0x4 - core index']
  #allocation1 [shape = 'u32[144,128]{1,0:T(1,128)}', space=vmem, size = 0x12000, scoped, tag = 'internal scratch']
  #allocation2 [shape = 'f32[440,512]{1,0:T(8,128)}', space=vmem, size = 0xdc000, scoped, tag = 'scratch operand']
  %s0 = inlined_call_operand.vmem [shape: f32[2,8,512], index: 0, kind: input, shape index: {}]
  %s1 = inlined_call_operand.vmem [shape: f32[27,512], index: 1, kind: input, shape index: {}]
  %s2 = inlined_call_operand.vmem [shape: f32[8,8], index: 2, kind: input, shape index: {}]
  %s3 = inlined_call_operand.vmem [shape: f32[8,1], index: 3, kind: input, shape index: {}]
  %s4 = inlined_call_operand.vmem [shape: f32[8,1], index: 4, kind: input, shape index: {}]
  %s5 = inlined_call_operand.vmem [shape: f32[16,216], index: 5, kind: input, shape index: {}]
  %s6 = inlined_call_operand.vmem [shape: f32[16,1], index: 6, kind: input, shape index: {}]
  %s7 = inlined_call_operand.vmem [shape: f32[16,16], index: 7, kind: input, shape index: {}]
  %s8 = inlined_call_operand.vmem [shape: f32[16,1], index: 8, kind: input, shape index: {}]
  %s9 = inlined_call_operand.vmem [shape: f32[16,1], index: 9, kind: input, shape index: {}]
  %s10 = inlined_call_operand.vmem [shape: f32[16,440], index: 10, kind: input, shape index: {}]
  %s11 = inlined_call_operand.vmem [shape: f32[16,1], index: 11, kind: input, shape index: {}]
  %s12 = inlined_call_operand.vmem [shape: f32[2,16,512], index: 12, kind: output, shape index: {}]
  %s13 = sld [smem:[#allocation0]]
  $region81: #{resnet_bloc_with_attn.1} parent=0
    _
  %s15 = ssub.s32 1, %s13
  %s16 = scalar_select 0, %s15, %s13
  loop: start=0, step=1, limit=4
  $region2: #{resnet_bloc_with_attn.1} parent=0 // loop_pre_header
    _
  $region3: #{resnet_bloc_with_attn.1} parent=0 // loop_header
    %s18 = sphi 0, %s22
    %p19 = scmp.ge.s32.totalorder %s18, 4
    %s28 = sphi 0, %s30
    %s31 = sphi 0, %s28
    %s32 = sphi 0, %s31
    %s48 = sphi 0, %s32
    %s52 = sphi 0, %s52
    %s54 = sphi 0, %s52
    %s55 = sphi 0, %s54
    %s69 = sphi 0, %s55
    %s73 = sphi 0, %s73
    %s75 = sphi 0, %s73
    %s76 = sphi 0, %s75
    %s90 = sphi 0, %s76
    %s94 = sphi 0, %s94
    %s96 = sphi 0, %s94
    %s97 = sphi 0, %s96
    %s111 = sphi 0, %s97
    %s115 = sphi 0, %s115
    %s117 = sphi 0, %s115
    %s118 = sphi 0, %s117
    %s132 = sphi 0, %s118
    %s136 = sphi 0, %s136
    %s138 = sphi 0, %s136
    %s139 = sphi 0, %s138
    %s153 = sphi 0, %s139
    %s157 = sphi 0, %s157
    %s159 = sphi 0, %s157
    %s160 = sphi 0, %s159
    %s174 = sphi 0, %s160
    %s178 = sphi 0, %s178
    %s180 = sphi 0, %s178
    %s181 = sphi 0, %s180
    %s195 = sphi 0, %s181
    %s199 = sphi 0, %s199
    %s201 = sphi 0, %s199
    %s202 = sphi 0, %s201
    %s216 = sphi 0, %s202
    %s220 = sphi 0, %s220
    %s222 = sphi 0, %s220
    %s223 = sphi 0, %s222
    %s237 = sphi 0, %s223
    %s241 = sphi 0, %s241
    %s243 = sphi 0, %s241
    %s244 = sphi 0, %s243
    %s258 = sphi 0, %s244
    %s262 = sphi 0, %s262
    %s264 = sphi 0, %s262
    %s265 = sphi 0, %s264
    %s279 = sphi 0, %s265
    %s285 = sphi 0, %s287
    %s288 = sphi 0, %s285
    %s289 = sphi 0, %s288
    %s305 = sphi 0, %s289
  $region4: #{resnet_bloc_with_attn.1} parent=0 // loop_header_branch
    %21 = sbr.rel (%p19) target = $region8
  $region5: #{resnet_bloc_with_attn.1} parent=0 // loop_body
    %s23 = ssub.s32 %s18, 1
    %s24 = ssub.s32 %s18, 2
    %s25 = sadd.s32 %s18, 1
    %s26 = ssub.s32 %s18, %s25
    %p27 = scmp.eq.s32.totalorder %s26, 0
    %s29 = sadd.s32 %s28, 1
    %s30 = scalar_select %p27, %s28, %s29
    %p33 = pneg %p27
    %p34 = scmp.eq.s32.totalorder %s18, 1
    %p35 = por %p33, %p34
    %p36 = scmp.ne.s32.totalorder %s28, %s31
    %p37 = scmp.eq.s32.totalorder %s18, 0
    %p38 = por %p36, %p37
    %p39 = scmp.ne.s32.totalorder %s28, %s31
    %p40 = scmp.eq.s32.totalorder %s23, 1
    %p41 = por %p39, %p40
    %p42 = scmp.ne.s32.totalorder %s31, %s32
    %p43 = scmp.eq.s32.totalorder %s23, 0
    %p44 = por %p42, %p43
    %p45 = scmp.ne.s32.totalorder %s31, %s32
    %p46 = scmp.eq.s32.totalorder %s24, 1
    %p47 = por %p45, %p46
    %p49 = scmp.ne.s32.totalorder %s32, %s48
    %p50 = scmp.eq.s32.totalorder %s24, 0
    %p51 = por %p49, %p50
    %s53 = sadd.s32 %s52, 1
    %p56 = scmp.eq.s32.totalorder %s18, 1
    %p57 = scmp.ne.s32.totalorder %s52, %s54
    %p58 = scmp.eq.s32.totalorder %s18, 0
    %p59 = por %p57, %p58
    %p60 = scmp.ne.s32.totalorder %s52, %s54
    %p61 = scmp.eq.s32.totalorder %s23, 1
    %p62 = por %p60, %p61
    %p63 = scmp.ne.s32.totalorder %s54, %s55
    %p64 = scmp.eq.s32.totalorder %s23, 0
    %p65 = por %p63, %p64
    %p66 = scmp.ne.s32.totalorder %s54, %s55
    %p67 = scmp.eq.s32.totalorder %s24, 1
    %p68 = por %p66, %p67
    %p70 = scmp.ne.s32.totalorder %s55, %s69
    %p71 = scmp.eq.s32.totalorder %s24, 0
    %p72 = por %p70, %p71
    %s74 = sadd.s32 %s73, 1
    %p77 = scmp.eq.s32.totalorder %s18, 1
    %p78 = scmp.ne.s32.totalorder %s73, %s75
    %p79 = scmp.eq.s32.totalorder %s18, 0
    %p80 = por %p78, %p79
    %p81 = scmp.ne.s32.totalorder %s73, %s75
    %p82 = scmp.eq.s32.totalorder %s23, 1
    %p83 = por %p81, %p82
    %p84 = scmp.ne.s32.totalorder %s75, %s76
    %p85 = scmp.eq.s32.totalorder %s23, 0
    %p86 = por %p84, %p85
    %p87 = scmp.ne.s32.totalorder %s75, %s76
    %p88 = scmp.eq.s32.totalorder %s24, 1
    %p89 = por %p87, %p88
    %p91 = scmp.ne.s32.totalorder %s76, %s90
    %p92 = scmp.eq.s32.totalorder %s24, 0
    %p93 = por %p91, %p92
    %s95 = sadd.s32 %s94, 1
    %p98 = scmp.eq.s32.totalorder %s18, 1
    %p99 = scmp.ne.s32.totalorder %s94, %s96
    %p100 = scmp.eq.s32.totalorder %s18, 0
    %p101 = por %p99, %p100
    %p102 = scmp.ne.s32.totalorder %s94, %s96
    %p103 = scmp.eq.s32.totalorder %s23, 1
    %p104 = por %p102, %p103
    %p105 = scmp.ne.s32.totalorder %s96, %s97
    %p106 = scmp.eq.s32.totalorder %s23, 0
    %p107 = por %p105, %p106
    %p108 = scmp.ne.s32.totalorder %s96, %s97
    %p109 = scmp.eq.s32.totalorder %s24, 1
    %p110 = por %p108, %p109
    %p112 = scmp.ne.s32.totalorder %s97, %s111
    %p113 = scmp.eq.s32.totalorder %s24, 0
    %p114 = por %p112, %p113
    %s116 = sadd.s32 %s115, 1
    %p119 = scmp.eq.s32.totalorder %s18, 1
    %p120 = scmp.ne.s32.totalorder %s115, %s117
    %p121 = scmp.eq.s32.totalorder %s18, 0
    %p122 = por %p120, %p121
    %p123 = scmp.ne.s32.totalorder %s115, %s117
    %p124 = scmp.eq.s32.totalorder %s23, 1
    %p125 = por %p123, %p124
    %p126 = scmp.ne.s32.totalorder %s117, %s118
    %p127 = scmp.eq.s32.totalorder %s23, 0
    %p128 = por %p126, %p127
    %p129 = scmp.ne.s32.totalorder %s117, %s118
    %p130 = scmp.eq.s32.totalorder %s24, 1
    %p131 = por %p129, %p130
    %p133 = scmp.ne.s32.totalorder %s118, %s132
    %p134 = scmp.eq.s32.totalorder %s24, 0
    %p135 = por %p133, %p134
    %s137 = sadd.s32 %s136, 1
    %p140 = scmp.eq.s32.totalorder %s18, 1
    %p141 = scmp.ne.s32.totalorder %s136, %s138
    %p142 = scmp.eq.s32.totalorder %s18, 0
    %p143 = por %p141, %p142
    %p144 = scmp.ne.s32.totalorder %s136, %s138
    %p145 = scmp.eq.s32.totalorder %s23, 1
    %p146 = por %p144, %p145
    %p147 = scmp.ne.s32.totalorder %s138, %s139
    %p148 = scmp.eq.s32.totalorder %s23, 0
    %p149 = por %p147, %p148
    %p150 = scmp.ne.s32.totalorder %s138, %s139
    %p151 = scmp.eq.s32.totalorder %s24, 1
    %p152 = por %p150, %p151
    %p154 = scmp.ne.s32.totalorder %s139, %s153
    %p155 = scmp.eq.s32.totalorder %s24, 0
    %p156 = por %p154, %p155
    %s158 = sadd.s32 %s157, 1
    %p161 = scmp.eq.s32.totalorder %s18, 1
    %p162 = scmp.ne.s32.totalorder %s157, %s159
    %p163 = scmp.eq.s32.totalorder %s18, 0
    %p164 = por %p162, %p163
    %p165 = scmp.ne.s32.totalorder %s157, %s159
    %p166 = scmp.eq.s32.totalorder %s23, 1
    %p167 = por %p165, %p166
    %p168 = scmp.ne.s32.totalorder %s159, %s160
    %p169 = scmp.eq.s32.totalorder %s23, 0
    %p170 = por %p168, %p169
    %p171 = scmp.ne.s32.totalorder %s159, %s160
    %p172 = scmp.eq.s32.totalorder %s24, 1
    %p173 = por %p171, %p172
    %p175 = scmp.ne.s32.totalorder %s160, %s174
    %p176 = scmp.eq.s32.totalorder %s24, 0
    %p177 = por %p175, %p176
    %s179 = sadd.s32 %s178, 1
    %p182 = scmp.eq.s32.totalorder %s18, 1
    %p183 = scmp.ne.s32.totalorder %s178, %s180
    %p184 = scmp.eq.s32.totalorder %s18, 0
    %p185 = por %p183, %p184
    %p186 = scmp.ne.s32.totalorder %s178, %s180
    %p187 = scmp.eq.s32.totalorder %s23, 1
    %p188 = por %p186, %p187
    %p189 = scmp.ne.s32.totalorder %s180, %s181
    %p190 = scmp.eq.s32.totalorder %s23, 0
    %p191 = por %p189, %p190
    %p192 = scmp.ne.s32.totalorder %s180, %s181
    %p193 = scmp.eq.s32.totalorder %s24, 1
    %p194 = por %p192, %p193
    %p196 = scmp.ne.s32.totalorder %s181, %s195
    %p197 = scmp.eq.s32.totalorder %s24, 0
    %p198 = por %p196, %p197
    %s200 = sadd.s32 %s199, 1
    %p203 = scmp.eq.s32.totalorder %s18, 1
    %p204 = scmp.ne.s32.totalorder %s199, %s201
    %p205 = scmp.eq.s32.totalorder %s18, 0
    %p206 = por %p204, %p205
    %p207 = scmp.ne.s32.totalorder %s199, %s201
    %p208 = scmp.eq.s32.totalorder %s23, 1
    %p209 = por %p207, %p208
    %p210 = scmp.ne.s32.totalorder %s201, %s202
    %p211 = scmp.eq.s32.totalorder %s23, 0
    %p212 = por %p210, %p211
    %p213 = scmp.ne.s32.totalorder %s201, %s202
    %p214 = scmp.eq.s32.totalorder %s24, 1
    %p215 = por %p213, %p214
    %p217 = scmp.ne.s32.totalorder %s202, %s216
    %p218 = scmp.eq.s32.totalorder %s24, 0
    %p219 = por %p217, %p218
    %s221 = sadd.s32 %s220, 1
    %p224 = scmp.eq.s32.totalorder %s18, 1
    %p225 = scmp.ne.s32.totalorder %s220, %s222
    %p226 = scmp.eq.s32.totalorder %s18, 0
    %p227 = por %p225, %p226
    %p228 = scmp.ne.s32.totalorder %s220, %s222
    %p229 = scmp.eq.s32.totalorder %s23, 1
    %p230 = por %p228, %p229
    %p231 = scmp.ne.s32.totalorder %s222, %s223
    %p232 = scmp.eq.s32.totalorder %s23, 0
    %p233 = por %p231, %p232
    %p234 = scmp.ne.s32.totalorder %s222, %s223
    %p235 = scmp.eq.s32.totalorder %s24, 1
    %p236 = por %p234, %p235
    %p238 = scmp.ne.s32.totalorder %s223, %s237
    %p239 = scmp.eq.s32.totalorder %s24, 0
    %p240 = por %p238, %p239
    %s242 = sadd.s32 %s241, 1
    %p245 = scmp.eq.s32.totalorder %s18, 1
    %p246 = scmp.ne.s32.totalorder %s241, %s243
    %p247 = scmp.eq.s32.totalorder %s18, 0
    %p248 = por %p246, %p247
    %p249 = scmp.ne.s32.totalorder %s241, %s243
    %p250 = scmp.eq.s32.totalorder %s23, 1
    %p251 = por %p249, %p250
    %p252 = scmp.ne.s32.totalorder %s243, %s244
    %p253 = scmp.eq.s32.totalorder %s23, 0
    %p254 = por %p252, %p253
    %p255 = scmp.ne.s32.totalorder %s243, %s244
    %p256 = scmp.eq.s32.totalorder %s24, 1
    %p257 = por %p255, %p256
    %p259 = scmp.ne.s32.totalorder %s244, %s258
    %p260 = scmp.eq.s32.totalorder %s24, 0
    %p261 = por %p259, %p260
    %s263 = sadd.s32 %s262, 1
    %p266 = scmp.eq.s32.totalorder %s18, 1
    %p267 = scmp.ne.s32.totalorder %s262, %s264
    %p268 = scmp.eq.s32.totalorder %s18, 0
    %p269 = por %p267, %p268
    %p270 = scmp.ne.s32.totalorder %s262, %s264
    %p271 = scmp.eq.s32.totalorder %s23, 1
    %p272 = por %p270, %p271
    %p273 = scmp.ne.s32.totalorder %s264, %s265
    %p274 = scmp.eq.s32.totalorder %s23, 0
    %p275 = por %p273, %p274
    %p276 = scmp.ne.s32.totalorder %s264, %s265
    %p277 = scmp.eq.s32.totalorder %s24, 1
    %p278 = por %p276, %p277
    %p280 = scmp.ne.s32.totalorder %s265, %s279
    %p281 = scmp.eq.s32.totalorder %s24, 0
    %p282 = por %p280, %p281
    %s283 = ssub.s32 %s18, %s25
    %p284 = scmp.eq.s32.totalorder %s283, 0
    %s286 = sadd.s32 %s285, 1
    %s287 = scalar_select %p284, %s285, %s286
    %p290 = pneg %p284
    %p291 = scmp.eq.s32.totalorder %s18, 1
    %p292 = por %p290, %p291
    %p293 = scmp.ne.s32.totalorder %s285, %s288
    %p294 = scmp.eq.s32.totalorder %s18, 0
    %p295 = por %p293, %p294
    %p296 = scmp.ne.s32.totalorder %s285, %s288
    %p297 = scmp.eq.s32.totalorder %s23, 1
    %p298 = por %p296, %p297
    %p299 = scmp.ne.s32.totalorder %s288, %s289
    %p300 = scmp.eq.s32.totalorder %s23, 0
    %p301 = por %p299, %p300
    %p302 = scmp.ne.s32.totalorder %s288, %s289
    %p303 = scmp.eq.s32.totalorder %s24, 1
    %p304 = por %p302, %p303
    %p306 = scmp.ne.s32.totalorder %s289, %s305
    %p307 = scmp.eq.s32.totalorder %s24, 0
    %p308 = por %p306, %p307
    %p309 = scmp.le.s32.totalorder 1, %s18
    %p310 = scmp.lt.s32.totalorder %s18, 3
    %p311 = pnand %p309, %p310
    %p312 = pneg %p311
    // Predicated region
    $region9: #{resnet_bloc_with_attn.1} parent=5 // pred_check
      _
    $region10: #{resnet_bloc_with_attn.1} parent=5 // pred_check_branch
      %314 = sbr.rel (%p311) target = $region12
    $region11: #{resnet_bloc_with_attn.1} parent=5 // pred_region
      %s315 = ssub.s32 %s18, 1
      // Predicated region
      $region13: #{resnet_bloc_with_attn.1} parent=11 // pred_check
        %p316 = pneg %p65
      $region14: #{resnet_bloc_with_attn.1} parent=11 // pred_check_branch
        %318 = sbr.rel (%p316) target = $region16
      $region15: #{resnet_bloc_with_attn.1} parent=11 // pred_region
        _
      $region16: #{resnet_bloc_with_attn.1} parent=11 // pred_fallthru
        _
      // Predicated region
      $region17: #{resnet_bloc_with_attn.1} parent=11 // pred_check
        %p319 = pneg %p86
      $region18: #{resnet_bloc_with_attn.1} parent=11 // pred_check_branch
        %321 = sbr.rel (%p319) target = $region20
      $region19: #{resnet_bloc_with_attn.1} parent=11 // pred_region
        _
      $region20: #{resnet_bloc_with_attn.1} parent=11 // pred_fallthru
        _
      // Predicated region
      $region21: #{resnet_bloc_with_attn.1} parent=11 // pred_check
        %p322 = pneg %p107
      $region22: #{resnet_bloc_with_attn.1} parent=11 // pred_check_branch
        %324 = sbr.rel (%p322) target = $region24
      $region23: #{resnet_bloc_with_attn.1} parent=11 // pred_region
        _
      $region24: #{resnet_bloc_with_attn.1} parent=11 // pred_fallthru
        _
      // Predicated region
      $region25: #{resnet_bloc_with_attn.1} parent=11 // pred_check
        %p325 = pneg %p128
      $region26: #{resnet_bloc_with_attn.1} parent=11 // pred_check_branch
        %327 = sbr.rel (%p325) target = $region28
      $region27: #{resnet_bloc_with_attn.1} parent=11 // pred_region
        _
      $region28: #{resnet_bloc_with_attn.1} parent=11 // pred_fallthru
        _
      // Predicated region
      $region29: #{resnet_bloc_with_attn.1} parent=11 // pred_check
        %p328 = pneg %p149
      $region30: #{resnet_bloc_with_attn.1} parent=11 // pred_check_branch
        %330 = sbr.rel (%p328) target = $region32
      $region31: #{resnet_bloc_with_attn.1} parent=11 // pred_region
        _
      $region32: #{resnet_bloc_with_attn.1} parent=11 // pred_fallthru
        _
      // Predicated region
      $region33: #{resnet_bloc_with_attn.1} parent=11 // pred_check
        %p331 = pneg %p170
      $region34: #{resnet_bloc_with_attn.1} parent=11 // pred_check_branch
        %333 = sbr.rel (%p331) target = $region36
      $region35: #{resnet_bloc_with_attn.1} parent=11 // pred_region
        _
      $region36: #{resnet_bloc_with_attn.1} parent=11 // pred_fallthru
        _
      // Predicated region
      $region37: #{resnet_bloc_with_attn.1} parent=11 // pred_check
        %p334 = pneg %p191
      $region38: #{resnet_bloc_with_attn.1} parent=11 // pred_check_branch
        %336 = sbr.rel (%p334) target = $region40
      $region39: #{resnet_bloc_with_attn.1} parent=11 // pred_region
        _
      $region40: #{resnet_bloc_with_attn.1} parent=11 // pred_fallthru
        _
      // Predicated region
      $region41: #{resnet_bloc_with_attn.1} parent=11 // pred_check
        %p337 = pneg %p212
      $region42: #{resnet_bloc_with_attn.1} parent=11 // pred_check_branch
        %339 = sbr.rel (%p337) target = $region44
      $region43: #{resnet_bloc_with_attn.1} parent=11 // pred_region
        _
      $region44: #{resnet_bloc_with_attn.1} parent=11 // pred_fallthru
        _
      // Predicated region
      $region45: #{resnet_bloc_with_attn.1} parent=11 // pred_check
        %p340 = pneg %p233
      $region46: #{resnet_bloc_with_attn.1} parent=11 // pred_check_branch
        %342 = sbr.rel (%p340) target = $region48
      $region47: #{resnet_bloc_with_attn.1} parent=11 // pred_region
        _
      $region48: #{resnet_bloc_with_attn.1} parent=11 // pred_fallthru
        _
      // Predicated region
      $region49: #{resnet_bloc_with_attn.1} parent=11 // pred_check
        %p343 = pneg %p254
      $region50: #{resnet_bloc_with_attn.1} parent=11 // pred_check_branch
        %345 = sbr.rel (%p343) target = $region52
      $region51: #{resnet_bloc_with_attn.1} parent=11 // pred_region
        _
      $region52: #{resnet_bloc_with_attn.1} parent=11 // pred_fallthru
        _
      // Predicated region
      $region53: #{resnet_bloc_with_attn.1} parent=11 // pred_check
        %p346 = pneg %p275
      $region54: #{resnet_bloc_with_attn.1} parent=11 // pred_check_branch
        %348 = sbr.rel (%p346) target = $region56
      $region55: #{resnet_bloc_with_attn.1} parent=11 // pred_region
        _
      $region56: #{resnet_bloc_with_attn.1} parent=11 // pred_fallthru
        _
    $region12: #{resnet_bloc_with_attn.1} parent=5 // pred_fallthru
      _
    %p349 = scmp.lt.s32.totalorder %s18, 2
    // Predicated region
    $region57: #{resnet_bloc_with_attn.1} parent=5 // pred_check
      %p350 = pneg %p349
    $region58: #{resnet_bloc_with_attn.1} parent=5 // pred_check_branch
      %352 = sbr.rel (%p350) target = $region60
    $region59: #{resnet_bloc_with_attn.1} parent=5 // pred_region
      // Predicated region
      $region61: #{resnet_bloc_with_attn.1} parent=59 // pred_check
        %p353 = pneg %p38
      $region62: #{resnet_bloc_with_attn.1} parent=59 // pred_check_branch
        %355 = sbr.rel (%p353) target = $region64
      $region63: #{resnet_bloc_with_attn.1} parent=59 // pred_region
        %p356 = scmp.lt.s32.totalorder %s18, 1
        %s357 = scalar_select %p356, %s18, 1
        %s358 = smul.addr %s357, 4
        %s359 = smul.addr %s358, 8
        %s360 = scalar_lea.vmem %s0, %s359
      $region64: #{resnet_bloc_with_attn.1} parent=59 // pred_fallthru
        _
    $region60: #{resnet_bloc_with_attn.1} parent=5 // pred_fallthru
      _
    %p361 = scmp.le.s32.totalorder 1, %s18
    %p362 = scmp.lt.s32.totalorder %s18, 3
    %p363 = pnand %p361, %p362
    %p364 = pneg %p363
    // Predicated region
    $region65: #{resnet_bloc_with_attn.1} parent=5 // pred_check
      _
    $region66: #{resnet_bloc_with_attn.1} parent=5 // pred_check_branch
      %366 = sbr.rel (%p363) target = $region68
    $region67: #{resnet_bloc_with_attn.1} parent=5 // pred_region
      %s367 = ssub.s32 %s18, 1
      %p368 = scmp.lt.s32.totalorder %s23, 1
      %s369 = scalar_select %p368, %s23, 1
      %s370 = smul.addr %s369, 4
      %s371 = smul.addr %s370, 8
      %s372 = scalar_lea.vmem %s0, %s371
      %p373 = pneg %p44
      %p374 = pneg %p41
      %p375 = pneg %p65
      %p376 = pneg %p62
      %p377 = pneg %p86
      %p378 = pneg %p83
      %p379 = pneg %p107
      %p380 = pneg %p104
      %p381 = pneg %p128
      %p382 = pneg %p125
      %p383 = pneg %p149
      %p384 = pneg %p146
      %p385 = pneg %p170
      %p386 = pneg %p167
      %p387 = pneg %p191
      %p388 = pneg %p188
      %p389 = pneg %p212
      %p390 = pneg %p209
      %p391 = pneg %p233
      %p392 = pneg %p230
      %p393 = pneg %p254
      %p394 = pneg %p251
      %p395 = pneg %p275
      %p396 = pneg %p272
      %p397 = pneg %p301
      %p398 = pneg %p298
      %p399 = scmp.lt.s32.totalorder %s23, 1
      %s400 = scalar_select %p399, %s23, 1
      %s401 = smul.addr %s400, 8
      %s402 = smul.addr %s401, 8
      %s403 = scalar_lea.vmem %s12, %s402
      %p404 = scmp.lt.s32.totalorder %s23, 1
      %s405 = scalar_select %p404, %s23, 1
      %s406 = smul.addr %s405, 4
      %s407 = smul.addr %s406, 8
      %s408 = scalar_lea.vmem %s0, %s407
      %p409 = scmp.lt.s32.totalorder %s23, 1
      %s410 = scalar_select %p409, %s23, 1
      %s411 = smul.addr %s410, 8
      %s412 = smul.addr %s411, 8
      %s413 = scalar_lea.vmem %s12, %s412
      %v414 = vld [vmem:[%s408] sm:$0xff]
      %v415 = vld [vmem:[%s408 + $0x8] sm:$0xff]
      %v416 = vld [vmem:[%s408 + $0x10] sm:$0xff]
      %v417 = vld [vmem:[%s408 + $0x18] sm:$0xff]
      %v418 = vadd.f32 %v414, %v415
      %v419 = vadd.f32 %v418, %v416
      %v420 = vadd.f32 %v419, %v417
      %421 = vadd.xlane.f32.xlu0 %v420
      %v422 = vpop.xlane.xlu0 %421
      %v423 = vmul.f32 %v414, %v414
      %v424 = vmul.f32 %v415, %v415
      %v425 = vmul.f32 %v416, %v416
      %v426 = vmul.f32 %v417, %v417
      %v427 = vadd.f32 %v423, %v424
      %v428 = vadd.f32 %v427, %v425
      %v429 = vadd.f32 %v428, %v426
      %430 = vadd.xlane.f32.xlu0 %v429
      %v431 = vpop.xlane.xlu0 %430
      %v432 = vld [vmem:[%s2] sm:$0xff]
      %vm433 = vcmask 64512
      %v435 = vsel %vm433, %v432, 0
      %437 = vmatprep.subr.mxu0 0.0
      %438 = vmatpush1.msra.mxu0 %v422
      %439 = vmatprep.subr.mxu0 0.0
      %440 = vmatpush1.msra.mxu0 0.0
      %441 = vmatprep.subr.mxu0 0.0
      %442 = vmatpush1.msra.mxu0 0.0
      %443 = vmatprep.subr.mxu0 0.0
      %444 = vmatpush1.msra.mxu0 0.0
      %445 = vmatprep.subr.mxu0 0.0
      %446 = vmatpush1.msra.mxu0 0.0
      %447 = vmatprep.subr.mxu0 0.0
      %448 = vmatpush1.msra.mxu0 0.0
      %449 = vmatprep.subr.mxu0 0.0
      %450 = vmatpush1.msra.mxu0 0.0
      %451 = vmatprep.subr.mxu0 0.0
      %452 = vmatpush1.msra.mxu0 0.0
      %453 = vmatprep.subr.mxu0 0.0
      %454 = vmatpush1.msra.mxu0 0.0
      %455 = vmatprep.subr.mxu0 0.0
      %456 = vmatpush1.msra.mxu0 0.0
      %457 = vmatprep.subr.mxu0 0.0
      %458 = vmatpush1.msra.mxu0 0.0
      %459 = vmatprep.subr.mxu0 0.0
      %460 = vmatpush1.msra.mxu0 0.0
      %461 = vmatprep.subr.mxu0 0.0
      %462 = vmatpush1.msra.mxu0 0.0
      %463 = vmatprep.subr.mxu0 0.0
      %464 = vmatpush1.msra.mxu0 0.0
      %465 = vmatprep.subr.mxu0 0.0
      %466 = vmatpush1.msra.mxu0 0.0
      %467 = vmatprep.subr.mxu0 0.0
      %468 = vmatpush1.msra.mxu0 0.0
      %469 = vmatprep.subr.mxu0 0.0
      %470 = vmatpush1.msra.mxu0 0.0
      %471 = vmatprep.subr.mxu0 0.0
      %472 = vmatpush1.msra.mxu0 0.0
      %473 = vmatprep.subr.mxu0 0.0
      %474 = vmatpush1.msra.mxu0 0.0
      %475 = vmatprep.subr.mxu0 0.0
      %476 = vmatpush1.msra.mxu0 0.0
      %477 = vmatprep.subr.mxu0 0.0
      %478 = vmatpush1.msra.mxu0 0.0
      %479 = vmatprep.subr.mxu0 0.0
      %480 = vmatpush1.msra.mxu0 0.0
      %481 = vmatprep.subr.mxu0 0.0
      %482 = vmatpush1.msra.mxu0 0.0
      %483 = vmatprep.subr.mxu0 0.0
      %484 = vmatpush1.msra.mxu0 0.0
      %485 = vmatprep.subr.mxu0 0.0
      %486 = vmatpush1.msra.mxu0 0.0
      %487 = vmatprep.subr.mxu0 0.0
      %488 = vmatpush1.msra.mxu0 0.0
      %489 = vmatprep.subr.mxu0 0.0
      %490 = vmatpush1.msra.mxu0 0.0
      %491 = vmatprep.subr.mxu0 0.0
      %492 = vmatpush1.msra.mxu0 0.0
      %493 = vmatprep.subr.mxu0 0.0
      %494 = vmatpush1.msra.mxu0 0.0
      %495 = vmatprep.subr.mxu0 0.0
      %496 = vmatpush1.msra.mxu0 0.0
      %497 = vmatprep.subr.mxu0 0.0
      %498 = vmatpush1.msra.mxu0 0.0
      %499 = vmatprep.subr.mxu0 0.0
      %500 = vmatpush1.msra.mxu0 0.0
      %501 = vmatprep.mubr.f32.mxu0 0.0
      %502 = vmatmul.mubr.f32.gmra.mrb[0].mxu0 %v435
      %v503 = vpop.f32.mrb[0].mxu0
      %v504 = vadd.f32 0.0, %v503
      %v505 = vpop.f32.mrb[0].mxu0
      %506 = vdwg.mxu0
      %507 = vmatprep.subr.mxu0 0.0
      %508 = vmatpush1.msra.mxu0 %v431
      %509 = vmatprep.subr.mxu0 0.0
      %510 = vmatpush1.msra.mxu0 0.0
      %511 = vmatprep.subr.mxu0 0.0
      %512 = vmatpush1.msra.mxu0 0.0
      %513 = vmatprep.subr.mxu0 0.0
      %514 = vmatpush1.msra.mxu0 0.0
      %515 = vmatprep.subr.mxu0 0.0
      %516 = vmatpush1.msra.mxu0 0.0
      %517 = vmatprep.subr.mxu0 0.0
      %518 = vmatpush1.msra.mxu0 0.0
      %519 = vmatprep.subr.mxu0 0.0
      %520 = vmatpush1.msra.mxu0 0.0
      %521 = vmatprep.subr.mxu0 0.0
      %522 = vmatpush1.msra.mxu0 0.0
      %523 = vmatprep.subr.mxu0 0.0
      %524 = vmatpush1.msra.mxu0 0.0
      %525 = vmatprep.subr.mxu0 0.0
      %526 = vmatpush1.msra.mxu0 0.0
      %527 = vmatprep.subr.mxu0 0.0
      %528 = vmatpush1.msra.mxu0 0.0
      %529 = vmatprep.subr.mxu0 0.0
      %530 = vmatpush1.msra.mxu0 0.0
      %531 = vmatprep.subr.mxu0 0.0
      %532 = vmatpush1.msra.mxu0 0.0
      %533 = vmatprep.subr.mxu0 0.0
      %534 = vmatpush1.msra.mxu0 0.0
      %535 = vmatprep.subr.mxu0 0.0
      %536 = vmatpush1.msra.mxu0 0.0
      %537 = vmatprep.subr.mxu0 0.0
      %538 = vmatpush1.msra.mxu0 0.0
      %539 = vmatprep.subr.mxu0 0.0
      %540 = vmatpush1.msra.mxu0 0.0
      %541 = vmatprep.subr.mxu0 0.0
      %542 = vmatpush1.msra.mxu0 0.0
      %543 = vmatprep.subr.mxu0 0.0
      %544 = vmatpush1.msra.mxu0 0.0
      %545 = vmatprep.subr.mxu0 0.0
      %546 = vmatpush1.msra.mxu0 0.0
      %547 = vmatprep.subr.mxu0 0.0
      %548 = vmatpush1.msra.mxu0 0.0
      %549 = vmatprep.subr.mxu0 0.0
      %550 = vmatpush1.msra.mxu0 0.0
      %551 = vmatprep.subr.mxu0 0.0
      %552 = vmatpush1.msra.mxu0 0.0
      %553 = vmatprep.subr.mxu0 0.0
      %554 = vmatpush1.msra.mxu0 0.0
      %555 = vmatprep.subr.mxu0 0.0
      %556 = vmatpush1.msra.mxu0 0.0
      %557 = vmatprep.subr.mxu0 0.0
      %558 = vmatpush1.msra.mxu0 0.0
      %559 = vmatprep.subr.mxu0 0.0
      %560 = vmatpush1.msra.mxu0 0.0
      %561 = vmatprep.subr.mxu0 0.0
      %562 = vmatpush1.msra.mxu0 0.0
      %563 = vmatprep.subr.mxu0 0.0
      %564 = vmatpush1.msra.mxu0 0.0
      %565 = vmatprep.subr.mxu0 0.0
      %566 = vmatpush1.msra.mxu0 0.0
      %567 = vmatprep.subr.mxu0 0.0
      %568 = vmatpush1.msra.mxu0 0.0
      %569 = vmatprep.subr.mxu0 0.0
      %570 = vmatpush1.msra.mxu0 0.0
      %571 = vmatprep.mubr.f32.mxu0 0.0
      %572 = vmatmul.mubr.f32.gmra.mrb[0].mxu0 %v435
      %v573 = vpop.f32.mrb[0].mxu0
      %v574 = vadd.f32 0.0, %v573
      %v575 = vpop.f32.mrb[0].mxu0
      %576 = vdwg.mxu0
      %v577 = vmul.f32 %v504, %v504
      %v578 = vsub.f32 %v574, %v577
      %v579 = vmax.f32 %v578, 0.0
      %v580 = vadd.f32 %v579, 1e-05
      %v581 = vrsqrt.pop %v580
      %583 = vset.pattern.permute.xlu0 0
      %584 = vperm.xlu0 %583, %v504
      %v585 = vpop.permute.xlu0 %584
      %v587 = vsub.f32 %v414, %v585
      %v588 = vsub.f32 %v415, %v585
      %v589 = vsub.f32 %v416, %v585
      %v590 = vsub.f32 %v417, %v585
      %592 = vset.pattern.permute.xlu0 0
      %593 = vperm.xlu0 %592, %v581
      %v594 = vpop.permute.xlu0 %593
      %v596 = vmul.f32 %v587, %v594
      %v597 = vmul.f32 %v588, %v594
      %v598 = vmul.f32 %v589, %v594
      %v599 = vmul.f32 %v590, %v594
      %v600 = vld [vmem:[%s3] sm:$0xff]
      %602 = vset.pattern.permute.xlu0 0
      %603 = vperm.xlu0 %602, %v600
      %v604 = vpop.permute.xlu0 %603
      %v606 = vmul.f32 %v596, %v604
      %v607 = vmul.f32 %v597, %v604
      %v608 = vmul.f32 %v598, %v604
      %v609 = vmul.f32 %v599, %v604
      %v610 = vld [vmem:[%s4] sm:$0xff]
      %612 = vset.pattern.permute.xlu0 0
      %613 = vperm.xlu0 %612, %v610
      %v614 = vpop.permute.xlu0 %613
      %v616 = vadd.f32 %v606, %v614
      %v617 = vadd.f32 %v607, %v614
      %v618 = vadd.f32 %v608, %v614
      %v619 = vadd.f32 %v609, %v614
      %v620 = vxor.u32 %v616, 2147483648
      %v621 = vxor.u32 %v617, 2147483648
      %v622 = vxor.u32 %v618, 2147483648
      %v623 = vxor.u32 %v619, 2147483648
      %v624 = vmul.f32 %v620, 1.442695
      %v625 = vpow.pop %v624
      %v626 = vmul.f32 %v621, 1.442695
      %v627 = vpow.pop %v626
      %v628 = vmul.f32 %v622, 1.442695
      %v629 = vpow.pop %v628
      %v630 = vmul.f32 %v623, 1.442695
      %v631 = vpow.pop %v630
      %v632 = vadd.f32 %v625, 1.0
      %v633 = vadd.f32 %v627, 1.0
      %v634 = vadd.f32 %v629, 1.0
      %v635 = vadd.f32 %v631, 1.0
      %v636 = vrcp.pop %v632
      %v637 = vmul.f32 1.0, %v636
      %v638 = vrcp.pop %v633
      %v639 = vmul.f32 1.0, %v638
      %v640 = vrcp.pop %v634
      %v641 = vmul.f32 1.0, %v640
      %v642 = vrcp.pop %v635
      %v643 = vmul.f32 1.0, %v642
      %v644 = vmul.f32 %v616, %v637
      %v645 = vmul.f32 %v617, %v639
      %v646 = vmul.f32 %v618, %v641
      %v647 = vmul.f32 %v619, %v643
      %648 = vrot.lane.b32.xlu0 %v644, 73
      %v649 = vpop.permute.xlu0 %648
      %650 = vrot.lane.b32.xlu0 %v645, 73
      %v651 = vpop.permute.xlu0 %650
      %652 = vrot.lane.b32.xlu0 %v646, 73
      %v653 = vpop.permute.xlu0 %652
      %654 = vrot.lane.b32.xlu0 %v647, 73
      %v655 = vpop.permute.xlu0 %654
      %v656 = vlaneseq
      %v657 = vand.u32 %v656, 127
      %vm658 = vcmp.lt.s32.totalorder %v657, 73
      %v659 = vsel %vm658, %v653, %v655
      %v660 = vsel %vm658, %v651, %v653
      %v661 = vsel %vm658, %v649, %v651
      %v662 = vsel %vm658, %v655, %v649
      %v663 = vld [vmem:[%s1] ss:$8 sm:$0xf]
      %v665 = vlaneseq
      %v666 = vshrl.u32 %v665, 7
      %v667 = vsub.s32 0, %v666
      %v668 = vrot.slane %v663, %v667
      %v669 = vlaneseq
      %v670 = vshrl.u32 %v669, 7
      %v671 = vsub.s32 1, %v670
      %v672 = vrot.slane %v663, %v671
      %v673 = vlaneseq
      %v674 = vshrl.u32 %v673, 7
      %v675 = vsub.s32 2, %v674
      %v676 = vrot.slane %v663, %v675
      %v677 = vlaneseq
      %v678 = vshrl.u32 %v677, 7
      %v679 = vsub.s32 3, %v678
      %v680 = vrot.slane %v663, %v679
      %v685 = vmul.f32 %v662, %v668
      %v686 = vmul.f32 %v661, %v672
      %v687 = vmul.f32 %v660, %v676
      %v688 = vmul.f32 %v659, %v680
      %689 = vst [vmem:[#allocation2] sm:$0xff] %v685
      %690 = vst [vmem:[#allocation2 + $0x8] sm:$0xff] %v686
      %691 = vst [vmem:[#allocation2 + $0x10] sm:$0xff] %v687
      %692 = vst [vmem:[#allocation2 + $0x18] sm:$0xff] %v688
      %693 = vrot.lane.b32.xlu0 %v644, 72
      %v694 = vpop.permute.xlu0 %693
      %695 = vrot.lane.b32.xlu0 %v645, 72
      %v696 = vpop.permute.xlu0 %695
      %697 = vrot.lane.b32.xlu0 %v646, 72
      %v698 = vpop.permute.xlu0 %697
      %699 = vrot.lane.b32.xlu0 %v647, 72
      %v700 = vpop.permute.xlu0 %699
      %vm701 = vcmp.lt.s32.totalorder %v657, 72
      %v702 = vsel %vm701, %v698, %v700
      %v703 = vsel %vm701, %v696, %v698
      %v704 = vsel %vm701, %v694, %v696
      %v705 = vsel %vm701, %v700, %v694
      %s706 = scalar_lea.vmem %s1, 1
      %v707 = vld [vmem:[%s706] ss:$8 sm:$0xf]
      %v709 = vlaneseq
      %v710 = vshrl.u32 %v709, 7
      %v711 = vsub.s32 0, %v710
      %v712 = vrot.slane %v707, %v711
      %v713 = vlaneseq
      %v714 = vshrl.u32 %v713, 7
      %v715 = vsub.s32 1, %v714
      %v716 = vrot.slane %v707, %v715
      %v717 = vlaneseq
      %v718 = vshrl.u32 %v717, 7
      %v719 = vsub.s32 2, %v718
      %v720 = vrot.slane %v707, %v719
      %v721 = vlaneseq
      %v722 = vshrl.u32 %v721, 7
      %v723 = vsub.s32 3, %v722
      %v724 = vrot.slane %v707, %v723
      %v729 = vmul.f32 %v705, %v712
      %v730 = vmul.f32 %v704, %v716
      %v731 = vmul.f32 %v703, %v720
      %v732 = vmul.f32 %v702, %v724
      %733 = vst [vmem:[#allocation2 + $0x20] sm:$0xff] %v729
      %734 = vst [vmem:[#allocation2 + $0x28] sm:$0xff] %v730
      %735 = vst [vmem:[#allocation2 + $0x30] sm:$0xff] %v731
      %736 = vst [vmem:[#allocation2 + $0x38] sm:$0xff] %v732
      %737 = vrot.lane.b32.xlu0 %v644, 71
      %v738 = vpop.permute.xlu0 %737
      %739 = vrot.lane.b32.xlu0 %v645, 71
      %v740 = vpop.permute.xlu0 %739
      %741 = vrot.lane.b32.xlu0 %v646, 71
      %v742 = vpop.permute.xlu0 %741
      %743 = vrot.lane.b32.xlu0 %v647, 71
      %v744 = vpop.permute.xlu0 %743
      %vm745 = vcmp.lt.s32.totalorder %v657, 71
      %v746 = vsel %vm745, %v742, %v744
      %v747 = vsel %vm745, %v740, %v742
      %v748 = vsel %vm745, %v738, %v740
      %v749 = vsel %vm745, %v744, %v738
      %s750 = scalar_lea.vmem %s1, 2
      %v751 = vld [vmem:[%s750] ss:$8 sm:$0xf]
      %v753 = vlaneseq
      %v754 = vshrl.u32 %v753, 7
      %v755 = vsub.s32 0, %v754
      %v756 = vrot.slane %v751, %v755
      %v757 = vlaneseq
      %v758 = vshrl.u32 %v757, 7
      %v759 = vsub.s32 1, %v758
      %v760 = vrot.slane %v751, %v759
      %v761 = vlaneseq
      %v762 = vshrl.u32 %v761, 7
      %v763 = vsub.s32 2, %v762
      %v764 = vrot.slane %v751, %v763
      %v765 = vlaneseq
      %v766 = vshrl.u32 %v765, 7
      %v767 = vsub.s32 3, %v766
      %v768 = vrot.slane %v751, %v767
      %v773 = vmul.f32 %v749, %v756
      %v774 = vmul.f32 %v748, %v760
      %v775 = vmul.f32 %v747, %v764
      %v776 = vmul.f32 %v746, %v768
      %777 = vst [vmem:[#allocation2 + $0x40] sm:$0xff] %v773
      %778 = vst [vmem:[#allocation2 + $0x48] sm:$0xff] %v774
      %779 = vst [vmem:[#allocation2 + $0x50] sm:$0xff] %v775
      %780 = vst [vmem:[#allocation2 + $0x58] sm:$0xff] %v776
      %781 = vrot.lane.b32.xlu0 %v644, 65
      %v782 = vpop.permute.xlu0 %781
      %783 = vrot.lane.b32.xlu0 %v645, 65
      %v784 = vpop.permute.xlu0 %783
      %785 = vrot.lane.b32.xlu0 %v646, 65
      %v786 = vpop.permute.xlu0 %785
      %787 = vrot.lane.b32.xlu0 %v647, 65
      %v788 = vpop.permute.xlu0 %787
      %vm789 = vcmp.lt.s32.totalorder %v657, 65
      %v790 = vsel %vm789, %v786, %v788
      %v791 = vsel %vm789, %v784, %v786
      %v792 = vsel %vm789, %v782, %v784
      %v793 = vsel %vm789, %v788, %v782
      %s794 = scalar_lea.vmem %s1, 3
      %v795 = vld [vmem:[%s794] ss:$8 sm:$0xf]
      %v797 = vlaneseq
      %v798 = vshrl.u32 %v797, 7
      %v799 = vsub.s32 0, %v798
      %v800 = vrot.slane %v795, %v799
      %v801 = vlaneseq
      %v802 = vshrl.u32 %v801, 7
      %v803 = vsub.s32 1, %v802
      %v804 = vrot.slane %v795, %v803
      %v805 = vlaneseq
      %v806 = vshrl.u32 %v805, 7
      %v807 = vsub.s32 2, %v806
      %v808 = vrot.slane %v795, %v807
      %v809 = vlaneseq
      %v810 = vshrl.u32 %v809, 7
      %v811 = vsub.s32 3, %v810
      %v812 = vrot.slane %v795, %v811
      %v817 = vmul.f32 %v793, %v800
      %v818 = vmul.f32 %v792, %v804
      %v819 = vmul.f32 %v791, %v808
      %v820 = vmul.f32 %v790, %v812
      %821 = vst [vmem:[#allocation2 + $0x60] sm:$0xff] %v817
      %822 = vst [vmem:[#allocation2 + $0x68] sm:$0xff] %v818
      %823 = vst [vmem:[#allocation2 + $0x70] sm:$0xff] %v819
      %824 = vst [vmem:[#allocation2 + $0x78] sm:$0xff] %v820
      %825 = vrot.lane.b32.xlu0 %v644, 64
      %v826 = vpop.permute.xlu0 %825
      %827 = vrot.lane.b32.xlu0 %v645, 64
      %v828 = vpop.permute.xlu0 %827
      %829 = vrot.lane.b32.xlu0 %v646, 64
      %v830 = vpop.permute.xlu0 %829
      %831 = vrot.lane.b32.xlu0 %v647, 64
      %v832 = vpop.permute.xlu0 %831
      %vm833 = vcmp.lt.s32.totalorder %v657, 64
      %v834 = vsel %vm833, %v830, %v832
      %v835 = vsel %vm833, %v828, %v830
      %v836 = vsel %vm833, %v826, %v828
      %v837 = vsel %vm833, %v832, %v826
      %s838 = scalar_lea.vmem %s1, 4
      %v839 = vld [vmem:[%s838] ss:$8 sm:$0xf]
      %v841 = vlaneseq
      %v842 = vshrl.u32 %v841, 7
      %v843 = vsub.s32 0, %v842
      %v844 = vrot.slane %v839, %v843
      %v845 = vlaneseq
      %v846 = vshrl.u32 %v845, 7
      %v847 = vsub.s32 1, %v846
      %v848 = vrot.slane %v839, %v847
      %v849 = vlaneseq
      %v850 = vshrl.u32 %v849, 7
      %v851 = vsub.s32 2, %v850
      %v852 = vrot.slane %v839, %v851
      %v853 = vlaneseq
      %v854 = vshrl.u32 %v853, 7
      %v855 = vsub.s32 3, %v854
      %v856 = vrot.slane %v839, %v855
      %v861 = vmul.f32 %v837, %v844
      %v862 = vmul.f32 %v836, %v848
      %v863 = vmul.f32 %v835, %v852
      %v864 = vmul.f32 %v834, %v856
      %865 = vst [vmem:[#allocation2 + $0x80] sm:$0xff] %v861
      %866 = vst [vmem:[#allocation2 + $0x88] sm:$0xff] %v862
      %867 = vst [vmem:[#allocation2 + $0x90] sm:$0xff] %v863
      %868 = vst [vmem:[#allocation2 + $0x98] sm:$0xff] %v864
      %869 = vrot.lane.b32.xlu0 %v644, 63
      %v870 = vpop.permute.xlu0 %869
      %871 = vrot.lane.b32.xlu0 %v645, 63
      %v872 = vpop.permute.xlu0 %871
      %873 = vrot.lane.b32.xlu0 %v646, 63
      %v874 = vpop.permute.xlu0 %873
      %875 = vrot.lane.b32.xlu0 %v647, 63
      %v876 = vpop.permute.xlu0 %875
      %vm877 = vcmp.lt.s32.totalorder %v657, 63
      %v878 = vsel %vm877, %v874, %v876
      %v879 = vsel %vm877, %v872, %v874
      %v880 = vsel %vm877, %v870, %v872
      %v881 = vsel %vm877, %v876, %v870
      %s882 = scalar_lea.vmem %s1, 5
      %v883 = vld [vmem:[%s882] ss:$8 sm:$0xf]
      %v885 = vlaneseq
      %v886 = vshrl.u32 %v885, 7
      %v887 = vsub.s32 0, %v886
      %v888 = vrot.slane %v883, %v887
      %v889 = vlaneseq
      %v890 = vshrl.u32 %v889, 7
      %v891 = vsub.s32 1, %v890
      %v892 = vrot.slane %v883, %v891
      %v893 = vlaneseq
      %v894 = vshrl.u32 %v893, 7
      %v895 = vsub.s32 2, %v894
      %v896 = vrot.slane %v883, %v895
      %v897 = vlaneseq
      %v898 = vshrl.u32 %v897, 7
      %v899 = vsub.s32 3, %v898
      %v900 = vrot.slane %v883, %v899
      %v905 = vmul.f32 %v881, %v888
      %v906 = vmul.f32 %v880, %v892
      %v907 = vmul.f32 %v879, %v896
      %v908 = vmul.f32 %v878, %v900
      %909 = vst [vmem:[#allocation2 + $0xa0] sm:$0xff] %v905
      %910 = vst [vmem:[#allocation2 + $0xa8] sm:$0xff] %v906
      %911 = vst [vmem:[#allocation2 + $0xb0] sm:$0xff] %v907
      %912 = vst [vmem:[#allocation2 + $0xb8] sm:$0xff] %v908
      %913 = vrot.lane.b32.xlu0 %v644, 57
      %v914 = vpop.permute.xlu0 %913
      %915 = vrot.lane.b32.xlu0 %v645, 57
      %v916 = vpop.permute.xlu0 %915
      %917 = vrot.lane.b32.xlu0 %v646, 57
      %v918 = vpop.permute.xlu0 %917
      %919 = vrot.lane.b32.xlu0 %v647, 57
      %v920 = vpop.permute.xlu0 %919
      %vm921 = vcmp.lt.s32.totalorder %v657, 57
      %v922 = vsel %vm921, %v918, %v920
      %v923 = vsel %vm921, %v916, %v918
      %v924 = vsel %vm921, %v914, %v916
      %v925 = vsel %vm921, %v920, %v914
      %s926 = scalar_lea.vmem %s1, 6
      %v927 = vld [vmem:[%s926] ss:$8 sm:$0xf]
      %v929 = vlaneseq
      %v930 = vshrl.u32 %v929, 7
      %v931 = vsub.s32 0, %v930
      %v932 = vrot.slane %v927, %v931
      %v933 = vlaneseq
      %v934 = vshrl.u32 %v933, 7
      %v935 = vsub.s32 1, %v934
      %v936 = vrot.slane %v927, %v935
      %v937 = vlaneseq
      %v938 = vshrl.u32 %v937, 7
      %v939 = vsub.s32 2, %v938
      %v940 = vrot.slane %v927, %v939
      %v941 = vlaneseq
      %v942 = vshrl.u32 %v941, 7
      %v943 = vsub.s32 3, %v942
      %v944 = vrot.slane %v927, %v943
      %v949 = vmul.f32 %v925, %v932
      %v950 = vmul.f32 %v924, %v936
      %v951 = vmul.f32 %v923, %v940
      %v952 = vmul.f32 %v922, %v944
      %953 = vst [vmem:[#allocation2 + $0xc0] sm:$0xff] %v949
      %954 = vst [vmem:[#allocation2 + $0xc8] sm:$0xff] %v950
      %955 = vst [vmem:[#allocation2 + $0xd0] sm:$0xff] %v951
      %956 = vst [vmem:[#allocation2 + $0xd8] sm:$0xff] %v952
      %957 = vrot.lane.b32.xlu0 %v644, 56
      %v958 = vpop.permute.xlu0 %957
      %959 = vrot.lane.b32.xlu0 %v645, 56
      %v960 = vpop.permute.xlu0 %959
      %961 = vrot.lane.b32.xlu0 %v646, 56
      %v962 = vpop.permute.xlu0 %961
      %963 = vrot.lane.b32.xlu0 %v647, 56
      %v964 = vpop.permute.xlu0 %963
      %vm965 = vcmp.lt.s32.totalorder %v657, 56
      %v966 = vsel %vm965, %v962, %v964
      %v967 = vsel %vm965, %v960, %v962
      %v968 = vsel %vm965, %v958, %v960
      %v969 = vsel %vm965, %v964, %v958
      %s970 = scalar_lea.vmem %s1, 7
      %v971 = vld [vmem:[%s970] ss:$8 sm:$0xf]
      %v973 = vlaneseq
      %v974 = vshrl.u32 %v973, 7
      %v975 = vsub.s32 0, %v974
      %v976 = vrot.slane %v971, %v975
      %v977 = vlaneseq
      %v978 = vshrl.u32 %v977, 7
      %v979 = vsub.s32 1, %v978
      %v980 = vrot.slane %v971, %v979
      %v981 = vlaneseq
      %v982 = vshrl.u32 %v981, 7
      %v983 = vsub.s32 2, %v982
      %v984 = vrot.slane %v971, %v983
      %v985 = vlaneseq
      %v986 = vshrl.u32 %v985, 7
      %v987 = vsub.s32 3, %v986
      %v988 = vrot.slane %v971, %v987
      %v993 = vmul.f32 %v969, %v976
      %v994 = vmul.f32 %v968, %v980
      %v995 = vmul.f32 %v967, %v984
      %v996 = vmul.f32 %v966, %v988
      %997 = vst [vmem:[#allocation2 + $0xe0] sm:$0xff] %v993
      %998 = vst [vmem:[#allocation2 + $0xe8] sm:$0xff] %v994
      %999 = vst [vmem:[#allocation2 + $0xf0] sm:$0xff] %v995
      %1000 = vst [vmem:[#allocation2 + $0xf8] sm:$0xff] %v996
      %1001 = vrot.lane.b32.xlu0 %v644, 55
      %v1002 = vpop.permute.xlu0 %1001
      %1003 = vrot.lane.b32.xlu0 %v645, 55
      %v1004 = vpop.permute.xlu0 %1003
      %1005 = vrot.lane.b32.xlu0 %v646, 55
      %v1006 = vpop.permute.xlu0 %1005
      %1007 = vrot.lane.b32.xlu0 %v647, 55
      %v1008 = vpop.permute.xlu0 %1007
      %vm1009 = vcmp.lt.s32.totalorder %v657, 55
      %v1010 = vsel %vm1009, %v1006, %v1008
      %v1011 = vsel %vm1009, %v1004, %v1006
      %v1012 = vsel %vm1009, %v1002, %v1004
      %v1013 = vsel %vm1009, %v1008, %v1002
      %s1014 = scalar_lea.vmem %s1, 32
      %v1015 = vld [vmem:[%s1014] ss:$8 sm:$0xf]
      %v1017 = vlaneseq
      %v1018 = vshrl.u32 %v1017, 7
      %v1019 = vsub.s32 0, %v1018
      %v1020 = vrot.slane %v1015, %v1019
      %v1021 = vlaneseq
      %v1022 = vshrl.u32 %v1021, 7
      %v1023 = vsub.s32 1, %v1022
      %v1024 = vrot.slane %v1015, %v1023
      %v1025 = vlaneseq
      %v1026 = vshrl.u32 %v1025, 7
      %v1027 = vsub.s32 2, %v1026
      %v1028 = vrot.slane %v1015, %v1027
      %v1029 = vlaneseq
      %v1030 = vshrl.u32 %v1029, 7
      %v1031 = vsub.s32 3, %v1030
      %v1032 = vrot.slane %v1015, %v1031
      %v1037 = vmul.f32 %v1013, %v1020
      %v1038 = vmul.f32 %v1012, %v1024
      %v1039 = vmul.f32 %v1011, %v1028
      %v1040 = vmul.f32 %v1010, %v1032
      %1041 = vst [vmem:[#allocation2 + $0x100] sm:$0xff] %v1037
      %1042 = vst [vmem:[#allocation2 + $0x108] sm:$0xff] %v1038
      %1043 = vst [vmem:[#allocation2 + $0x110] sm:$0xff] %v1039
      %1044 = vst [vmem:[#allocation2 + $0x118] sm:$0xff] %v1040
      %1045 = vrot.lane.b32.xlu0 %v644, 9
      %v1046 = vpop.permute.xlu0 %1045
      %1047 = vrot.lane.b32.xlu0 %v645, 9
      %v1048 = vpop.permute.xlu0 %1047
      %1049 = vrot.lane.b32.xlu0 %v646, 9
      %v1050 = vpop.permute.xlu0 %1049
      %1051 = vrot.lane.b32.xlu0 %v647, 9
      %v1052 = vpop.permute.xlu0 %1051
      %vm1053 = vcmp.lt.s32.totalorder %v657, 9
      %v1054 = vsel %vm1053, %v1050, %v1052
      %v1055 = vsel %vm1053, %v1048, %v1050
      %v1056 = vsel %vm1053, %v1046, %v1048
      %v1057 = vsel %vm1053, %v1052, %v1046
      %s1058 = scalar_lea.vmem %s1, 33
      %v1059 = vld [vmem:[%s1058] ss:$8 sm:$0xf]
      %v1061 = vlaneseq
      %v1062 = vshrl.u32 %v1061, 7
      %v1063 = vsub.s32 0, %v1062
      %v1064 = vrot.slane %v1059, %v1063
      %v1065 = vlaneseq
      %v1066 = vshrl.u32 %v1065, 7
      %v1067 = vsub.s32 1, %v1066
      %v1068 = vrot.slane %v1059, %v1067
      %v1069 = vlaneseq
      %v1070 = vshrl.u32 %v1069, 7
      %v1071 = vsub.s32 2, %v1070
      %v1072 = vrot.slane %v1059, %v1071
      %v1073 = vlaneseq
      %v1074 = vshrl.u32 %v1073, 7
      %v1075 = vsub.s32 3, %v1074
      %v1076 = vrot.slane %v1059, %v1075
      %v1081 = vmul.f32 %v1057, %v1064
      %v1082 = vmul.f32 %v1056, %v1068
      %v1083 = vmul.f32 %v1055, %v1072
      %v1084 = vmul.f32 %v1054, %v1076
      %1085 = vst [vmem:[#allocation2 + $0x120] sm:$0xff] %v1081
      %1086 = vst [vmem:[#allocation2 + $0x128] sm:$0xff] %v1082
      %1087 = vst [vmem:[#allocation2 + $0x130] sm:$0xff] %v1083
      %1088 = vst [vmem:[#allocation2 + $0x138] sm:$0xff] %v1084
      %1089 = vrot.lane.b32.xlu0 %v644, 8
      %v1090 = vpop.permute.xlu0 %1089
      %1091 = vrot.lane.b32.xlu0 %v645, 8
      %v1092 = vpop.permute.xlu0 %1091
      %1093 = vrot.lane.b32.xlu0 %v646, 8
      %v1094 = vpop.permute.xlu0 %1093
      %1095 = vrot.lane.b32.xlu0 %v647, 8
      %v1096 = vpop.permute.xlu0 %1095
      %vm1097 = vcmp.lt.s32.totalorder %v657, 8
      %v1098 = vsel %vm1097, %v1094, %v1096
      %v1099 = vsel %vm1097, %v1092, %v1094
      %v1100 = vsel %vm1097, %v1090, %v1092
      %v1101 = vsel %vm1097, %v1096, %v1090
      %s1102 = scalar_lea.vmem %s1, 34
      %v1103 = vld [vmem:[%s1102] ss:$8 sm:$0xf]
      %v1105 = vlaneseq
      %v1106 = vshrl.u32 %v1105, 7
      %v1107 = vsub.s32 0, %v1106
      %v1108 = vrot.slane %v1103, %v1107
      %v1109 = vlaneseq
      %v1110 = vshrl.u32 %v1109, 7
      %v1111 = vsub.s32 1, %v1110
      %v1112 = vrot.slane %v1103, %v1111
      %v1113 = vlaneseq
      %v1114 = vshrl.u32 %v1113, 7
      %v1115 = vsub.s32 2, %v1114
      %v1116 = vrot.slane %v1103, %v1115
      %v1117 = vlaneseq
      %v1118 = vshrl.u32 %v1117, 7
      %v1119 = vsub.s32 3, %v1118
      %v1120 = vrot.slane %v1103, %v1119
      %v1125 = vmul.f32 %v1101, %v1108
      %v1126 = vmul.f32 %v1100, %v1112
      %v1127 = vmul.f32 %v1099, %v1116
      %v1128 = vmul.f32 %v1098, %v1120
      %1129 = vst [vmem:[#allocation2 + $0x140] sm:$0xff] %v1125
      %1130 = vst [vmem:[#allocation2 + $0x148] sm:$0xff] %v1126
      %1131 = vst [vmem:[#allocation2 + $0x150] sm:$0xff] %v1127
      %1132 = vst [vmem:[#allocation2 + $0x158] sm:$0xff] %v1128
      %1133 = vrot.lane.b32.xlu0 %v644, 7
      %v1134 = vpop.permute.xlu0 %1133
      %1135 = vrot.lane.b32.xlu0 %v645, 7
      %v1136 = vpop.permute.xlu0 %1135
      %1137 = vrot.lane.b32.xlu0 %v646, 7
      %v1138 = vpop.permute.xlu0 %1137
      %1139 = vrot.lane.b32.xlu0 %v647, 7
      %v1140 = vpop.permute.xlu0 %1139
      %vm1141 = vcmp.lt.s32.totalorder %v657, 7
      %v1142 = vsel %vm1141, %v1138, %v1140
      %v1143 = vsel %vm1141, %v1136, %v1138
      %v1144 = vsel %vm1141, %v1134, %v1136
      %v1145 = vsel %vm1141, %v1140, %v1134
      %s1146 = scalar_lea.vmem %s1, 35
      %v1147 = vld [vmem:[%s1146] ss:$8 sm:$0xf]
      %v1149 = vlaneseq
      %v1150 = vshrl.u32 %v1149, 7
      %v1151 = vsub.s32 0, %v1150
      %v1152 = vrot.slane %v1147, %v1151
      %v1153 = vlaneseq
      %v1154 = vshrl.u32 %v1153, 7
      %v1155 = vsub.s32 1, %v1154
      %v1156 = vrot.slane %v1147, %v1155
      %v1157 = vlaneseq
      %v1158 = vshrl.u32 %v1157, 7
      %v1159 = vsub.s32 2, %v1158
      %v1160 = vrot.slane %v1147, %v1159
      %v1161 = vlaneseq
      %v1162 = vshrl.u32 %v1161, 7
      %v1163 = vsub.s32 3, %v1162
      %v1164 = vrot.slane %v1147, %v1163
      %v1169 = vmul.f32 %v1145, %v1152
      %v1170 = vmul.f32 %v1144, %v1156
      %v1171 = vmul.f32 %v1143, %v1160
      %v1172 = vmul.f32 %v1142, %v1164
      %1173 = vst [vmem:[#allocation2 + $0x160] sm:$0xff] %v1169
      %1174 = vst [vmem:[#allocation2 + $0x168] sm:$0xff] %v1170
      %1175 = vst [vmem:[#allocation2 + $0x170] sm:$0xff] %v1171
      %1176 = vst [vmem:[#allocation2 + $0x178] sm:$0xff] %v1172
      %1177 = vrot.lane.b32.xlu0 %v644, 1
      %v1178 = vpop.permute.xlu0 %1177
      %1179 = vrot.lane.b32.xlu0 %v645, 1
      %v1180 = vpop.permute.xlu0 %1179
      %1181 = vrot.lane.b32.xlu0 %v646, 1
      %v1182 = vpop.permute.xlu0 %1181
      %1183 = vrot.lane.b32.xlu0 %v647, 1
      %v1184 = vpop.permute.xlu0 %1183
      %vm1185 = vcmp.lt.s32.totalorder %v657, 1
      %v1186 = vsel %vm1185, %v1182, %v1184
      %v1187 = vsel %vm1185, %v1180, %v1182
      %v1188 = vsel %vm1185, %v1178, %v1180
      %v1189 = vsel %vm1185, %v1184, %v1178
      %s1190 = scalar_lea.vmem %s1, 36
      %v1191 = vld [vmem:[%s1190] ss:$8 sm:$0xf]
      %v1193 = vlaneseq
      %v1194 = vshrl.u32 %v1193, 7
      %v1195 = vsub.s32 0, %v1194
      %v1196 = vrot.slane %v1191, %v1195
      %v1197 = vlaneseq
      %v1198 = vshrl.u32 %v1197, 7
      %v1199 = vsub.s32 1, %v1198
      %v1200 = vrot.slane %v1191, %v1199
      %v1201 = vlaneseq
      %v1202 = vshrl.u32 %v1201, 7
      %v1203 = vsub.s32 2, %v1202
      %v1204 = vrot.slane %v1191, %v1203
      %v1205 = vlaneseq
      %v1206 = vshrl.u32 %v1205, 7
      %v1207 = vsub.s32 3, %v1206
      %v1208 = vrot.slane %v1191, %v1207
      %v1213 = vmul.f32 %v1189, %v1196
      %v1214 = vmul.f32 %v1188, %v1200
      %v1215 = vmul.f32 %v1187, %v1204
      %v1216 = vmul.f32 %v1186, %v1208
      %1217 = vst [vmem:[#allocation2 + $0x180] sm:$0xff] %v1213
      %1218 = vst [vmem:[#allocation2 + $0x188] sm:$0xff] %v1214
      %1219 = vst [vmem:[#allocation2 + $0x190] sm:$0xff] %v1215
      %1220 = vst [vmem:[#allocation2 + $0x198] sm:$0xff] %v1216
      %1221 = vst [vmem:[#allocation2 + $0x1a0] sm:$0xff] %v644
      %1222 = vst [vmem:[#allocation2 + $0x1a8] sm:$0xff] %v645
      %1223 = vst [vmem:[#allocation2 + $0x1b0] sm:$0xff] %v646
      %1224 = vst [vmem:[#allocation2 + $0x1b8] sm:$0xff] %v647
      %1225 = vrot.lane.b32.xlu0 %v644, 127
      %v1226 = vpop.permute.xlu0 %1225
      %1227 = vrot.lane.b32.xlu0 %v645, 127
      %v1228 = vpop.permute.xlu0 %1227
      %1229 = vrot.lane.b32.xlu0 %v646, 127
      %v1230 = vpop.permute.xlu0 %1229
      %1231 = vrot.lane.b32.xlu0 %v647, 127
      %v1232 = vpop.permute.xlu0 %1231
      %vm1233 = vcmp.lt.s32.totalorder %v657, 127
      %v1234 = vsel %vm1233, %v1230, %v1232
      %v1235 = vsel %vm1233, %v1228, %v1230
      %v1236 = vsel %vm1233, %v1226, %v1228
      %v1237 = vsel %vm1233, %v1232, %v1226
      %s1238 = scalar_lea.vmem %s1, 38
      %v1239 = vld [vmem:[%s1238] ss:$8 sm:$0xf]
      %v1241 = vlaneseq
      %v1242 = vshrl.u32 %v1241, 7
      %v1243 = vsub.s32 0, %v1242
      %v1244 = vrot.slane %v1239, %v1243
      %v1245 = vlaneseq
      %v1246 = vshrl.u32 %v1245, 7
      %v1247 = vsub.s32 1, %v1246
      %v1248 = vrot.slane %v1239, %v1247
      %v1249 = vlaneseq
      %v1250 = vshrl.u32 %v1249, 7
      %v1251 = vsub.s32 2, %v1250
      %v1252 = vrot.slane %v1239, %v1251
      %v1253 = vlaneseq
      %v1254 = vshrl.u32 %v1253, 7
      %v1255 = vsub.s32 3, %v1254
      %v1256 = vrot.slane %v1239, %v1255
      %v1261 = vmul.f32 %v1236, %v1244
      %v1262 = vmul.f32 %v1235, %v1248
      %v1263 = vmul.f32 %v1234, %v1252
      %v1264 = vmul.f32 %v1237, %v1256
      %1265 = vst [vmem:[#allocation2 + $0x1c0] sm:$0xff] %v1261
      %1266 = vst [vmem:[#allocation2 + $0x1c8] sm:$0xff] %v1262
      %1267 = vst [vmem:[#allocation2 + $0x1d0] sm:$0xff] %v1263
      %1268 = vst [vmem:[#allocation2 + $0x1d8] sm:$0xff] %v1264
      %1269 = vrot.lane.b32.xlu0 %v644, 121
      %v1270 = vpop.permute.xlu0 %1269
      %1271 = vrot.lane.b32.xlu0 %v645, 121
      %v1272 = vpop.permute.xlu0 %1271
      %1273 = vrot.lane.b32.xlu0 %v646, 121
      %v1274 = vpop.permute.xlu0 %1273
      %1275 = vrot.lane.b32.xlu0 %v647, 121
      %v1276 = vpop.permute.xlu0 %1275
      %vm1277 = vcmp.lt.s32.totalorder %v657, 121
      %v1278 = vsel %vm1277, %v1274, %v1276
      %v1279 = vsel %vm1277, %v1272, %v1274
      %v1280 = vsel %vm1277, %v1270, %v1272
      %v1281 = vsel %vm1277, %v1276, %v1270
      %s1282 = scalar_lea.vmem %s1, 39
      %v1283 = vld [vmem:[%s1282] ss:$8 sm:$0xf]
      %v1285 = vlaneseq
      %v1286 = vshrl.u32 %v1285, 7
      %v1287 = vsub.s32 0, %v1286
      %v1288 = vrot.slane %v1283, %v1287
      %v1289 = vlaneseq
      %v1290 = vshrl.u32 %v1289, 7
      %v1291 = vsub.s32 1, %v1290
      %v1292 = vrot.slane %v1283, %v1291
      %v1293 = vlaneseq
      %v1294 = vshrl.u32 %v1293, 7
      %v1295 = vsub.s32 2, %v1294
      %v1296 = vrot.slane %v1283, %v1295
      %v1297 = vlaneseq
      %v1298 = vshrl.u32 %v1297, 7
      %v1299 = vsub.s32 3, %v1298
      %v1300 = vrot.slane %v1283, %v1299
      %v1305 = vmul.f32 %v1280, %v1288
      %v1306 = vmul.f32 %v1279, %v1292
      %v1307 = vmul.f32 %v1278, %v1296
      %v1308 = vmul.f32 %v1281, %v1300
      %1309 = vst [vmem:[#allocation2 + $0x1e0] sm:$0xff] %v1305
      %1310 = vst [vmem:[#allocation2 + $0x1e8] sm:$0xff] %v1306
      %1311 = vst [vmem:[#allocation2 + $0x1f0] sm:$0xff] %v1307
      %1312 = vst [vmem:[#allocation2 + $0x1f8] sm:$0xff] %v1308
      %1313 = vrot.lane.b32.xlu0 %v644, 120
      %v1314 = vpop.permute.xlu0 %1313
      %1315 = vrot.lane.b32.xlu0 %v645, 120
      %v1316 = vpop.permute.xlu0 %1315
      %1317 = vrot.lane.b32.xlu0 %v646, 120
      %v1318 = vpop.permute.xlu0 %1317
      %1319 = vrot.lane.b32.xlu0 %v647, 120
      %v1320 = vpop.permute.xlu0 %1319
      %vm1321 = vcmp.lt.s32.totalorder %v657, 120
      %v1322 = vsel %vm1321, %v1318, %v1320
      %v1323 = vsel %vm1321, %v1316, %v1318
      %v1324 = vsel %vm1321, %v1314, %v1316
      %v1325 = vsel %vm1321, %v1320, %v1314
      %s1326 = scalar_lea.vmem %s1, 64
      %v1327 = vld [vmem:[%s1326] ss:$8 sm:$0xf]
      %v1329 = vlaneseq
      %v1330 = vshrl.u32 %v1329, 7
      %v1331 = vsub.s32 0, %v1330
      %v1332 = vrot.slane %v1327, %v1331
      %v1333 = vlaneseq
      %v1334 = vshrl.u32 %v1333, 7
      %v1335 = vsub.s32 1, %v1334
      %v1336 = vrot.slane %v1327, %v1335
      %v1337 = vlaneseq
      %v1338 = vshrl.u32 %v1337, 7
      %v1339 = vsub.s32 2, %v1338
      %v1340 = vrot.slane %v1327, %v1339
      %v1341 = vlaneseq
      %v1342 = vshrl.u32 %v1341, 7
      %v1343 = vsub.s32 3, %v1342
      %v1344 = vrot.slane %v1327, %v1343
      %v1349 = vmul.f32 %v1324, %v1332
      %v1350 = vmul.f32 %v1323, %v1336
      %v1351 = vmul.f32 %v1322, %v1340
      %v1352 = vmul.f32 %v1325, %v1344
      %1353 = vst [vmem:[#allocation2 + $0x200] sm:$0xff] %v1349
      %1354 = vst [vmem:[#allocation2 + $0x208] sm:$0xff] %v1350
      %1355 = vst [vmem:[#allocation2 + $0x210] sm:$0xff] %v1351
      %1356 = vst [vmem:[#allocation2 + $0x218] sm:$0xff] %v1352
      %1357 = vrot.lane.b32.xlu0 %v644, 119
      %v1358 = vpop.permute.xlu0 %1357
      %1359 = vrot.lane.b32.xlu0 %v645, 119
      %v1360 = vpop.permute.xlu0 %1359
      %1361 = vrot.lane.b32.xlu0 %v646, 119
      %v1362 = vpop.permute.xlu0 %1361
      %1363 = vrot.lane.b32.xlu0 %v647, 119
      %v1364 = vpop.permute.xlu0 %1363
      %vm1365 = vcmp.lt.s32.totalorder %v657, 119
      %v1366 = vsel %vm1365, %v1362, %v1364
      %v1367 = vsel %vm1365, %v1360, %v1362
      %v1368 = vsel %vm1365, %v1358, %v1360
      %v1369 = vsel %vm1365, %v1364, %v1358
      %s1370 = scalar_lea.vmem %s1, 65
      %v1371 = vld [vmem:[%s1370] ss:$8 sm:$0xf]
      %v1373 = vlaneseq
      %v1374 = vshrl.u32 %v1373, 7
      %v1375 = vsub.s32 0, %v1374
      %v1376 = vrot.slane %v1371, %v1375
      %v1377 = vlaneseq
      %v1378 = vshrl.u32 %v1377, 7
      %v1379 = vsub.s32 1, %v1378
      %v1380 = vrot.slane %v1371, %v1379
      %v1381 = vlaneseq
      %v1382 = vshrl.u32 %v1381, 7
      %v1383 = vsub.s32 2, %v1382
      %v1384 = vrot.slane %v1371, %v1383
      %v1385 = vlaneseq
      %v1386 = vshrl.u32 %v1385, 7
      %v1387 = vsub.s32 3, %v1386
      %v1388 = vrot.slane %v1371, %v1387
      %v1393 = vmul.f32 %v1368, %v1376
      %v1394 = vmul.f32 %v1367, %v1380
      %v1395 = vmul.f32 %v1366, %v1384
      %v1396 = vmul.f32 %v1369, %v1388
      %1397 = vst [vmem:[#allocation2 + $0x220] sm:$0xff] %v1393
      %1398 = vst [vmem:[#allocation2 + $0x228] sm:$0xff] %v1394
      %1399 = vst [vmem:[#allocation2 + $0x230] sm:$0xff] %v1395
      %1400 = vst [vmem:[#allocation2 + $0x238] sm:$0xff] %v1396
      %s1401 = scalar_lea.vmem %s1, 66
      %v1402 = vld [vmem:[%s1401] ss:$8 sm:$0xf]
      %v1404 = vlaneseq
      %v1405 = vshrl.u32 %v1404, 7
      %v1406 = vsub.s32 0, %v1405
      %v1407 = vrot.slane %v1402, %v1406
      %v1408 = vlaneseq
      %v1409 = vshrl.u32 %v1408, 7
      %v1410 = vsub.s32 1, %v1409
      %v1411 = vrot.slane %v1402, %v1410
      %v1412 = vlaneseq
      %v1413 = vshrl.u32 %v1412, 7
      %v1414 = vsub.s32 2, %v1413
      %v1415 = vrot.slane %v1402, %v1414
      %v1416 = vlaneseq
      %v1417 = vshrl.u32 %v1416, 7
      %v1418 = vsub.s32 3, %v1417
      %v1419 = vrot.slane %v1402, %v1418
      %v1424 = vmul.f32 %v661, %v1407
      %v1425 = vmul.f32 %v660, %v1411
      %v1426 = vmul.f32 %v659, %v1415
      %v1427 = vmul.f32 %v662, %v1419
      %1428 = vst [vmem:[#allocation2 + $0x240] sm:$0xff] %v1424
      %1429 = vst [vmem:[#allocation2 + $0x248] sm:$0xff] %v1425
      %1430 = vst [vmem:[#allocation2 + $0x250] sm:$0xff] %v1426
      %1431 = vst [vmem:[#allocation2 + $0x258] sm:$0xff] %v1427
      %s1432 = scalar_lea.vmem %s1, 67
      %v1433 = vld [vmem:[%s1432] ss:$8 sm:$0xf]
      %v1435 = vlaneseq
      %v1436 = vshrl.u32 %v1435, 7
      %v1437 = vsub.s32 0, %v1436
      %v1438 = vrot.slane %v1433, %v1437
      %v1439 = vlaneseq
      %v1440 = vshrl.u32 %v1439, 7
      %v1441 = vsub.s32 1, %v1440
      %v1442 = vrot.slane %v1433, %v1441
      %v1443 = vlaneseq
      %v1444 = vshrl.u32 %v1443, 7
      %v1445 = vsub.s32 2, %v1444
      %v1446 = vrot.slane %v1433, %v1445
      %v1447 = vlaneseq
      %v1448 = vshrl.u32 %v1447, 7
      %v1449 = vsub.s32 3, %v1448
      %v1450 = vrot.slane %v1433, %v1449
      %v1455 = vmul.f32 %v704, %v1438
      %v1456 = vmul.f32 %v703, %v1442
      %v1457 = vmul.f32 %v702, %v1446
      %v1458 = vmul.f32 %v705, %v1450
      %1459 = vst [vmem:[#allocation2 + $0x260] sm:$0xff] %v1455
      %1460 = vst [vmem:[#allocation2 + $0x268] sm:$0xff] %v1456
      %1461 = vst [vmem:[#allocation2 + $0x270] sm:$0xff] %v1457
      %1462 = vst [vmem:[#allocation2 + $0x278] sm:$0xff] %v1458
      %s1463 = scalar_lea.vmem %s1, 68
      %v1464 = vld [vmem:[%s1463] ss:$8 sm:$0xf]
      %v1466 = vlaneseq
      %v1467 = vshrl.u32 %v1466, 7
      %v1468 = vsub.s32 0, %v1467
      %v1469 = vrot.slane %v1464, %v1468
      %v1470 = vlaneseq
      %v1471 = vshrl.u32 %v1470, 7
      %v1472 = vsub.s32 1, %v1471
      %v1473 = vrot.slane %v1464, %v1472
      %v1474 = vlaneseq
      %v1475 = vshrl.u32 %v1474, 7
      %v1476 = vsub.s32 2, %v1475
      %v1477 = vrot.slane %v1464, %v1476
      %v1478 = vlaneseq
      %v1479 = vshrl.u32 %v1478, 7
      %v1480 = vsub.s32 3, %v1479
      %v1481 = vrot.slane %v1464, %v1480
      %v1486 = vmul.f32 %v748, %v1469
      %v1487 = vmul.f32 %v747, %v1473
      %v1488 = vmul.f32 %v746, %v1477
      %v1489 = vmul.f32 %v749, %v1481
      %1490 = vst [vmem:[#allocation2 + $0x280] sm:$0xff] %v1486
      %1491 = vst [vmem:[#allocation2 + $0x288] sm:$0xff] %v1487
      %1492 = vst [vmem:[#allocation2 + $0x290] sm:$0xff] %v1488
      %1493 = vst [vmem:[#allocation2 + $0x298] sm:$0xff] %v1489
      %s1494 = scalar_lea.vmem %s1, 69
      %v1495 = vld [vmem:[%s1494] ss:$8 sm:$0xf]
      %v1497 = vlaneseq
      %v1498 = vshrl.u32 %v1497, 7
      %v1499 = vsub.s32 0, %v1498
      %v1500 = vrot.slane %v1495, %v1499
      %v1501 = vlaneseq
      %v1502 = vshrl.u32 %v1501, 7
      %v1503 = vsub.s32 1, %v1502
      %v1504 = vrot.slane %v1495, %v1503
      %v1505 = vlaneseq
      %v1506 = vshrl.u32 %v1505, 7
      %v1507 = vsub.s32 2, %v1506
      %v1508 = vrot.slane %v1495, %v1507
      %v1509 = vlaneseq
      %v1510 = vshrl.u32 %v1509, 7
      %v1511 = vsub.s32 3, %v1510
      %v1512 = vrot.slane %v1495, %v1511
      %v1517 = vmul.f32 %v792, %v1500
      %v1518 = vmul.f32 %v791, %v1504
      %v1519 = vmul.f32 %v790, %v1508
      %v1520 = vmul.f32 %v793, %v1512
      %1521 = vst [vmem:[#allocation2 + $0x2a0] sm:$0xff] %v1517
      %1522 = vst [vmem:[#allocation2 + $0x2a8] sm:$0xff] %v1518
      %1523 = vst [vmem:[#allocation2 + $0x2b0] sm:$0xff] %v1519
      %1524 = vst [vmem:[#allocation2 + $0x2b8] sm:$0xff] %v1520
      %s1525 = scalar_lea.vmem %s1, 70
      %v1526 = vld [vmem:[%s1525] ss:$8 sm:$0xf]
      %v1528 = vlaneseq
      %v1529 = vshrl.u32 %v1528, 7
      %v1530 = vsub.s32 0, %v1529
      %v1531 = vrot.slane %v1526, %v1530
      %v1532 = vlaneseq
      %v1533 = vshrl.u32 %v1532, 7
      %v1534 = vsub.s32 1, %v1533
      %v1535 = vrot.slane %v1526, %v1534
      %v1536 = vlaneseq
      %v1537 = vshrl.u32 %v1536, 7
      %v1538 = vsub.s32 2, %v1537
      %v1539 = vrot.slane %v1526, %v1538
      %v1540 = vlaneseq
      %v1541 = vshrl.u32 %v1540, 7
      %v1542 = vsub.s32 3, %v1541
      %v1543 = vrot.slane %v1526, %v1542
      %v1548 = vmul.f32 %v836, %v1531
      %v1549 = vmul.f32 %v835, %v1535
      %v1550 = vmul.f32 %v834, %v1539
      %v1551 = vmul.f32 %v837, %v1543
      %1552 = vst [vmem:[#allocation2 + $0x2c0] sm:$0xff] %v1548
      %1553 = vst [vmem:[#allocation2 + $0x2c8] sm:$0xff] %v1549
      %1554 = vst [vmem:[#allocation2 + $0x2d0] sm:$0xff] %v1550
      %1555 = vst [vmem:[#allocation2 + $0x2d8] sm:$0xff] %v1551
      %s1556 = scalar_lea.vmem %s1, 71
      %v1557 = vld [vmem:[%s1556] ss:$8 sm:$0xf]
      %v1559 = vlaneseq
      %v1560 = vshrl.u32 %v1559, 7
      %v1561 = vsub.s32 0, %v1560
      %v1562 = vrot.slane %v1557, %v1561
      %v1563 = vlaneseq
      %v1564 = vshrl.u32 %v1563, 7
      %v1565 = vsub.s32 1, %v1564
      %v1566 = vrot.slane %v1557, %v1565
      %v1567 = vlaneseq
      %v1568 = vshrl.u32 %v1567, 7
      %v1569 = vsub.s32 2, %v1568
      %v1570 = vrot.slane %v1557, %v1569
      %v1571 = vlaneseq
      %v1572 = vshrl.u32 %v1571, 7
      %v1573 = vsub.s32 3, %v1572
      %v1574 = vrot.slane %v1557, %v1573
      %v1579 = vmul.f32 %v880, %v1562
      %v1580 = vmul.f32 %v879, %v1566
      %v1581 = vmul.f32 %v878, %v1570
      %v1582 = vmul.f32 %v881, %v1574
      %1583 = vst [vmem:[#allocation2 + $0x2e0] sm:$0xff] %v1579
      %1584 = vst [vmem:[#allocation2 + $0x2e8] sm:$0xff] %v1580
      %1585 = vst [vmem:[#allocation2 + $0x2f0] sm:$0xff] %v1581
      %1586 = vst [vmem:[#allocation2 + $0x2f8] sm:$0xff] %v1582
      %s1587 = scalar_lea.vmem %s1, 96
      %v1588 = vld [vmem:[%s1587] ss:$8 sm:$0xf]
      %v1590 = vlaneseq
      %v1591 = vshrl.u32 %v1590, 7
      %v1592 = vsub.s32 0, %v1591
      %v1593 = vrot.slane %v1588, %v1592
      %v1594 = vlaneseq
      %v1595 = vshrl.u32 %v1594, 7
      %v1596 = vsub.s32 1, %v1595
      %v1597 = vrot.slane %v1588, %v1596
      %v1598 = vlaneseq
      %v1599 = vshrl.u32 %v1598, 7
      %v1600 = vsub.s32 2, %v1599
      %v1601 = vrot.slane %v1588, %v1600
      %v1602 = vlaneseq
      %v1603 = vshrl.u32 %v1602, 7
      %v1604 = vsub.s32 3, %v1603
      %v1605 = vrot.slane %v1588, %v1604
      %v1610 = vmul.f32 %v924, %v1593
      %v1611 = vmul.f32 %v923, %v1597
      %v1612 = vmul.f32 %v922, %v1601
      %v1613 = vmul.f32 %v925, %v1605
      %1614 = vst [vmem:[#allocation2 + $0x300] sm:$0xff] %v1610
      %1615 = vst [vmem:[#allocation2 + $0x308] sm:$0xff] %v1611
      %1616 = vst [vmem:[#allocation2 + $0x310] sm:$0xff] %v1612
      %1617 = vst [vmem:[#allocation2 + $0x318] sm:$0xff] %v1613
      %s1618 = scalar_lea.vmem %s1, 97
      %v1619 = vld [vmem:[%s1618] ss:$8 sm:$0xf]
      %v1621 = vlaneseq
      %v1622 = vshrl.u32 %v1621, 7
      %v1623 = vsub.s32 0, %v1622
      %v1624 = vrot.slane %v1619, %v1623
      %v1625 = vlaneseq
      %v1626 = vshrl.u32 %v1625, 7
      %v1627 = vsub.s32 1, %v1626
      %v1628 = vrot.slane %v1619, %v1627
      %v1629 = vlaneseq
      %v1630 = vshrl.u32 %v1629, 7
      %v1631 = vsub.s32 2, %v1630
      %v1632 = vrot.slane %v1619, %v1631
      %v1633 = vlaneseq
      %v1634 = vshrl.u32 %v1633, 7
      %v1635 = vsub.s32 3, %v1634
      %v1636 = vrot.slane %v1619, %v1635
      %v1641 = vmul.f32 %v968, %v1624
      %v1642 = vmul.f32 %v967, %v1628
      %v1643 = vmul.f32 %v966, %v1632
      %v1644 = vmul.f32 %v969, %v1636
      %1645 = vst [vmem:[#allocation2 + $0x320] sm:$0xff] %v1641
      %1646 = vst [vmem:[#allocation2 + $0x328] sm:$0xff] %v1642
      %1647 = vst [vmem:[#allocation2 + $0x330] sm:$0xff] %v1643
      %1648 = vst [vmem:[#allocation2 + $0x338] sm:$0xff] %v1644
      %s1649 = scalar_lea.vmem %s1, 98
      %v1650 = vld [vmem:[%s1649] ss:$8 sm:$0xf]
      %v1652 = vlaneseq
      %v1653 = vshrl.u32 %v1652, 7
      %v1654 = vsub.s32 0, %v1653
      %v1655 = vrot.slane %v1650, %v1654
      %v1656 = vlaneseq
      %v1657 = vshrl.u32 %v1656, 7
      %v1658 = vsub.s32 1, %v1657
      %v1659 = vrot.slane %v1650, %v1658
      %v1660 = vlaneseq
      %v1661 = vshrl.u32 %v1660, 7
      %v1662 = vsub.s32 2, %v1661
      %v1663 = vrot.slane %v1650, %v1662
      %v1664 = vlaneseq
      %v1665 = vshrl.u32 %v1664, 7
      %v1666 = vsub.s32 3, %v1665
      %v1667 = vrot.slane %v1650, %v1666
      %v1672 = vmul.f32 %v1012, %v1655
      %v1673 = vmul.f32 %v1011, %v1659
      %v1674 = vmul.f32 %v1010, %v1663
      %v1675 = vmul.f32 %v1013, %v1667
      %1676 = vst [vmem:[#allocation2 + $0x340] sm:$0xff] %v1672
      %1677 = vst [vmem:[#allocation2 + $0x348] sm:$0xff] %v1673
      %1678 = vst [vmem:[#allocation2 + $0x350] sm:$0xff] %v1674
      %1679 = vst [vmem:[#allocation2 + $0x358] sm:$0xff] %v1675
      %v1680 = vld [vmem:[%s5] sm:$0xff]
      %v1681 = vld [vmem:[%s5 + $0x8] sm:$0xff]
      %v1682 = vld [vmem:[%s5 + $0x10] sm:$0xff]
      %v1683 = vld [vmem:[%s5 + $0x18] sm:$0xff]
      %v1684 = vld [vmem:[#allocation2] sm:$0xff]
      %v1685 = vld [vmem:[#allocation2 + $0x8] sm:$0xff]
      %v1686 = vld [vmem:[#allocation2 + $0x10] sm:$0xff]
      %v1687 = vld [vmem:[#allocation2 + $0x18] sm:$0xff]
      %v1688 = vld [vmem:[#allocation2 + $0x20] sm:$0xff]
      %v1689 = vld [vmem:[#allocation2 + $0x28] sm:$0xff]
      %v1690 = vld [vmem:[#allocation2 + $0x30] sm:$0xff]
      %v1691 = vld [vmem:[#allocation2 + $0x38] sm:$0xff]
      %v1692 = vld [vmem:[#allocation2 + $0x40] sm:$0xff]
      %v1693 = vld [vmem:[#allocation2 + $0x48] sm:$0xff]
      %v1694 = vld [vmem:[#allocation2 + $0x50] sm:$0xff]
      %v1695 = vld [vmem:[#allocation2 + $0x58] sm:$0xff]
      %v1696 = vld [vmem:[#allocation2 + $0x60] sm:$0xff]
      %v1697 = vld [vmem:[#allocation2 + $0x68] sm:$0xff]
      %v1698 = vld [vmem:[#allocation2 + $0x70] sm:$0xff]
      %v1699 = vld [vmem:[#allocation2 + $0x78] sm:$0xff]
      %v1700 = vld [vmem:[#allocation2 + $0x80] sm:$0xff]
      %v1701 = vld [vmem:[#allocation2 + $0x88] sm:$0xff]
      %v1702 = vld [vmem:[#allocation2 + $0x90] sm:$0xff]
      %v1703 = vld [vmem:[#allocation2 + $0x98] sm:$0xff]
      %v1704 = vld [vmem:[#allocation2 + $0xa0] sm:$0xff]
      %v1705 = vld [vmem:[#allocation2 + $0xa8] sm:$0xff]
      %v1706 = vld [vmem:[#allocation2 + $0xb0] sm:$0xff]
      %v1707 = vld [vmem:[#allocation2 + $0xb8] sm:$0xff]
      %v1708 = vld [vmem:[#allocation2 + $0xc0] sm:$0xff]
      %v1709 = vld [vmem:[#allocation2 + $0xc8] sm:$0xff]
      %v1710 = vld [vmem:[#allocation2 + $0xd0] sm:$0xff]
      %v1711 = vld [vmem:[#allocation2 + $0xd8] sm:$0xff]
      %v1712 = vld [vmem:[#allocation2 + $0xe0] sm:$0xff]
      %v1713 = vld [vmem:[#allocation2 + $0xe8] sm:$0xff]
      %v1714 = vld [vmem:[#allocation2 + $0xf0] sm:$0xff]
      %v1715 = vld [vmem:[#allocation2 + $0xf8] sm:$0xff]
      %v1716 = vld [vmem:[#allocation2 + $0x100] sm:$0xff]
      %v1717 = vld [vmem:[#allocation2 + $0x108] sm:$0xff]
      %v1718 = vld [vmem:[#allocation2 + $0x110] sm:$0xff]
      %v1719 = vld [vmem:[#allocation2 + $0x118] sm:$0xff]
      %v1720 = vld [vmem:[#allocation2 + $0x120] sm:$0xff]
      %v1721 = vld [vmem:[#allocation2 + $0x128] sm:$0xff]
      %v1722 = vld [vmem:[#allocation2 + $0x130] sm:$0xff]
      %v1723 = vld [vmem:[#allocation2 + $0x138] sm:$0xff]
      %v1724 = vld [vmem:[#allocation2 + $0x140] sm:$0xff]
      %v1725 = vld [vmem:[#allocation2 + $0x148] sm:$0xff]
      %v1726 = vld [vmem:[#allocation2 + $0x150] sm:$0xff]
      %v1727 = vld [vmem:[#allocation2 + $0x158] sm:$0xff]
      %v1728 = vld [vmem:[#allocation2 + $0x160] sm:$0xff]
      %v1729 = vld [vmem:[#allocation2 + $0x168] sm:$0xff]
      %v1730 = vld [vmem:[#allocation2 + $0x170] sm:$0xff]
      %v1731 = vld [vmem:[#allocation2 + $0x178] sm:$0xff]
      %v1732 = vld [vmem:[#allocation2 + $0x180] sm:$0xff]
      %v1733 = vld [vmem:[#allocation2 + $0x188] sm:$0xff]
      %v1734 = vld [vmem:[#allocation2 + $0x190] sm:$0xff]
      %v1735 = vld [vmem:[#allocation2 + $0x198] sm:$0xff]
      %v1736 = vld [vmem:[#allocation2 + $0x1a0] sm:$0xff]
      %v1737 = vld [vmem:[#allocation2 + $0x1a8] sm:$0xff]
      %v1738 = vld [vmem:[#allocation2 + $0x1b0] sm:$0xff]
      %v1739 = vld [vmem:[#allocation2 + $0x1b8] sm:$0xff]
      %v1740 = vld [vmem:[#allocation2 + $0x1c0] sm:$0xff]
      %v1741 = vld [vmem:[#allocation2 + $0x1c8] sm:$0xff]
      %v1742 = vld [vmem:[#allocation2 + $0x1d0] sm:$0xff]
      %v1743 = vld [vmem:[#allocation2 + $0x1d8] sm:$0xff]
      %v1744 = vld [vmem:[#allocation2 + $0x1e0] sm:$0xff]
      %v1745 = vld [vmem:[#allocation2 + $0x1e8] sm:$0xff]
      %v1746 = vld [vmem:[#allocation2 + $0x1f0] sm:$0xff]
      %v1747 = vld [vmem:[#allocation2 + $0x1f8] sm:$0xff]
      %v1748 = vld [vmem:[#allocation2 + $0x200] sm:$0xff]
      %v1749 = vld [vmem:[#allocation2 + $0x208] sm:$0xff]
      %v1750 = vld [vmem:[#allocation2 + $0x210] sm:$0xff]
      %v1751 = vld [vmem:[#allocation2 + $0x218] sm:$0xff]
      %v1752 = vld [vmem:[#allocation2 + $0x220] sm:$0xff]
      %v1753 = vld [vmem:[#allocation2 + $0x228] sm:$0xff]
      %v1754 = vld [vmem:[#allocation2 + $0x230] sm:$0xff]
      %v1755 = vld [vmem:[#allocation2 + $0x238] sm:$0xff]
      %v1756 = vld [vmem:[#allocation2 + $0x240] sm:$0xff]
      %v1757 = vld [vmem:[#allocation2 + $0x248] sm:$0xff]
      %v1758 = vld [vmem:[#allocation2 + $0x250] sm:$0xff]
      %v1759 = vld [vmem:[#allocation2 + $0x258] sm:$0xff]
      %v1760 = vld [vmem:[#allocation2 + $0x260] sm:$0xff]
      %v1761 = vld [vmem:[#allocation2 + $0x268] sm:$0xff]
      %v1762 = vld [vmem:[#allocation2 + $0x270] sm:$0xff]
      %v1763 = vld [vmem:[#allocation2 + $0x278] sm:$0xff]
      %v1764 = vld [vmem:[#allocation2 + $0x280] sm:$0xff]
      %v1765 = vld [vmem:[#allocation2 + $0x288] sm:$0xff]
      %v1766 = vld [vmem:[#allocation2 + $0x290] sm:$0xff]
      %v1767 = vld [vmem:[#allocation2 + $0x298] sm:$0xff]
      %v1768 = vld [vmem:[#allocation2 + $0x2a0] sm:$0xff]
      %v1769 = vld [vmem:[#allocation2 + $0x2a8] sm:$0xff]
      %v1770 = vld [vmem:[#allocation2 + $0x2b0] sm:$0xff]
      %v1771 = vld [vmem:[#allocation2 + $0x2b8] sm:$0xff]
      %v1772 = vld [vmem:[#allocation2 + $0x2c0] sm:$0xff]
      %v1773 = vld [vmem:[#allocation2 + $0x2c8] sm:$0xff]
      %v1774 = vld [vmem:[#allocation2 + $0x2d0] sm:$0xff]
      %v1775 = vld [vmem:[#allocation2 + $0x2d8] sm:$0xff]
      %v1776 = vld [vmem:[#allocation2 + $0x2e0] sm:$0xff]
      %v1777 = vld [vmem:[#allocation2 + $0x2e8] sm:$0xff]
      %v1778 = vld [vmem:[#allocation2 + $0x2f0] sm:$0xff]
      %v1779 = vld [vmem:[#allocation2 + $0x2f8] sm:$0xff]
      %v1780 = vld [vmem:[#allocation2 + $0x300] sm:$0xff]
      %v1781 = vld [vmem:[#allocation2 + $0x308] sm:$0xff]
      %v1782 = vld [vmem:[#allocation2 + $0x310] sm:$0xff]
      %v1783 = vld [vmem:[#allocation2 + $0x318] sm:$0xff]
      %v1784 = vld [vmem:[#allocation2 + $0x320] sm:$0xff]
      %v1785 = vld [vmem:[#allocation2 + $0x328] sm:$0xff]
      %v1786 = vld [vmem:[#allocation2 + $0x330] sm:$0xff]
      %v1787 = vld [vmem:[#allocation2 + $0x338] sm:$0xff]
      %v1788 = vld [vmem:[#allocation2 + $0x340] sm:$0xff]
      %v1789 = vld [vmem:[#allocation2 + $0x348] sm:$0xff]
      %v1790 = vld [vmem:[#allocation2 + $0x350] sm:$0xff]
      %v1791 = vld [vmem:[#allocation2 + $0x358] sm:$0xff]
      %v1792 = vld [vmem:[%s6] sm:$0xff]
      %v1793 = vld [vmem:[%s6 + $0x8] sm:$0xff]
      %1795 = vset.pattern.permute.xlu0 0
      %1796 = vperm.xlu0 %1795, %v1792
      %v1797 = vpop.permute.xlu0 %1796
      %1800 = vset.pattern.permute.xlu0 0
      %1801 = vperm.xlu0 %1800, %v1793
      %v1802 = vpop.permute.xlu0 %1801
      %vm1804 = vcmask 719872
      %v1806 = vsel %vm1804, %v1681, 0
      %v1809 = vsel %vm1804, %v1683, 0
      %1811 = vmatprep.subr.mxu0 %v1685
      %1812 = vmatpush1.msra.mxu0 %v1684
      %1813 = vmatprep.subr.mxu0 %v1689
      %1814 = vmatpush1.msra.mxu0 %v1688
      %1815 = vmatprep.subr.mxu0 %v1693
      %1816 = vmatpush1.msra.mxu0 %v1692
      %1817 = vmatprep.subr.mxu0 %v1697
      %1818 = vmatpush1.msra.mxu0 %v1696
      %1819 = vmatprep.subr.mxu0 %v1701
      %1820 = vmatpush1.msra.mxu0 %v1700
      %1821 = vmatprep.subr.mxu0 %v1705
      %1822 = vmatpush1.msra.mxu0 %v1704
      %1823 = vmatprep.subr.mxu0 %v1709
      %1824 = vmatpush1.msra.mxu0 %v1708
      %1825 = vmatprep.subr.mxu0 %v1713
      %1826 = vmatpush1.msra.mxu0 %v1712
      %1827 = vmatprep.subr.mxu0 %v1717
      %1828 = vmatpush1.msra.mxu0 %v1716
      %1829 = vmatprep.subr.mxu0 %v1721
      %1830 = vmatpush1.msra.mxu0 %v1720
      %1831 = vmatprep.subr.mxu0 %v1725
      %1832 = vmatpush1.msra.mxu0 %v1724
      %1833 = vmatprep.subr.mxu0 %v1729
      %1834 = vmatpush1.msra.mxu0 %v1728
      %1835 = vmatprep.subr.mxu0 %v1733
      %1836 = vmatpush1.msra.mxu0 %v1732
      %1837 = vmatprep.subr.mxu0 %v1737
      %1838 = vmatpush1.msra.mxu0 %v1736
      %1839 = vmatprep.subr.mxu0 %v1741
      %1840 = vmatpush1.msra.mxu0 %v1740
      %1841 = vmatprep.subr.mxu0 %v1745
      %1842 = vmatpush1.msra.mxu0 %v1744
      %1843 = vmatprep.subr.mxu0 %v1749
      %1844 = vmatpush1.msra.mxu0 %v1748
      %1845 = vmatprep.subr.mxu0 %v1753
      %1846 = vmatpush1.msra.mxu0 %v1752
      %1847 = vmatprep.subr.mxu0 %v1757
      %1848 = vmatpush1.msra.mxu0 %v1756
      %1849 = vmatprep.subr.mxu0 %v1761
      %1850 = vmatpush1.msra.mxu0 %v1760
      %1851 = vmatprep.subr.mxu0 %v1765
      %1852 = vmatpush1.msra.mxu0 %v1764
      %1853 = vmatprep.subr.mxu0 %v1769
      %1854 = vmatpush1.msra.mxu0 %v1768
      %1855 = vmatprep.subr.mxu0 %v1773
      %1856 = vmatpush1.msra.mxu0 %v1772
      %1857 = vmatprep.subr.mxu0 %v1777
      %1858 = vmatpush1.msra.mxu0 %v1776
      %1859 = vmatprep.subr.mxu0 %v1781
      %1860 = vmatpush1.msra.mxu0 %v1780
      %1861 = vmatprep.subr.mxu0 %v1785
      %1862 = vmatpush1.msra.mxu0 %v1784
      %1863 = vmatprep.subr.mxu0 %v1789
      %1864 = vmatpush1.msra.mxu0 %v1788
      %1865 = vmatprep.subr.mxu0 0.0
      %1866 = vmatpush1.msra.mxu0 0.0
      %1867 = vmatprep.subr.mxu0 0.0
      %1868 = vmatpush1.msra.mxu0 0.0
      %1869 = vmatprep.subr.mxu0 0.0
      %1870 = vmatpush1.msra.mxu0 0.0
      %1871 = vmatprep.subr.mxu0 0.0
      %1872 = vmatpush1.msra.mxu0 0.0
      %1873 = vmatprep.subr.mxu0 0.0
      %1874 = vmatpush1.msra.mxu0 0.0
      %1875 = vmatprep.mubr.f32.mxu0 %v1806
      %1876 = vmatmul.mubr.f32.gmra.mrb[0].mxu0 %v1680
      %v1877 = vpop.f32.mrb[0].mxu0
      %v1878 = vadd.f32 %v1797, %v1877
      %v1879 = vpop.f32.mrb[0].mxu0
      %v1880 = vadd.f32 %v1797, %v1879
      %1881 = vmatprep.mubr.f32.mxu0 %v1809
      %1882 = vmatmul.mubr.f32.gmra.mrb[0].mxu0 %v1682
      %v1883 = vpop.f32.mrb[0].mxu0
      %v1884 = vadd.f32 %v1802, %v1883
      %v1885 = vpop.f32.mrb[0].mxu0
      %v1886 = vadd.f32 %v1802, %v1885
      %1887 = vdwg.mxu0
      %1888 = vmatprep.subr.mxu0 %v1687
      %1889 = vmatpush1.msra.mxu0 %v1686
      %1890 = vmatprep.subr.mxu0 %v1691
      %1891 = vmatpush1.msra.mxu0 %v1690
      %1892 = vmatprep.subr.mxu0 %v1695
      %1893 = vmatpush1.msra.mxu0 %v1694
      %1894 = vmatprep.subr.mxu0 %v1699
      %1895 = vmatpush1.msra.mxu0 %v1698
      %1896 = vmatprep.subr.mxu0 %v1703
      %1897 = vmatpush1.msra.mxu0 %v1702
      %1898 = vmatprep.subr.mxu0 %v1707
      %1899 = vmatpush1.msra.mxu0 %v1706
      %1900 = vmatprep.subr.mxu0 %v1711
      %1901 = vmatpush1.msra.mxu0 %v1710
      %1902 = vmatprep.subr.mxu0 %v1715
      %1903 = vmatpush1.msra.mxu0 %v1714
      %1904 = vmatprep.subr.mxu0 %v1719
      %1905 = vmatpush1.msra.mxu0 %v1718
      %1906 = vmatprep.subr.mxu0 %v1723
      %1907 = vmatpush1.msra.mxu0 %v1722
      %1908 = vmatprep.subr.mxu0 %v1727
      %1909 = vmatpush1.msra.mxu0 %v1726
      %1910 = vmatprep.subr.mxu0 %v1731
      %1911 = vmatpush1.msra.mxu0 %v1730
      %1912 = vmatprep.subr.mxu0 %v1735
      %1913 = vmatpush1.msra.mxu0 %v1734
      %1914 = vmatprep.subr.mxu0 %v1739
      %1915 = vmatpush1.msra.mxu0 %v1738
      %1916 = vmatprep.subr.mxu0 %v1743
      %1917 = vmatpush1.msra.mxu0 %v1742
      %1918 = vmatprep.subr.mxu0 %v1747
      %1919 = vmatpush1.msra.mxu0 %v1746
      %1920 = vmatprep.subr.mxu0 %v1751
      %1921 = vmatpush1.msra.mxu0 %v1750
      %1922 = vmatprep.subr.mxu0 %v1755
      %1923 = vmatpush1.msra.mxu0 %v1754
      %1924 = vmatprep.subr.mxu0 %v1759
      %1925 = vmatpush1.msra.mxu0 %v1758
      %1926 = vmatprep.subr.mxu0 %v1763
      %1927 = vmatpush1.msra.mxu0 %v1762
      %1928 = vmatprep.subr.mxu0 %v1767
      %1929 = vmatpush1.msra.mxu0 %v1766
      %1930 = vmatprep.subr.mxu0 %v1771
      %1931 = vmatpush1.msra.mxu0 %v1770
      %1932 = vmatprep.subr.mxu0 %v1775
      %1933 = vmatpush1.msra.mxu0 %v1774
      %1934 = vmatprep.subr.mxu0 %v1779
      %1935 = vmatpush1.msra.mxu0 %v1778
      %1936 = vmatprep.subr.mxu0 %v1783
      %1937 = vmatpush1.msra.mxu0 %v1782
      %1938 = vmatprep.subr.mxu0 %v1787
      %1939 = vmatpush1.msra.mxu0 %v1786
      %1940 = vmatprep.subr.mxu0 %v1791
      %1941 = vmatpush1.msra.mxu0 %v1790
      %1942 = vmatprep.subr.mxu0 0.0
      %1943 = vmatpush1.msra.mxu0 0.0
      %1944 = vmatprep.subr.mxu0 0.0
      %1945 = vmatpush1.msra.mxu0 0.0
      %1946 = vmatprep.subr.mxu0 0.0
      %1947 = vmatpush1.msra.mxu0 0.0
      %1948 = vmatprep.subr.mxu0 0.0
      %1949 = vmatpush1.msra.mxu0 0.0
      %1950 = vmatprep.subr.mxu0 0.0
      %1951 = vmatpush1.msra.mxu0 0.0
      %1952 = vmatprep.mubr.f32.mxu0 %v1806
      %1953 = vmatmul.mubr.f32.gmra.mrb[0].mxu0 %v1680
      %v1954 = vpop.f32.mrb[0].mxu0
      %v1955 = vadd.f32 %v1797, %v1954
      %v1956 = vpop.f32.mrb[0].mxu0
      %v1957 = vadd.f32 %v1797, %v1956
      %1958 = vmatprep.mubr.f32.mxu0 %v1809
      %1959 = vmatmul.mubr.f32.gmra.mrb[0].mxu0 %v1682
      %v1960 = vpop.f32.mrb[0].mxu0
      %v1961 = vadd.f32 %v1802, %v1960
      %v1962 = vpop.f32.mrb[0].mxu0
      %v1963 = vadd.f32 %v1802, %v1962
      %1964 = vdwg.mxu0
      %v1965 = vadd.f32 %v1878, %v1880
      %v1966 = vadd.f32 %v1965, %v1955
      %v1967 = vadd.f32 %v1966, %v1957
      %1968 = vadd.xlane.f32.xlu0 %v1967
      %v1969 = vpop.xlane.xlu0 %1968
      %v1970 = vadd.f32 %v1884, %v1886
      %v1971 = vadd.f32 %v1970, %v1961
      %v1972 = vadd.f32 %v1971, %v1963
      %1973 = vadd.xlane.f32.xlu0 %v1972
      %v1974 = vpop.xlane.xlu0 %1973
      %v1975 = vmul.f32 %v1878, %v1878
      %v1976 = vmul.f32 %v1880, %v1880
      %v1977 = vmul.f32 %v1955, %v1955
      %v1978 = vmul.f32 %v1957, %v1957
      %v1979 = vmul.f32 %v1884, %v1884
      %v1980 = vmul.f32 %v1886, %v1886
      %v1981 = vmul.f32 %v1961, %v1961
      %v1982 = vmul.f32 %v1963, %v1963
      %v1983 = vadd.f32 %v1975, %v1976
      %v1984 = vadd.f32 %v1983, %v1977
      %v1985 = vadd.f32 %v1984, %v1978
      %1986 = vadd.xlane.f32.xlu0 %v1985
      %v1987 = vpop.xlane.xlu0 %1986
      %v1988 = vadd.f32 %v1979, %v1980
      %v1989 = vadd.f32 %v1988, %v1981
      %v1990 = vadd.f32 %v1989, %v1982
      %1991 = vadd.xlane.f32.xlu0 %v1990
      %v1992 = vpop.xlane.xlu0 %1991
      %v1993 = vld [vmem:[%s7] sm:$0xff]
      %v1994 = vld [vmem:[%s7 + $0x8] sm:$0xff]
      %vm1995 = vcmask 130048
      %v1997 = vsel %vm1995, %v1993, 0
      %v2000 = vsel %vm1995, %v1994, 0
      %2002 = vmatprep.subr.mxu0 0.0
      %2003 = vmatpush1.msra.mxu0 %v1969
      %2004 = vmatprep.subr.mxu0 0.0
      %2005 = vmatpush1.msra.mxu0 %v1974
      %2006 = vmatprep.subr.mxu0 0.0
      %2007 = vmatpush1.msra.mxu0 0.0
      %2008 = vmatprep.subr.mxu0 0.0
      %2009 = vmatpush1.msra.mxu0 0.0
      %2010 = vmatprep.subr.mxu0 0.0
      %2011 = vmatpush1.msra.mxu0 0.0
      %2012 = vmatprep.subr.mxu0 0.0
      %2013 = vmatpush1.msra.mxu0 0.0
      %2014 = vmatprep.subr.mxu0 0.0
      %2015 = vmatpush1.msra.mxu0 0.0
      %2016 = vmatprep.subr.mxu0 0.0
      %2017 = vmatpush1.msra.mxu0 0.0
      %2018 = vmatprep.subr.mxu0 0.0
      %2019 = vmatpush1.msra.mxu0 0.0
      %2020 = vmatprep.subr.mxu0 0.0
      %2021 = vmatpush1.msra.mxu0 0.0
      %2022 = vmatprep.subr.mxu0 0.0
      %2023 = vmatpush1.msra.mxu0 0.0
      %2024 = vmatprep.subr.mxu0 0.0
      %2025 = vmatpush1.msra.mxu0 0.0
      %2026 = vmatprep.subr.mxu0 0.0
      %2027 = vmatpush1.msra.mxu0 0.0
      %2028 = vmatprep.subr.mxu0 0.0
      %2029 = vmatpush1.msra.mxu0 0.0
      %2030 = vmatprep.subr.mxu0 0.0
      %2031 = vmatpush1.msra.mxu0 0.0
      %2032 = vmatprep.subr.mxu0 0.0
      %2033 = vmatpush1.msra.mxu0 0.0
      %2034 = vmatprep.subr.mxu0 0.0
      %2035 = vmatpush1.msra.mxu0 0.0
      %2036 = vmatprep.subr.mxu0 0.0
      %2037 = vmatpush1.msra.mxu0 0.0
      %2038 = vmatprep.subr.mxu0 0.0
      %2039 = vmatpush1.msra.mxu0 0.0
      %2040 = vmatprep.subr.mxu0 0.0
      %2041 = vmatpush1.msra.mxu0 0.0
      %2042 = vmatprep.subr.mxu0 0.0
      %2043 = vmatpush1.msra.mxu0 0.0
      %2044 = vmatprep.subr.mxu0 0.0
      %2045 = vmatpush1.msra.mxu0 0.0
      %2046 = vmatprep.subr.mxu0 0.0
      %2047 = vmatpush1.msra.mxu0 0.0
      %2048 = vmatprep.subr.mxu0 0.0
      %2049 = vmatpush1.msra.mxu0 0.0
      %2050 = vmatprep.subr.mxu0 0.0
      %2051 = vmatpush1.msra.mxu0 0.0
      %2052 = vmatprep.subr.mxu0 0.0
      %2053 = vmatpush1.msra.mxu0 0.0
      %2054 = vmatprep.subr.mxu0 0.0
      %2055 = vmatpush1.msra.mxu0 0.0
      %2056 = vmatprep.subr.mxu0 0.0
      %2057 = vmatpush1.msra.mxu0 0.0
      %2058 = vmatprep.subr.mxu0 0.0
      %2059 = vmatpush1.msra.mxu0 0.0
      %2060 = vmatprep.subr.mxu0 0.0
      %2061 = vmatpush1.msra.mxu0 0.0
      %2062 = vmatprep.subr.mxu0 0.0
      %2063 = vmatpush1.msra.mxu0 0.0
      %2064 = vmatprep.subr.mxu0 0.0
      %2065 = vmatpush1.msra.mxu0 0.0
      %2066 = vmatprep.mubr.f32.mxu0 0.0
      %2067 = vmatmul.mubr.f32.gmra.mrb[0].mxu0 %v1997
      %v2068 = vpop.f32.mrb[0].mxu0
      %v2069 = vadd.f32 0.0, %v2068
      %v2070 = vpop.f32.mrb[0].mxu0
      %2071 = vmatprep.mubr.f32.mxu0 0.0
      %2072 = vmatmul.mubr.f32.gmra.mrb[0].mxu0 %v2000
      %v2073 = vpop.f32.mrb[0].mxu0
      %v2074 = vadd.f32 0.0, %v2073
      %v2075 = vpop.f32.mrb[0].mxu0
      %2076 = vdwg.mxu0
      %2077 = vmatprep.subr.mxu0 0.0
      %2078 = vmatpush1.msra.mxu0 %v1987
      %2079 = vmatprep.subr.mxu0 0.0
      %2080 = vmatpush1.msra.mxu0 %v1992
      %2081 = vmatprep.subr.mxu0 0.0
      %2082 = vmatpush1.msra.mxu0 0.0
      %2083 = vmatprep.subr.mxu0 0.0
      %2084 = vmatpush1.msra.mxu0 0.0
      %2085 = vmatprep.subr.mxu0 0.0
      %2086 = vmatpush1.msra.mxu0 0.0
      %2087 = vmatprep.subr.mxu0 0.0
      %2088 = vmatpush1.msra.mxu0 0.0
      %2089 = vmatprep.subr.mxu0 0.0
      %2090 = vmatpush1.msra.mxu0 0.0
      %2091 = vmatprep.subr.mxu0 0.0
      %2092 = vmatpush1.msra.mxu0 0.0
      %2093 = vmatprep.subr.mxu0 0.0
      %2094 = vmatpush1.msra.mxu0 0.0
      %2095 = vmatprep.subr.mxu0 0.0
      %2096 = vmatpush1.msra.mxu0 0.0
      %2097 = vmatprep.subr.mxu0 0.0
      %2098 = vmatpush1.msra.mxu0 0.0
      %2099 = vmatprep.subr.mxu0 0.0
      %2100 = vmatpush1.msra.mxu0 0.0
      %2101 = vmatprep.subr.mxu0 0.0
      %2102 = vmatpush1.msra.mxu0 0.0
      %2103 = vmatprep.subr.mxu0 0.0
      %2104 = vmatpush1.msra.mxu0 0.0
      %2105 = vmatprep.subr.mxu0 0.0
      %2106 = vmatpush1.msra.mxu0 0.0
      %2107 = vmatprep.subr.mxu0 0.0
      %2108 = vmatpush1.msra.mxu0 0.0
      %2109 = vmatprep.subr.mxu0 0.0
      %2110 = vmatpush1.msra.mxu0 0.0
      %2111 = vmatprep.subr.mxu0 0.0
      %2112 = vmatpush1.msra.mxu0 0.0
      %2113 = vmatprep.subr.mxu0 0.0
      %2114 = vmatpush1.msra.mxu0 0.0
      %2115 = vmatprep.subr.mxu0 0.0
      %2116 = vmatpush1.msra.mxu0 0.0
      %2117 = vmatprep.subr.mxu0 0.0
      %2118 = vmatpush1.msra.mxu0 0.0
      %2119 = vmatprep.subr.mxu0 0.0
      %2120 = vmatpush1.msra.mxu0 0.0
      %2121 = vmatprep.subr.mxu0 0.0
      %2122 = vmatpush1.msra.mxu0 0.0
      %2123 = vmatprep.subr.mxu0 0.0
      %2124 = vmatpush1.msra.mxu0 0.0
      %2125 = vmatprep.subr.mxu0 0.0
      %2126 = vmatpush1.msra.mxu0 0.0
      %2127 = vmatprep.subr.mxu0 0.0
      %2128 = vmatpush1.msra.mxu0 0.0
      %2129 = vmatprep.subr.mxu0 0.0
      %2130 = vmatpush1.msra.mxu0 0.0
      %2131 = vmatprep.subr.mxu0 0.0
      %2132 = vmatpush1.msra.mxu0 0.0
      %2133 = vmatprep.subr.mxu0 0.0
      %2134 = vmatpush1.msra.mxu0 0.0
      %2135 = vmatprep.subr.mxu0 0.0
      %2136 = vmatpush1.msra.mxu0 0.0
      %2137 = vmatprep.subr.mxu0 0.0
      %2138 = vmatpush1.msra.mxu0 0.0
      %2139 = vmatprep.subr.mxu0 0.0
      %2140 = vmatpush1.msra.mxu0 0.0
      %2141 = vmatprep.mubr.f32.mxu0 0.0
      %2142 = vmatmul.mubr.f32.gmra.mrb[0].mxu0 %v1997
      %v2143 = vpop.f32.mrb[0].mxu0
      %v2144 = vadd.f32 0.0, %v2143
      %v2145 = vpop.f32.mrb[0].mxu0
      %2146 = vmatprep.mubr.f32.mxu0 0.0
      %2147 = vmatmul.mubr.f32.gmra.mrb[0].mxu0 %v2000
      %v2148 = vpop.f32.mrb[0].mxu0
      %v2149 = vadd.f32 0.0, %v2148
      %v2150 = vpop.f32.mrb[0].mxu0
      %2151 = vdwg.mxu0
      %v2152 = vmul.f32 %v2069, %v2069
      %v2153 = vmul.f32 %v2074, %v2074
      %v2154 = vsub.f32 %v2144, %v2152
      %v2155 = vsub.f32 %v2149, %v2153
      %v2156 = vmax.f32 %v2154, 0.0
      %v2157 = vmax.f32 %v2155, 0.0
      %v2158 = vadd.f32 %v2156, 1e-05
      %v2159 = vadd.f32 %v2157, 1e-05
      %v2160 = vrsqrt.pop %v2158
      %v2161 = vrsqrt.pop %v2159
      %2163 = vset.pattern.permute.xlu0 0
      %2164 = vperm.xlu0 %2163, %v2069
      %v2165 = vpop.permute.xlu0 %2164
      %2168 = vset.pattern.permute.xlu0 0
      %2169 = vperm.xlu0 %2168, %v2074
      %v2170 = vpop.permute.xlu0 %2169
      %v2172 = vsub.f32 %v1878, %v2165
      %v2173 = vsub.f32 %v1880, %v2165
      %v2174 = vsub.f32 %v1955, %v2165
      %v2175 = vsub.f32 %v1957, %v2165
      %v2176 = vsub.f32 %v1884, %v2170
      %v2177 = vsub.f32 %v1886, %v2170
      %v2178 = vsub.f32 %v1961, %v2170
      %v2179 = vsub.f32 %v1963, %v2170
      %2181 = vset.pattern.permute.xlu0 0
      %2182 = vperm.xlu0 %2181, %v2160
      %v2183 = vpop.permute.xlu0 %2182
      %2186 = vset.pattern.permute.xlu0 0
      %2187 = vperm.xlu0 %2186, %v2161
      %v2188 = vpop.permute.xlu0 %2187
      %v2190 = vmul.f32 %v2172, %v2183
      %v2191 = vmul.f32 %v2173, %v2183
      %v2192 = vmul.f32 %v2174, %v2183
      %v2193 = vmul.f32 %v2175, %v2183
      %v2194 = vmul.f32 %v2176, %v2188
      %v2195 = vmul.f32 %v2177, %v2188
      %v2196 = vmul.f32 %v2178, %v2188
      %v2197 = vmul.f32 %v2179, %v2188
      %v2198 = vld [vmem:[%s8] sm:$0xff]
      %v2199 = vld [vmem:[%s8 + $0x8] sm:$0xff]
      %2201 = vset.pattern.permute.xlu0 0
      %2202 = vperm.xlu0 %2201, %v2198
      %v2203 = vpop.permute.xlu0 %2202
      %2206 = vset.pattern.permute.xlu0 0
      %2207 = vperm.xlu0 %2206, %v2199
      %v2208 = vpop.permute.xlu0 %2207
      %v2210 = vmul.f32 %v2190, %v2203
      %v2211 = vmul.f32 %v2191, %v2203
      %v2212 = vmul.f32 %v2192, %v2203
      %v2213 = vmul.f32 %v2193, %v2203
      %v2214 = vmul.f32 %v2194, %v2208
      %v2215 = vmul.f32 %v2195, %v2208
      %v2216 = vmul.f32 %v2196, %v2208
      %v2217 = vmul.f32 %v2197, %v2208
      %v2218 = vld [vmem:[%s9] sm:$0xff]
      %v2219 = vld [vmem:[%s9 + $0x8] sm:$0xff]
      %2221 = vset.pattern.permute.xlu0 0
      %2222 = vperm.xlu0 %2221, %v2218
      %v2223 = vpop.permute.xlu0 %2222
      %2226 = vset.pattern.permute.xlu0 0
      %2227 = vperm.xlu0 %2226, %v2219
      %v2228 = vpop.permute.xlu0 %2227
      %v2230 = vadd.f32 %v2210, %v2223
      %v2231 = vadd.f32 %v2211, %v2223
      %v2232 = vadd.f32 %v2212, %v2223
      %v2233 = vadd.f32 %v2213, %v2223
      %v2234 = vadd.f32 %v2214, %v2228
      %v2235 = vadd.f32 %v2215, %v2228
      %v2236 = vadd.f32 %v2216, %v2228
      %v2237 = vadd.f32 %v2217, %v2228
      %v2238 = vxor.u32 %v2230, 2147483648
      %v2239 = vxor.u32 %v2231, 2147483648
      %v2240 = vxor.u32 %v2232, 2147483648
      %v2241 = vxor.u32 %v2233, 2147483648
      %v2242 = vxor.u32 %v2234, 2147483648
      %v2243 = vxor.u32 %v2235, 2147483648
      %v2244 = vxor.u32 %v2236, 2147483648
      %v2245 = vxor.u32 %v2237, 2147483648
      %v2246 = vmul.f32 %v2238, 1.442695
      %v2247 = vpow.pop %v2246
      %v2248 = vmul.f32 %v2239, 1.442695
      %v2249 = vpow.pop %v2248
      %v2250 = vmul.f32 %v2240, 1.442695
      %v2251 = vpow.pop %v2250
      %v2252 = vmul.f32 %v2241, 1.442695
      %v2253 = vpow.pop %v2252
      %v2254 = vmul.f32 %v2242, 1.442695
      %v2255 = vpow.pop %v2254
      %v2256 = vmul.f32 %v2243, 1.442695
      %v2257 = vpow.pop %v2256
      %v2258 = vmul.f32 %v2244, 1.442695
      %v2259 = vpow.pop %v2258
      %v2260 = vmul.f32 %v2245, 1.442695
      %v2261 = vpow.pop %v2260
      %v2262 = vadd.f32 %v2247, 1.0
      %v2263 = vadd.f32 %v2249, 1.0
      %v2264 = vadd.f32 %v2251, 1.0
      %v2265 = vadd.f32 %v2253, 1.0
      %v2266 = vadd.f32 %v2255, 1.0
      %v2267 = vadd.f32 %v2257, 1.0
      %v2268 = vadd.f32 %v2259, 1.0
      %v2269 = vadd.f32 %v2261, 1.0
      %v2270 = vrcp.pop %v2262
      %v2271 = vmul.f32 1.0, %v2270
      %v2272 = vrcp.pop %v2263
      %v2273 = vmul.f32 1.0, %v2272
      %v2274 = vrcp.pop %v2264
      %v2275 = vmul.f32 1.0, %v2274
      %v2276 = vrcp.pop %v2265
      %v2277 = vmul.f32 1.0, %v2276
      %v2278 = vrcp.pop %v2266
      %v2279 = vmul.f32 1.0, %v2278
      %v2280 = vrcp.pop %v2267
      %v2281 = vmul.f32 1.0, %v2280
      %v2282 = vrcp.pop %v2268
      %v2283 = vmul.f32 1.0, %v2282
      %v2284 = vrcp.pop %v2269
      %v2285 = vmul.f32 1.0, %v2284
      %v2286 = vmul.f32 %v2230, %v2271
      %v2287 = vmul.f32 %v2231, %v2273
      %v2288 = vmul.f32 %v2232, %v2275
      %v2289 = vmul.f32 %v2233, %v2277
      %v2290 = vmul.f32 %v2234, %v2279
      %v2291 = vmul.f32 %v2235, %v2281
      %v2292 = vmul.f32 %v2236, %v2283
      %v2293 = vmul.f32 %v2237, %v2285
      %2294 = vrot.lane.b32.xlu0 %v2286, 73
      %v2295 = vpop.permute.xlu0 %2294
      %2296 = vrot.lane.b32.xlu0 %v2290, 73
      %v2297 = vpop.permute.xlu0 %2296
      %2298 = vrot.lane.b32.xlu0 %v2287, 73
      %v2299 = vpop.permute.xlu0 %2298
      %2300 = vrot.lane.b32.xlu0 %v2291, 73
      %v2301 = vpop.permute.xlu0 %2300
      %2302 = vrot.lane.b32.xlu0 %v2288, 73
      %v2303 = vpop.permute.xlu0 %2302
      %2304 = vrot.lane.b32.xlu0 %v2292, 73
      %v2305 = vpop.permute.xlu0 %2304
      %2306 = vrot.lane.b32.xlu0 %v2289, 73
      %v2307 = vpop.permute.xlu0 %2306
      %2308 = vrot.lane.b32.xlu0 %v2293, 73
      %v2309 = vpop.permute.xlu0 %2308
      %v2310 = vsel %vm658, %v2303, %v2307
      %v2311 = vsel %vm658, %v2305, %v2309
      %v2312 = vsel %vm658, %v2299, %v2303
      %v2313 = vsel %vm658, %v2301, %v2305
      %v2314 = vsel %vm658, %v2295, %v2299
      %v2315 = vsel %vm658, %v2297, %v2301
      %v2316 = vsel %vm658, %v2307, %v2295
      %v2317 = vsel %vm658, %v2309, %v2297
      %v2318 = vld [vmem:[%s1] ss:$8 sm:$0xf]
      %v2320 = vlaneseq
      %v2321 = vshrl.u32 %v2320, 7
      %v2322 = vsub.s32 0, %v2321
      %v2323 = vrot.slane %v2318, %v2322
      %v2324 = vlaneseq
      %v2325 = vshrl.u32 %v2324, 7
      %v2326 = vsub.s32 1, %v2325
      %v2327 = vrot.slane %v2318, %v2326
      %v2328 = vlaneseq
      %v2329 = vshrl.u32 %v2328, 7
      %v2330 = vsub.s32 2, %v2329
      %v2331 = vrot.slane %v2318, %v2330
      %v2332 = vlaneseq
      %v2333 = vshrl.u32 %v2332, 7
      %v2334 = vsub.s32 3, %v2333
      %v2335 = vrot.slane %v2318, %v2334
      %v2340 = vmul.f32 %v2316, %v2323
      %v2341 = vmul.f32 %v2314, %v2327
      %v2342 = vmul.f32 %v2312, %v2331
      %v2343 = vmul.f32 %v2310, %v2335
      %v2344 = vmul.f32 %v2317, %v2323
      %v2345 = vmul.f32 %v2315, %v2327
      %v2346 = vmul.f32 %v2313, %v2331
      %v2347 = vmul.f32 %v2311, %v2335
      %2348 = vst [vmem:[#allocation2] sm:$0xff] %v2340
      %2349 = vst [vmem:[#allocation2 + $0x8] sm:$0xff] %v2341
      %2350 = vst [vmem:[#allocation2 + $0x10] sm:$0xff] %v2342
      %2351 = vst [vmem:[#allocation2 + $0x18] sm:$0xff] %v2343
      %2352 = vst [vmem:[#allocation2 + $0x20] sm:$0xff] %v2344
      %2353 = vst [vmem:[#allocation2 + $0x28] sm:$0xff] %v2345
      %2354 = vst [vmem:[#allocation2 + $0x30] sm:$0xff] %v2346
      %2355 = vst [vmem:[#allocation2 + $0x38] sm:$0xff] %v2347
      %2356 = vrot.lane.b32.xlu0 %v2286, 72
      %v2357 = vpop.permute.xlu0 %2356
      %2358 = vrot.lane.b32.xlu0 %v2290, 72
      %v2359 = vpop.permute.xlu0 %2358
      %2360 = vrot.lane.b32.xlu0 %v2287, 72
      %v2361 = vpop.permute.xlu0 %2360
      %2362 = vrot.lane.b32.xlu0 %v2291, 72
      %v2363 = vpop.permute.xlu0 %2362
      %2364 = vrot.lane.b32.xlu0 %v2288, 72
      %v2365 = vpop.permute.xlu0 %2364
      %2366 = vrot.lane.b32.xlu0 %v2292, 72
      %v2367 = vpop.permute.xlu0 %2366
      %2368 = vrot.lane.b32.xlu0 %v2289, 72
      %v2369 = vpop.permute.xlu0 %2368
      %2370 = vrot.lane.b32.xlu0 %v2293, 72
      %v2371 = vpop.permute.xlu0 %2370
      %v2372 = vsel %vm701, %v2365, %v2369
      %v2373 = vsel %vm701, %v2367, %v2371
      %v2374 = vsel %vm701, %v2361, %v2365
      %v2375 = vsel %vm701, %v2363, %v2367
      %v2376 = vsel %vm701, %v2357, %v2361
      %v2377 = vsel %vm701, %v2359, %v2363
      %v2378 = vsel %vm701, %v2369, %v2357
      %v2379 = vsel %vm701, %v2371, %v2359
      %v2380 = vld [vmem:[%s706] ss:$8 sm:$0xf]
      %v2382 = vlaneseq
      %v2383 = vshrl.u32 %v2382, 7
      %v2384 = vsub.s32 0, %v2383
      %v2385 = vrot.slane %v2380, %v2384
      %v2386 = vlaneseq
      %v2387 = vshrl.u32 %v2386, 7
      %v2388 = vsub.s32 1, %v2387
      %v2389 = vrot.slane %v2380, %v2388
      %v2390 = vlaneseq
      %v2391 = vshrl.u32 %v2390, 7
      %v2392 = vsub.s32 2, %v2391
      %v2393 = vrot.slane %v2380, %v2392
      %v2394 = vlaneseq
      %v2395 = vshrl.u32 %v2394, 7
      %v2396 = vsub.s32 3, %v2395
      %v2397 = vrot.slane %v2380, %v2396
      %v2402 = vmul.f32 %v2378, %v2385
      %v2403 = vmul.f32 %v2376, %v2389
      %v2404 = vmul.f32 %v2374, %v2393
      %v2405 = vmul.f32 %v2372, %v2397
      %v2406 = vmul.f32 %v2379, %v2385
      %v2407 = vmul.f32 %v2377, %v2389
      %v2408 = vmul.f32 %v2375, %v2393
      %v2409 = vmul.f32 %v2373, %v2397
      %2410 = vst [vmem:[#allocation2 + $0x40] sm:$0xff] %v2402
      %2411 = vst [vmem:[#allocation2 + $0x48] sm:$0xff] %v2403
      %2412 = vst [vmem:[#allocation2 + $0x50] sm:$0xff] %v2404
      %2413 = vst [vmem:[#allocation2 + $0x58] sm:$0xff] %v2405
      %2414 = vst [vmem:[#allocation2 + $0x60] sm:$0xff] %v2406
      %2415 = vst [vmem:[#allocation2 + $0x68] sm:$0xff] %v2407
      %2416 = vst [vmem:[#allocation2 + $0x70] sm:$0xff] %v2408
      %2417 = vst [vmem:[#allocation2 + $0x78] sm:$0xff] %v2409
      %2418 = vrot.lane.b32.xlu0 %v2286, 71
      %v2419 = vpop.permute.xlu0 %2418
      %2420 = vrot.lane.b32.xlu0 %v2290, 71
      %v2421 = vpop.permute.xlu0 %2420
      %2422 = vrot.lane.b32.xlu0 %v2287, 71
      %v2423 = vpop.permute.xlu0 %2422
      %2424 = vrot.lane.b32.xlu0 %v2291, 71
      %v2425 = vpop.permute.xlu0 %2424
      %2426 = vrot.lane.b32.xlu0 %v2288, 71
      %v2427 = vpop.permute.xlu0 %2426
      %2428 = vrot.lane.b32.xlu0 %v2292, 71
      %v2429 = vpop.permute.xlu0 %2428
      %2430 = vrot.lane.b32.xlu0 %v2289, 71
      %v2431 = vpop.permute.xlu0 %2430
      %2432 = vrot.lane.b32.xlu0 %v2293, 71
      %v2433 = vpop.permute.xlu0 %2432
      %v2434 = vsel %vm745, %v2427, %v2431
      %v2435 = vsel %vm745, %v2429, %v2433
      %v2436 = vsel %vm745, %v2423, %v2427
      %v2437 = vsel %vm745, %v2425, %v2429
      %v2438 = vsel %vm745, %v2419, %v2423
      %v2439 = vsel %vm745, %v2421, %v2425
      %v2440 = vsel %vm745, %v2431, %v2419
      %v2441 = vsel %vm745, %v2433, %v2421
      %v2442 = vld [vmem:[%s750] ss:$8 sm:$0xf]
      %v2444 = vlaneseq
      %v2445 = vshrl.u32 %v2444, 7
      %v2446 = vsub.s32 0, %v2445
      %v2447 = vrot.slane %v2442, %v2446
      %v2448 = vlaneseq
      %v2449 = vshrl.u32 %v2448, 7
      %v2450 = vsub.s32 1, %v2449
      %v2451 = vrot.slane %v2442, %v2450
      %v2452 = vlaneseq
      %v2453 = vshrl.u32 %v2452, 7
      %v2454 = vsub.s32 2, %v2453
      %v2455 = vrot.slane %v2442, %v2454
      %v2456 = vlaneseq
      %v2457 = vshrl.u32 %v2456, 7
      %v2458 = vsub.s32 3, %v2457
      %v2459 = vrot.slane %v2442, %v2458
      %v2464 = vmul.f32 %v2440, %v2447
      %v2465 = vmul.f32 %v2438, %v2451
      %v2466 = vmul.f32 %v2436, %v2455
      %v2467 = vmul.f32 %v2434, %v2459
      %v2468 = vmul.f32 %v2441, %v2447
      %v2469 = vmul.f32 %v2439, %v2451
      %v2470 = vmul.f32 %v2437, %v2455
      %v2471 = vmul.f32 %v2435, %v2459
      %2472 = vst [vmem:[#allocation2 + $0x80] sm:$0xff] %v2464
      %2473 = vst [vmem:[#allocation2 + $0x88] sm:$0xff] %v2465
      %2474 = vst [vmem:[#allocation2 + $0x90] sm:$0xff] %v2466
      %2475 = vst [vmem:[#allocation2 + $0x98] sm:$0xff] %v2467
      %2476 = vst [vmem:[#allocation2 + $0xa0] sm:$0xff] %v2468
      %2477 = vst [vmem:[#allocation2 + $0xa8] sm:$0xff] %v2469
      %2478 = vst [vmem:[#allocation2 + $0xb0] sm:$0xff] %v2470
      %2479 = vst [vmem:[#allocation2 + $0xb8] sm:$0xff] %v2471
      %2480 = vrot.lane.b32.xlu0 %v2286, 65
      %v2481 = vpop.permute.xlu0 %2480
      %2482 = vrot.lane.b32.xlu0 %v2290, 65
      %v2483 = vpop.permute.xlu0 %2482
      %2484 = vrot.lane.b32.xlu0 %v2287, 65
      %v2485 = vpop.permute.xlu0 %2484
      %2486 = vrot.lane.b32.xlu0 %v2291, 65
      %v2487 = vpop.permute.xlu0 %2486
      %2488 = vrot.lane.b32.xlu0 %v2288, 65
      %v2489 = vpop.permute.xlu0 %2488
      %2490 = vrot.lane.b32.xlu0 %v2292, 65
      %v2491 = vpop.permute.xlu0 %2490
      %2492 = vrot.lane.b32.xlu0 %v2289, 65
      %v2493 = vpop.permute.xlu0 %2492
      %2494 = vrot.lane.b32.xlu0 %v2293, 65
      %v2495 = vpop.permute.xlu0 %2494
      %v2496 = vsel %vm789, %v2489, %v2493
      %v2497 = vsel %vm789, %v2491, %v2495
      %v2498 = vsel %vm789, %v2485, %v2489
      %v2499 = vsel %vm789, %v2487, %v2491
      %v2500 = vsel %vm789, %v2481, %v2485
      %v2501 = vsel %vm789, %v2483, %v2487
      %v2502 = vsel %vm789, %v2493, %v2481
      %v2503 = vsel %vm789, %v2495, %v2483
      %v2504 = vld [vmem:[%s794] ss:$8 sm:$0xf]
      %v2506 = vlaneseq
      %v2507 = vshrl.u32 %v2506, 7
      %v2508 = vsub.s32 0, %v2507
      %v2509 = vrot.slane %v2504, %v2508
      %v2510 = vlaneseq
      %v2511 = vshrl.u32 %v2510, 7
      %v2512 = vsub.s32 1, %v2511
      %v2513 = vrot.slane %v2504, %v2512
      %v2514 = vlaneseq
      %v2515 = vshrl.u32 %v2514, 7
      %v2516 = vsub.s32 2, %v2515
      %v2517 = vrot.slane %v2504, %v2516
      %v2518 = vlaneseq
      %v2519 = vshrl.u32 %v2518, 7
      %v2520 = vsub.s32 3, %v2519
      %v2521 = vrot.slane %v2504, %v2520
      %v2526 = vmul.f32 %v2502, %v2509
      %v2527 = vmul.f32 %v2500, %v2513
      %v2528 = vmul.f32 %v2498, %v2517
      %v2529 = vmul.f32 %v2496, %v2521
      %v2530 = vmul.f32 %v2503, %v2509
      %v2531 = vmul.f32 %v2501, %v2513
      %v2532 = vmul.f32 %v2499, %v2517
      %v2533 = vmul.f32 %v2497, %v2521
      %2534 = vst [vmem:[#allocation2 + $0xc0] sm:$0xff] %v2526
      %2535 = vst [vmem:[#allocation2 + $0xc8] sm:$0xff] %v2527
      %2536 = vst [vmem:[#allocation2 + $0xd0] sm:$0xff] %v2528
      %2537 = vst [vmem:[#allocation2 + $0xd8] sm:$0xff] %v2529
      %2538 = vst [vmem:[#allocation2 + $0xe0] sm:$0xff] %v2530
      %2539 = vst [vmem:[#allocation2 + $0xe8] sm:$0xff] %v2531
      %2540 = vst [vmem:[#allocation2 + $0xf0] sm:$0xff] %v2532
      %2541 = vst [vmem:[#allocation2 + $0xf8] sm:$0xff] %v2533
      %2542 = vrot.lane.b32.xlu0 %v2286, 64
      %v2543 = vpop.permute.xlu0 %2542
      %2544 = vrot.lane.b32.xlu0 %v2290, 64
      %v2545 = vpop.permute.xlu0 %2544
      %2546 = vrot.lane.b32.xlu0 %v2287, 64
      %v2547 = vpop.permute.xlu0 %2546
      %2548 = vrot.lane.b32.xlu0 %v2291, 64
      %v2549 = vpop.permute.xlu0 %2548
      %2550 = vrot.lane.b32.xlu0 %v2288, 64
      %v2551 = vpop.permute.xlu0 %2550
      %2552 = vrot.lane.b32.xlu0 %v2292, 64
      %v2553 = vpop.permute.xlu0 %2552
      %2554 = vrot.lane.b32.xlu0 %v2289, 64
      %v2555 = vpop.permute.xlu0 %2554
      %2556 = vrot.lane.b32.xlu0 %v2293, 64
      %v2557 = vpop.permute.xlu0 %2556
      %v2558 = vsel %vm833, %v2551, %v2555
      %v2559 = vsel %vm833, %v2553, %v2557
      %v2560 = vsel %vm833, %v2547, %v2551
      %v2561 = vsel %vm833, %v2549, %v2553
      %v2562 = vsel %vm833, %v2543, %v2547
      %v2563 = vsel %vm833, %v2545, %v2549
      %v2564 = vsel %vm833, %v2555, %v2543
      %v2565 = vsel %vm833, %v2557, %v2545
      %v2566 = vld [vmem:[%s838] ss:$8 sm:$0xf]
      %v2568 = vlaneseq
      %v2569 = vshrl.u32 %v2568, 7
      %v2570 = vsub.s32 0, %v2569
      %v2571 = vrot.slane %v2566, %v2570
      %v2572 = vlaneseq
      %v2573 = vshrl.u32 %v2572, 7
      %v2574 = vsub.s32 1, %v2573
      %v2575 = vrot.slane %v2566, %v2574
      %v2576 = vlaneseq
      %v2577 = vshrl.u32 %v2576, 7
      %v2578 = vsub.s32 2, %v2577
      %v2579 = vrot.slane %v2566, %v2578
      %v2580 = vlaneseq
      %v2581 = vshrl.u32 %v2580, 7
      %v2582 = vsub.s32 3, %v2581
      %v2583 = vrot.slane %v2566, %v2582
      %v2588 = vmul.f32 %v2564, %v2571
      %v2589 = vmul.f32 %v2562, %v2575
      %v2590 = vmul.f32 %v2560, %v2579
      %v2591 = vmul.f32 %v2558, %v2583
      %v2592 = vmul.f32 %v2565, %v2571
      %v2593 = vmul.f32 %v2563, %v2575
      %v2594 = vmul.f32 %v2561, %v2579
      %v2595 = vmul.f32 %v2559, %v2583
      %2596 = vst [vmem:[#allocation2 + $0x100] sm:$0xff] %v2588
      %2597 = vst [vmem:[#allocation2 + $0x108] sm:$0xff] %v2589
      %2598 = vst [vmem:[#allocation2 + $0x110] sm:$0xff] %v2590
      %2599 = vst [vmem:[#allocation2 + $0x118] sm:$0xff] %v2591
      %2600 = vst [vmem:[#allocation2 + $0x120] sm:$0xff] %v2592
      %2601 = vst [vmem:[#allocation2 + $0x128] sm:$0xff] %v2593
      %2602 = vst [vmem:[#allocation2 + $0x130] sm:$0xff] %v2594
      %2603 = vst [vmem:[#allocation2 + $0x138] sm:$0xff] %v2595
      %2604 = vrot.lane.b32.xlu0 %v2286, 63
      %v2605 = vpop.permute.xlu0 %2604
      %2606 = vrot.lane.b32.xlu0 %v2290, 63
      %v2607 = vpop.permute.xlu0 %2606
      %2608 = vrot.lane.b32.xlu0 %v2287, 63
      %v2609 = vpop.permute.xlu0 %2608
      %2610 = vrot.lane.b32.xlu0 %v2291, 63
      %v2611 = vpop.permute.xlu0 %2610
      %2612 = vrot.lane.b32.xlu0 %v2288, 63
      %v2613 = vpop.permute.xlu0 %2612
      %2614 = vrot.lane.b32.xlu0 %v2292, 63
      %v2615 = vpop.permute.xlu0 %2614
      %2616 = vrot.lane.b32.xlu0 %v2289, 63
      %v2617 = vpop.permute.xlu0 %2616
      %2618 = vrot.lane.b32.xlu0 %v2293, 63
      %v2619 = vpop.permute.xlu0 %2618
      %v2620 = vsel %vm877, %v2613, %v2617
      %v2621 = vsel %vm877, %v2615, %v2619
      %v2622 = vsel %vm877, %v2609, %v2613
      %v2623 = vsel %vm877, %v2611, %v2615
      %v2624 = vsel %vm877, %v2605, %v2609
      %v2625 = vsel %vm877, %v2607, %v2611
      %v2626 = vsel %vm877, %v2617, %v2605
      %v2627 = vsel %vm877, %v2619, %v2607
      %v2628 = vld [vmem:[%s882] ss:$8 sm:$0xf]
      %v2630 = vlaneseq
      %v2631 = vshrl.u32 %v2630, 7
      %v2632 = vsub.s32 0, %v2631
      %v2633 = vrot.slane %v2628, %v2632
      %v2634 = vlaneseq
      %v2635 = vshrl.u32 %v2634, 7
      %v2636 = vsub.s32 1, %v2635
      %v2637 = vrot.slane %v2628, %v2636
      %v2638 = vlaneseq
      %v2639 = vshrl.u32 %v2638, 7
      %v2640 = vsub.s32 2, %v2639
      %v2641 = vrot.slane %v2628, %v2640
      %v2642 = vlaneseq
      %v2643 = vshrl.u32 %v2642, 7
      %v2644 = vsub.s32 3, %v2643
      %v2645 = vrot.slane %v2628, %v2644
      %v2650 = vmul.f32 %v2626, %v2633
      %v2651 = vmul.f32 %v2624, %v2637
      %v2652 = vmul.f32 %v2622, %v2641
      %v2653 = vmul.f32 %v2620, %v2645
      %v2654 = vmul.f32 %v2627, %v2633
      %v2655 = vmul.f32 %v2625, %v2637
      %v2656 = vmul.f32 %v2623, %v2641
      %v2657 = vmul.f32 %v2621, %v2645
      %2658 = vst [vmem:[#allocation2 + $0x140] sm:$0xff] %v2650
      %2659 = vst [vmem:[#allocation2 + $0x148] sm:$0xff] %v2651
      %2660 = vst [vmem:[#allocation2 + $0x150] sm:$0xff] %v2652
      %2661 = vst [vmem:[#allocation2 + $0x158] sm:$0xff] %v2653
      %2662 = vst [vmem:[#allocation2 + $0x160] sm:$0xff] %v2654
      %2663 = vst [vmem:[#allocation2 + $0x168] sm:$0xff] %v2655
      %2664 = vst [vmem:[#allocation2 + $0x170] sm:$0xff] %v2656
      %2665 = vst [vmem:[#allocation2 + $0x178] sm:$0xff] %v2657
      %2666 = vrot.lane.b32.xlu0 %v2286, 57
      %v2667 = vpop.permute.xlu0 %2666
      %2668 = vrot.lane.b32.xlu0 %v2290, 57
      %v2669 = vpop.permute.xlu0 %2668
      %2670 = vrot.lane.b32.xlu0 %v2287, 57
      %v2671 = vpop.permute.xlu0 %2670
      %2672 = vrot.lane.b32.xlu0 %v2291, 57
      %v2673 = vpop.permute.xlu0 %2672
      %2674 = vrot.lane.b32.xlu0 %v2288, 57
      %v2675 = vpop.permute.xlu0 %2674
      %2676 = vrot.lane.b32.xlu0 %v2292, 57
      %v2677 = vpop.permute.xlu0 %2676
      %2678 = vrot.lane.b32.xlu0 %v2289, 57
      %v2679 = vpop.permute.xlu0 %2678
      %2680 = vrot.lane.b32.xlu0 %v2293, 57
      %v2681 = vpop.permute.xlu0 %2680
      %v2682 = vsel %vm921, %v2675, %v2679
      %v2683 = vsel %vm921, %v2677, %v2681
      %v2684 = vsel %vm921, %v2671, %v2675
      %v2685 = vsel %vm921, %v2673, %v2677
      %v2686 = vsel %vm921, %v2667, %v2671
      %v2687 = vsel %vm921, %v2669, %v2673
      %v2688 = vsel %vm921, %v2679, %v2667
      %v2689 = vsel %vm921, %v2681, %v2669
      %v2690 = vld [vmem:[%s926] ss:$8 sm:$0xf]
      %v2692 = vlaneseq
      %v2693 = vshrl.u32 %v2692, 7
      %v2694 = vsub.s32 0, %v2693
      %v2695 = vrot.slane %v2690, %v2694
      %v2696 = vlaneseq
      %v2697 = vshrl.u32 %v2696, 7
      %v2698 = vsub.s32 1, %v2697
      %v2699 = vrot.slane %v2690, %v2698
      %v2700 = vlaneseq
      %v2701 = vshrl.u32 %v2700, 7
      %v2702 = vsub.s32 2, %v2701
      %v2703 = vrot.slane %v2690, %v2702
      %v2704 = vlaneseq
      %v2705 = vshrl.u32 %v2704, 7
      %v2706 = vsub.s32 3, %v2705
      %v2707 = vrot.slane %v2690, %v2706
      %v2712 = vmul.f32 %v2688, %v2695
      %v2713 = vmul.f32 %v2686, %v2699
      %v2714 = vmul.f32 %v2684, %v2703
      %v2715 = vmul.f32 %v2682, %v2707
      %v2716 = vmul.f32 %v2689, %v2695
      %v2717 = vmul.f32 %v2687, %v2699
      %v2718 = vmul.f32 %v2685, %v2703
      %v2719 = vmul.f32 %v2683, %v2707
      %2720 = vst [vmem:[#allocation2 + $0x180] sm:$0xff] %v2712
      %2721 = vst [vmem:[#allocation2 + $0x188] sm:$0xff] %v2713
      %2722 = vst [vmem:[#allocation2 + $0x190] sm:$0xff] %v2714
      %2723 = vst [vmem:[#allocation2 + $0x198] sm:$0xff] %v2715
      %2724 = vst [vmem:[#allocation2 + $0x1a0] sm:$0xff] %v2716
      %2725 = vst [vmem:[#allocation2 + $0x1a8] sm:$0xff] %v2717
      %2726 = vst [vmem:[#allocation2 + $0x1b0] sm:$0xff] %v2718
      %2727 = vst [vmem:[#allocation2 + $0x1b8] sm:$0xff] %v2719
      %2728 = vrot.lane.b32.xlu0 %v2286, 56
      %v2729 = vpop.permute.xlu0 %2728
      %2730 = vrot.lane.b32.xlu0 %v2290, 56
      %v2731 = vpop.permute.xlu0 %2730
      %2732 = vrot.lane.b32.xlu0 %v2287, 56
      %v2733 = vpop.permute.xlu0 %2732
      %2734 = vrot.lane.b32.xlu0 %v2291, 56
      %v2735 = vpop.permute.xlu0 %2734
      %2736 = vrot.lane.b32.xlu0 %v2288, 56
      %v2737 = vpop.permute.xlu0 %2736
      %2738 = vrot.lane.b32.xlu0 %v2292, 56
      %v2739 = vpop.permute.xlu0 %2738
      %2740 = vrot.lane.b32.xlu0 %v2289, 56
      %v2741 = vpop.permute.xlu0 %2740
      %2742 = vrot.lane.b32.xlu0 %v2293, 56
      %v2743 = vpop.permute.xlu0 %2742
      %v2744 = vsel %vm965, %v2737, %v2741
      %v2745 = vsel %vm965, %v2739, %v2743
      %v2746 = vsel %vm965, %v2733, %v2737
      %v2747 = vsel %vm965, %v2735, %v2739
      %v2748 = vsel %vm965, %v2729, %v2733
      %v2749 = vsel %vm965, %v2731, %v2735
      %v2750 = vsel %vm965, %v2741, %v2729
      %v2751 = vsel %vm965, %v2743, %v2731
      %v2752 = vld [vmem:[%s970] ss:$8 sm:$0xf]
      %v2754 = vlaneseq
      %v2755 = vshrl.u32 %v2754, 7
      %v2756 = vsub.s32 0, %v2755
      %v2757 = vrot.slane %v2752, %v2756
      %v2758 = vlaneseq
      %v2759 = vshrl.u32 %v2758, 7
      %v2760 = vsub.s32 1, %v2759
      %v2761 = vrot.slane %v2752, %v2760
      %v2762 = vlaneseq
      %v2763 = vshrl.u32 %v2762, 7
      %v2764 = vsub.s32 2, %v2763
      %v2765 = vrot.slane %v2752, %v2764
      %v2766 = vlaneseq
      %v2767 = vshrl.u32 %v2766, 7
      %v2768 = vsub.s32 3, %v2767
      %v2769 = vrot.slane %v2752, %v2768
      %v2774 = vmul.f32 %v2750, %v2757
      %v2775 = vmul.f32 %v2748, %v2761
      %v2776 = vmul.f32 %v2746, %v2765
      %v2777 = vmul.f32 %v2744, %v2769
      %v2778 = vmul.f32 %v2751, %v2757
      %v2779 = vmul.f32 %v2749, %v2761
      %v2780 = vmul.f32 %v2747, %v2765
      %v2781 = vmul.f32 %v2745, %v2769
      %2782 = vst [vmem:[#allocation2 + $0x1c0] sm:$0xff] %v2774
      %2783 = vst [vmem:[#allocation2 + $0x1c8] sm:$0xff] %v2775
      %2784 = vst [vmem:[#allocation2 + $0x1d0] sm:$0xff] %v2776
      %2785 = vst [vmem:[#allocation2 + $0x1d8] sm:$0xff] %v2777
      %2786 = vst [vmem:[#allocation2 + $0x1e0] sm:$0xff] %v2778
      %2787 = vst [vmem:[#allocation2 + $0x1e8] sm:$0xff] %v2779
      %2788 = vst [vmem:[#allocation2 + $0x1f0] sm:$0xff] %v2780
      %2789 = vst [vmem:[#allocation2 + $0x1f8] sm:$0xff] %v2781
      %2790 = vrot.lane.b32.xlu0 %v2286, 55
      %v2791 = vpop.permute.xlu0 %2790
      %2792 = vrot.lane.b32.xlu0 %v2290, 55
      %v2793 = vpop.permute.xlu0 %2792
      %2794 = vrot.lane.b32.xlu0 %v2287, 55
      %v2795 = vpop.permute.xlu0 %2794
      %2796 = vrot.lane.b32.xlu0 %v2291, 55
      %v2797 = vpop.permute.xlu0 %2796
      %2798 = vrot.lane.b32.xlu0 %v2288, 55
      %v2799 = vpop.permute.xlu0 %2798
      %2800 = vrot.lane.b32.xlu0 %v2292, 55
      %v2801 = vpop.permute.xlu0 %2800
      %2802 = vrot.lane.b32.xlu0 %v2289, 55
      %v2803 = vpop.permute.xlu0 %2802
      %2804 = vrot.lane.b32.xlu0 %v2293, 55
      %v2805 = vpop.permute.xlu0 %2804
      %v2806 = vsel %vm1009, %v2799, %v2803
      %v2807 = vsel %vm1009, %v2801, %v2805
      %v2808 = vsel %vm1009, %v2795, %v2799
      %v2809 = vsel %vm1009, %v2797, %v2801
      %v2810 = vsel %vm1009, %v2791, %v2795
      %v2811 = vsel %vm1009, %v2793, %v2797
      %v2812 = vsel %vm1009, %v2803, %v2791
      %v2813 = vsel %vm1009, %v2805, %v2793
      %v2814 = vld [vmem:[%s1014] ss:$8 sm:$0xf]
      %v2816 = vlaneseq
      %v2817 = vshrl.u32 %v2816, 7
      %v2818 = vsub.s32 0, %v2817
      %v2819 = vrot.slane %v2814, %v2818
      %v2820 = vlaneseq
      %v2821 = vshrl.u32 %v2820, 7
      %v2822 = vsub.s32 1, %v2821
      %v2823 = vrot.slane %v2814, %v2822
      %v2824 = vlaneseq
      %v2825 = vshrl.u32 %v2824, 7
      %v2826 = vsub.s32 2, %v2825
      %v2827 = vrot.slane %v2814, %v2826
      %v2828 = vlaneseq
      %v2829 = vshrl.u32 %v2828, 7
      %v2830 = vsub.s32 3, %v2829
      %v2831 = vrot.slane %v2814, %v2830
      %v2836 = vmul.f32 %v2812, %v2819
      %v2837 = vmul.f32 %v2810, %v2823
      %v2838 = vmul.f32 %v2808, %v2827
      %v2839 = vmul.f32 %v2806, %v2831
      %v2840 = vmul.f32 %v2813, %v2819
      %v2841 = vmul.f32 %v2811, %v2823
      %v2842 = vmul.f32 %v2809, %v2827
      %v2843 = vmul.f32 %v2807, %v2831
      %2844 = vst [vmem:[#allocation2 + $0x200] sm:$0xff] %v2836
      %2845 = vst [vmem:[#allocation2 + $0x208] sm:$0xff] %v2837
      %2846 = vst [vmem:[#allocation2 + $0x210] sm:$0xff] %v2838
      %2847 = vst [vmem:[#allocation2 + $0x218] sm:$0xff] %v2839
      %2848 = vst [vmem:[#allocation2 + $0x220] sm:$0xff] %v2840
      %2849 = vst [vmem:[#allocation2 + $0x228] sm:$0xff] %v2841
      %2850 = vst [vmem:[#allocation2 + $0x230] sm:$0xff] %v2842
      %2851 = vst [vmem:[#allocation2 + $0x238] sm:$0xff] %v2843
      %2852 = vrot.lane.b32.xlu0 %v2286, 9
      %v2853 = vpop.permute.xlu0 %2852
      %2854 = vrot.lane.b32.xlu0 %v2290, 9
      %v2855 = vpop.permute.xlu0 %2854
      %2856 = vrot.lane.b32.xlu0 %v2287, 9
      %v2857 = vpop.permute.xlu0 %2856
      %2858 = vrot.lane.b32.xlu0 %v2291, 9
      %v2859 = vpop.permute.xlu0 %2858
      %2860 = vrot.lane.b32.xlu0 %v2288, 9
      %v2861 = vpop.permute.xlu0 %2860
      %2862 = vrot.lane.b32.xlu0 %v2292, 9
      %v2863 = vpop.permute.xlu0 %2862
      %2864 = vrot.lane.b32.xlu0 %v2289, 9
      %v2865 = vpop.permute.xlu0 %2864
      %2866 = vrot.lane.b32.xlu0 %v2293, 9
      %v2867 = vpop.permute.xlu0 %2866
      %v2868 = vsel %vm1053, %v2861, %v2865
      %v2869 = vsel %vm1053, %v2863, %v2867
      %v2870 = vsel %vm1053, %v2857, %v2861
      %v2871 = vsel %vm1053, %v2859, %v2863
      %v2872 = vsel %vm1053, %v2853, %v2857
      %v2873 = vsel %vm1053, %v2855, %v2859
      %v2874 = vsel %vm1053, %v2865, %v2853
      %v2875 = vsel %vm1053, %v2867, %v2855
      %v2876 = vld [vmem:[%s1058] ss:$8 sm:$0xf]
      %v2878 = vlaneseq
      %v2879 = vshrl.u32 %v2878, 7
      %v2880 = vsub.s32 0, %v2879
      %v2881 = vrot.slane %v2876, %v2880
      %v2882 = vlaneseq
      %v2883 = vshrl.u32 %v2882, 7
      %v2884 = vsub.s32 1, %v2883
      %v2885 = vrot.slane %v2876, %v2884
      %v2886 = vlaneseq
      %v2887 = vshrl.u32 %v2886, 7
      %v2888 = vsub.s32 2, %v2887
      %v2889 = vrot.slane %v2876, %v2888
      %v2890 = vlaneseq
      %v2891 = vshrl.u32 %v2890, 7
      %v2892 = vsub.s32 3, %v2891
      %v2893 = vrot.slane %v2876, %v2892
      %v2898 = vmul.f32 %v2874, %v2881
      %v2899 = vmul.f32 %v2872, %v2885
      %v2900 = vmul.f32 %v2870, %v2889
      %v2901 = vmul.f32 %v2868, %v2893
      %v2902 = vmul.f32 %v2875, %v2881
      %v2903 = vmul.f32 %v2873, %v2885
      %v2904 = vmul.f32 %v2871, %v2889
      %v2905 = vmul.f32 %v2869, %v2893
      %2906 = vst [vmem:[#allocation2 + $0x240] sm:$0xff] %v2898
      %2907 = vst [vmem:[#allocation2 + $0x248] sm:$0xff] %v2899
      %2908 = vst [vmem:[#allocation2 + $0x250] sm:$0xff] %v2900
      %2909 = vst [vmem:[#allocation2 + $0x258] sm:$0xff] %v2901
      %2910 = vst [vmem:[#allocation2 + $0x260] sm:$0xff] %v2902
      %2911 = vst [vmem:[#allocation2 + $0x268] sm:$0xff] %v2903
      %2912 = vst [vmem:[#allocation2 + $0x270] sm:$0xff] %v2904
      %2913 = vst [vmem:[#allocation2 + $0x278] sm:$0xff] %v2905
      %2914 = vrot.lane.b32.xlu0 %v2286, 8
      %v2915 = vpop.permute.xlu0 %2914
      %2916 = vrot.lane.b32.xlu0 %v2290, 8
      %v2917 = vpop.permute.xlu0 %2916
      %2918 = vrot.lane.b32.xlu0 %v2287, 8
      %v2919 = vpop.permute.xlu0 %2918
      %2920 = vrot.lane.b32.xlu0 %v2291, 8
      %v2921 = vpop.permute.xlu0 %2920
      %2922 = vrot.lane.b32.xlu0 %v2288, 8
      %v2923 = vpop.permute.xlu0 %2922
      %2924 = vrot.lane.b32.xlu0 %v2292, 8
      %v2925 = vpop.permute.xlu0 %2924
      %2926 = vrot.lane.b32.xlu0 %v2289, 8
      %v2927 = vpop.permute.xlu0 %2926
      %2928 = vrot.lane.b32.xlu0 %v2293, 8
      %v2929 = vpop.permute.xlu0 %2928
      %v2930 = vsel %vm1097, %v2923, %v2927
      %v2931 = vsel %vm1097, %v2925, %v2929
      %v2932 = vsel %vm1097, %v2919, %v2923
      %v2933 = vsel %vm1097, %v2921, %v2925
      %v2934 = vsel %vm1097, %v2915, %v2919
      %v2935 = vsel %vm1097, %v2917, %v2921
      %v2936 = vsel %vm1097, %v2927, %v2915
      %v2937 = vsel %vm1097, %v2929, %v2917
      %v2938 = vld [vmem:[%s1102] ss:$8 sm:$0xf]
      %v2940 = vlaneseq
      %v2941 = vshrl.u32 %v2940, 7
      %v2942 = vsub.s32 0, %v2941
      %v2943 = vrot.slane %v2938, %v2942
      %v2944 = vlaneseq
      %v2945 = vshrl.u32 %v2944, 7
      %v2946 = vsub.s32 1, %v2945
      %v2947 = vrot.slane %v2938, %v2946
      %v2948 = vlaneseq
      %v2949 = vshrl.u32 %v2948, 7
      %v2950 = vsub.s32 2, %v2949
      %v2951 = vrot.slane %v2938, %v2950
      %v2952 = vlaneseq
      %v2953 = vshrl.u32 %v2952, 7
      %v2954 = vsub.s32 3, %v2953
      %v2955 = vrot.slane %v2938, %v2954
      %v2960 = vmul.f32 %v2936, %v2943
      %v2961 = vmul.f32 %v2934, %v2947
      %v2962 = vmul.f32 %v2932, %v2951
      %v2963 = vmul.f32 %v2930, %v2955
      %v2964 = vmul.f32 %v2937, %v2943
      %v2965 = vmul.f32 %v2935, %v2947
      %v2966 = vmul.f32 %v2933, %v2951
      %v2967 = vmul.f32 %v2931, %v2955
      %2968 = vst [vmem:[#allocation2 + $0x280] sm:$0xff] %v2960
      %2969 = vst [vmem:[#allocation2 + $0x288] sm:$0xff] %v2961
      %2970 = vst [vmem:[#allocation2 + $0x290] sm:$0xff] %v2962
      %2971 = vst [vmem:[#allocation2 + $0x298] sm:$0xff] %v2963
      %2972 = vst [vmem:[#allocation2 + $0x2a0] sm:$0xff] %v2964
      %2973 = vst [vmem:[#allocation2 + $0x2a8] sm:$0xff] %v2965
      %2974 = vst [vmem:[#allocation2 + $0x2b0] sm:$0xff] %v2966
      %2975 = vst [vmem:[#allocation2 + $0x2b8] sm:$0xff] %v2967
      %2976 = vrot.lane.b32.xlu0 %v2286, 7
      %v2977 = vpop.permute.xlu0 %2976
      %2978 = vrot.lane.b32.xlu0 %v2290, 7
      %v2979 = vpop.permute.xlu0 %2978
      %2980 = vrot.lane.b32.xlu0 %v2287, 7
      %v2981 = vpop.permute.xlu0 %2980
      %2982 = vrot.lane.b32.xlu0 %v2291, 7
      %v2983 = vpop.permute.xlu0 %2982
      %2984 = vrot.lane.b32.xlu0 %v2288, 7
      %v2985 = vpop.permute.xlu0 %2984
      %2986 = vrot.lane.b32.xlu0 %v2292, 7
      %v2987 = vpop.permute.xlu0 %2986
      %2988 = vrot.lane.b32.xlu0 %v2289, 7
      %v2989 = vpop.permute.xlu0 %2988
      %2990 = vrot.lane.b32.xlu0 %v2293, 7
      %v2991 = vpop.permute.xlu0 %2990
      %v2992 = vsel %vm1141, %v2985, %v2989
      %v2993 = vsel %vm1141, %v2987, %v2991
      %v2994 = vsel %vm1141, %v2981, %v2985
      %v2995 = vsel %vm1141, %v2983, %v2987
      %v2996 = vsel %vm1141, %v2977, %v2981
      %v2997 = vsel %vm1141, %v2979, %v2983
      %v2998 = vsel %vm1141, %v2989, %v2977
      %v2999 = vsel %vm1141, %v2991, %v2979
      %v3000 = vld [vmem:[%s1146] ss:$8 sm:$0xf]
      %v3002 = vlaneseq
      %v3003 = vshrl.u32 %v3002, 7
      %v3004 = vsub.s32 0, %v3003
      %v3005 = vrot.slane %v3000, %v3004
      %v3006 = vlaneseq
      %v3007 = vshrl.u32 %v3006, 7
      %v3008 = vsub.s32 1, %v3007
      %v3009 = vrot.slane %v3000, %v3008
      %v3010 = vlaneseq
      %v3011 = vshrl.u32 %v3010, 7
      %v3012 = vsub.s32 2, %v3011
      %v3013 = vrot.slane %v3000, %v3012
      %v3014 = vlaneseq
      %v3015 = vshrl.u32 %v3014, 7
      %v3016 = vsub.s32 3, %v3015
      %v3017 = vrot.slane %v3000, %v3016
      %v3022 = vmul.f32 %v2998, %v3005
      %v3023 = vmul.f32 %v2996, %v3009
      %v3024 = vmul.f32 %v2994, %v3013
      %v3025 = vmul.f32 %v2992, %v3017
      %v3026 = vmul.f32 %v2999, %v3005
      %v3027 = vmul.f32 %v2997, %v3009
      %v3028 = vmul.f32 %v2995, %v3013
      %v3029 = vmul.f32 %v2993, %v3017
      %3030 = vst [vmem:[#allocation2 + $0x2c0] sm:$0xff] %v3022
      %3031 = vst [vmem:[#allocation2 + $0x2c8] sm:$0xff] %v3023
      %3032 = vst [vmem:[#allocation2 + $0x2d0] sm:$0xff] %v3024
      %3033 = vst [vmem:[#allocation2 + $0x2d8] sm:$0xff] %v3025
      %3034 = vst [vmem:[#allocation2 + $0x2e0] sm:$0xff] %v3026
      %3035 = vst [vmem:[#allocation2 + $0x2e8] sm:$0xff] %v3027
      %3036 = vst [vmem:[#allocation2 + $0x2f0] sm:$0xff] %v3028
      %3037 = vst [vmem:[#allocation2 + $0x2f8] sm:$0xff] %v3029
      %3038 = vrot.lane.b32.xlu0 %v2286, 1
      %v3039 = vpop.permute.xlu0 %3038
      %3040 = vrot.lane.b32.xlu0 %v2290, 1
      %v3041 = vpop.permute.xlu0 %3040
      %3042 = vrot.lane.b32.xlu0 %v2287, 1
      %v3043 = vpop.permute.xlu0 %3042
      %3044 = vrot.lane.b32.xlu0 %v2291, 1
      %v3045 = vpop.permute.xlu0 %3044
      %3046 = vrot.lane.b32.xlu0 %v2288, 1
      %v3047 = vpop.permute.xlu0 %3046
      %3048 = vrot.lane.b32.xlu0 %v2292, 1
      %v3049 = vpop.permute.xlu0 %3048
      %3050 = vrot.lane.b32.xlu0 %v2289, 1
      %v3051 = vpop.permute.xlu0 %3050
      %3052 = vrot.lane.b32.xlu0 %v2293, 1
      %v3053 = vpop.permute.xlu0 %3052
      %v3054 = vsel %vm1185, %v3047, %v3051
      %v3055 = vsel %vm1185, %v3049, %v3053
      %v3056 = vsel %vm1185, %v3043, %v3047
      %v3057 = vsel %vm1185, %v3045, %v3049
      %v3058 = vsel %vm1185, %v3039, %v3043
      %v3059 = vsel %vm1185, %v3041, %v3045
      %v3060 = vsel %vm1185, %v3051, %v3039
      %v3061 = vsel %vm1185, %v3053, %v3041
      %v3062 = vld [vmem:[%s1190] ss:$8 sm:$0xf]
      %v3064 = vlaneseq
      %v3065 = vshrl.u32 %v3064, 7
      %v3066 = vsub.s32 0, %v3065
      %v3067 = vrot.slane %v3062, %v3066
      %v3068 = vlaneseq
      %v3069 = vshrl.u32 %v3068, 7
      %v3070 = vsub.s32 1, %v3069
      %v3071 = vrot.slane %v3062, %v3070
      %v3072 = vlaneseq
      %v3073 = vshrl.u32 %v3072, 7
      %v3074 = vsub.s32 2, %v3073
      %v3075 = vrot.slane %v3062, %v3074
      %v3076 = vlaneseq
      %v3077 = vshrl.u32 %v3076, 7
      %v3078 = vsub.s32 3, %v3077
      %v3079 = vrot.slane %v3062, %v3078
      %v3084 = vmul.f32 %v3060, %v3067
      %v3085 = vmul.f32 %v3058, %v3071
      %v3086 = vmul.f32 %v3056, %v3075
      %v3087 = vmul.f32 %v3054, %v3079
      %v3088 = vmul.f32 %v3061, %v3067
      %v3089 = vmul.f32 %v3059, %v3071
      %v3090 = vmul.f32 %v3057, %v3075
      %v3091 = vmul.f32 %v3055, %v3079
      %3092 = vst [vmem:[#allocation2 + $0x300] sm:$0xff] %v3084
      %3093 = vst [vmem:[#allocation2 + $0x308] sm:$0xff] %v3085
      %3094 = vst [vmem:[#allocation2 + $0x310] sm:$0xff] %v3086
      %3095 = vst [vmem:[#allocation2 + $0x318] sm:$0xff] %v3087
      %3096 = vst [vmem:[#allocation2 + $0x320] sm:$0xff] %v3088
      %3097 = vst [vmem:[#allocation2 + $0x328] sm:$0xff] %v3089
      %3098 = vst [vmem:[#allocation2 + $0x330] sm:$0xff] %v3090
      %3099 = vst [vmem:[#allocation2 + $0x338] sm:$0xff] %v3091
      %3100 = vst [vmem:[#allocation2 + $0x340] sm:$0xff] %v2286
      %3101 = vst [vmem:[#allocation2 + $0x348] sm:$0xff] %v2287
      %3102 = vst [vmem:[#allocation2 + $0x350] sm:$0xff] %v2288
      %3103 = vst [vmem:[#allocation2 + $0x358] sm:$0xff] %v2289
      %3104 = vst [vmem:[#allocation2 + $0x360] sm:$0xff] %v2290
      %3105 = vst [vmem:[#allocation2 + $0x368] sm:$0xff] %v2291
      %3106 = vst [vmem:[#allocation2 + $0x370] sm:$0xff] %v2292
      %3107 = vst [vmem:[#allocation2 + $0x378] sm:$0xff] %v2293
      %3108 = vrot.lane.b32.xlu0 %v2286, 127
      %v3109 = vpop.permute.xlu0 %3108
      %3110 = vrot.lane.b32.xlu0 %v2290, 127
      %v3111 = vpop.permute.xlu0 %3110
      %3112 = vrot.lane.b32.xlu0 %v2287, 127
      %v3113 = vpop.permute.xlu0 %3112
      %3114 = vrot.lane.b32.xlu0 %v2291, 127
      %v3115 = vpop.permute.xlu0 %3114
      %3116 = vrot.lane.b32.xlu0 %v2288, 127
      %v3117 = vpop.permute.xlu0 %3116
      %3118 = vrot.lane.b32.xlu0 %v2292, 127
      %v3119 = vpop.permute.xlu0 %3118
      %3120 = vrot.lane.b32.xlu0 %v2289, 127
      %v3121 = vpop.permute.xlu0 %3120
      %3122 = vrot.lane.b32.xlu0 %v2293, 127
      %v3123 = vpop.permute.xlu0 %3122
      %v3124 = vsel %vm1233, %v3117, %v3121
      %v3125 = vsel %vm1233, %v3119, %v3123
      %v3126 = vsel %vm1233, %v3113, %v3117
      %v3127 = vsel %vm1233, %v3115, %v3119
      %v3128 = vsel %vm1233, %v3109, %v3113
      %v3129 = vsel %vm1233, %v3111, %v3115
      %v3130 = vsel %vm1233, %v3121, %v3109
      %v3131 = vsel %vm1233, %v3123, %v3111
      %v3132 = vld [vmem:[%s1238] ss:$8 sm:$0xf]
      %v3134 = vlaneseq
      %v3135 = vshrl.u32 %v3134, 7
      %v3136 = vsub.s32 0, %v3135
      %v3137 = vrot.slane %v3132, %v3136
      %v3138 = vlaneseq
      %v3139 = vshrl.u32 %v3138, 7
      %v3140 = vsub.s32 1, %v3139
      %v3141 = vrot.slane %v3132, %v3140
      %v3142 = vlaneseq
      %v3143 = vshrl.u32 %v3142, 7
      %v3144 = vsub.s32 2, %v3143
      %v3145 = vrot.slane %v3132, %v3144
      %v3146 = vlaneseq
      %v3147 = vshrl.u32 %v3146, 7
      %v3148 = vsub.s32 3, %v3147
      %v3149 = vrot.slane %v3132, %v3148
      %v3154 = vmul.f32 %v3128, %v3137
      %v3155 = vmul.f32 %v3126, %v3141
      %v3156 = vmul.f32 %v3124, %v3145
      %v3157 = vmul.f32 %v3130, %v3149
      %v3158 = vmul.f32 %v3129, %v3137
      %v3159 = vmul.f32 %v3127, %v3141
      %v3160 = vmul.f32 %v3125, %v3145
      %v3161 = vmul.f32 %v3131, %v3149
      %3162 = vst [vmem:[#allocation2 + $0x380] sm:$0xff] %v3154
      %3163 = vst [vmem:[#allocation2 + $0x388] sm:$0xff] %v3155
      %3164 = vst [vmem:[#allocation2 + $0x390] sm:$0xff] %v3156
      %3165 = vst [vmem:[#allocation2 + $0x398] sm:$0xff] %v3157
      %3166 = vst [vmem:[#allocation2 + $0x3a0] sm:$0xff] %v3158
      %3167 = vst [vmem:[#allocation2 + $0x3a8] sm:$0xff] %v3159
      %3168 = vst [vmem:[#allocation2 + $0x3b0] sm:$0xff] %v3160
      %3169 = vst [vmem:[#allocation2 + $0x3b8] sm:$0xff] %v3161
      %3170 = vrot.lane.b32.xlu0 %v2286, 121
      %v3171 = vpop.permute.xlu0 %3170
      %3172 = vrot.lane.b32.xlu0 %v2290, 121
      %v3173 = vpop.permute.xlu0 %3172
      %3174 = vrot.lane.b32.xlu0 %v2287, 121
      %v3175 = vpop.permute.xlu0 %3174
      %3176 = vrot.lane.b32.xlu0 %v2291, 121
      %v3177 = vpop.permute.xlu0 %3176
      %3178 = vrot.lane.b32.xlu0 %v2288, 121
      %v3179 = vpop.permute.xlu0 %3178
      %3180 = vrot.lane.b32.xlu0 %v2292, 121
      %v3181 = vpop.permute.xlu0 %3180
      %3182 = vrot.lane.b32.xlu0 %v2289, 121
      %v3183 = vpop.permute.xlu0 %3182
      %3184 = vrot.lane.b32.xlu0 %v2293, 121
      %v3185 = vpop.permute.xlu0 %3184
      %v3186 = vsel %vm1277, %v3179, %v3183
      %v3187 = vsel %vm1277, %v3181, %v3185
      %v3188 = vsel %vm1277, %v3175, %v3179
      %v3189 = vsel %vm1277, %v3177, %v3181
      %v3190 = vsel %vm1277, %v3171, %v3175
      %v3191 = vsel %vm1277, %v3173, %v3177
      %v3192 = vsel %vm1277, %v3183, %v3171
      %v3193 = vsel %vm1277, %v3185, %v3173
      %v3194 = vld [vmem:[%s1282] ss:$8 sm:$0xf]
      %v3196 = vlaneseq
      %v3197 = vshrl.u32 %v3196, 7
      %v3198 = vsub.s32 0, %v3197
      %v3199 = vrot.slane %v3194, %v3198
      %v3200 = vlaneseq
      %v3201 = vshrl.u32 %v3200, 7
      %v3202 = vsub.s32 1, %v3201
      %v3203 = vrot.slane %v3194, %v3202
      %v3204 = vlaneseq
      %v3205 = vshrl.u32 %v3204, 7
      %v3206 = vsub.s32 2, %v3205
      %v3207 = vrot.slane %v3194, %v3206
      %v3208 = vlaneseq
      %v3209 = vshrl.u32 %v3208, 7
      %v3210 = vsub.s32 3, %v3209
      %v3211 = vrot.slane %v3194, %v3210
      %v3216 = vmul.f32 %v3190, %v3199
      %v3217 = vmul.f32 %v3188, %v3203
      %v3218 = vmul.f32 %v3186, %v3207
      %v3219 = vmul.f32 %v3192, %v3211
      %v3220 = vmul.f32 %v3191, %v3199
      %v3221 = vmul.f32 %v3189, %v3203
      %v3222 = vmul.f32 %v3187, %v3207
      %v3223 = vmul.f32 %v3193, %v3211
      %3224 = vst [vmem:[#allocation2 + $0x3c0] sm:$0xff] %v3216
      %3225 = vst [vmem:[#allocation2 + $0x3c8] sm:$0xff] %v3217
      %3226 = vst [vmem:[#allocation2 + $0x3d0] sm:$0xff] %v3218
      %3227 = vst [vmem:[#allocation2 + $0x3d8] sm:$0xff] %v3219
      %3228 = vst [vmem:[#allocation2 + $0x3e0] sm:$0xff] %v3220
      %3229 = vst [vmem:[#allocation2 + $0x3e8] sm:$0xff] %v3221
      %3230 = vst [vmem:[#allocation2 + $0x3f0] sm:$0xff] %v3222
      %3231 = vst [vmem:[#allocation2 + $0x3f8] sm:$0xff] %v3223
      %3232 = vrot.lane.b32.xlu0 %v2286, 120
      %v3233 = vpop.permute.xlu0 %3232
      %3234 = vrot.lane.b32.xlu0 %v2290, 120
      %v3235 = vpop.permute.xlu0 %3234
      %3236 = vrot.lane.b32.xlu0 %v2287, 120
      %v3237 = vpop.permute.xlu0 %3236
      %3238 = vrot.lane.b32.xlu0 %v2291, 120
      %v3239 = vpop.permute.xlu0 %3238
      %3240 = vrot.lane.b32.xlu0 %v2288, 120
      %v3241 = vpop.permute.xlu0 %3240
      %3242 = vrot.lane.b32.xlu0 %v2292, 120
      %v3243 = vpop.permute.xlu0 %3242
      %3244 = vrot.lane.b32.xlu0 %v2289, 120
      %v3245 = vpop.permute.xlu0 %3244
      %3246 = vrot.lane.b32.xlu0 %v2293, 120
      %v3247 = vpop.permute.xlu0 %3246
      %v3248 = vsel %vm1321, %v3241, %v3245
      %v3249 = vsel %vm1321, %v3243, %v3247
      %v3250 = vsel %vm1321, %v3237, %v3241
      %v3251 = vsel %vm1321, %v3239, %v3243
      %v3252 = vsel %vm1321, %v3233, %v3237
      %v3253 = vsel %vm1321, %v3235, %v3239
      %v3254 = vsel %vm1321, %v3245, %v3233
      %v3255 = vsel %vm1321, %v3247, %v3235
      %v3256 = vld [vmem:[%s1326] ss:$8 sm:$0xf]
      %v3258 = vlaneseq
      %v3259 = vshrl.u32 %v3258, 7
      %v3260 = vsub.s32 0, %v3259
      %v3261 = vrot.slane %v3256, %v3260
      %v3262 = vlaneseq
      %v3263 = vshrl.u32 %v3262, 7
      %v3264 = vsub.s32 1, %v3263
      %v3265 = vrot.slane %v3256, %v3264
      %v3266 = vlaneseq
      %v3267 = vshrl.u32 %v3266, 7
      %v3268 = vsub.s32 2, %v3267
      %v3269 = vrot.slane %v3256, %v3268
      %v3270 = vlaneseq
      %v3271 = vshrl.u32 %v3270, 7
      %v3272 = vsub.s32 3, %v3271
      %v3273 = vrot.slane %v3256, %v3272
      %v3278 = vmul.f32 %v3252, %v3261
      %v3279 = vmul.f32 %v3250, %v3265
      %v3280 = vmul.f32 %v3248, %v3269
      %v3281 = vmul.f32 %v3254, %v3273
      %v3282 = vmul.f32 %v3253, %v3261
      %v3283 = vmul.f32 %v3251, %v3265
      %v3284 = vmul.f32 %v3249, %v3269
      %v3285 = vmul.f32 %v3255, %v3273
      %3286 = vst [vmem:[#allocation2 + $0x400] sm:$0xff] %v3278
      %3287 = vst [vmem:[#allocation2 + $0x408] sm:$0xff] %v3279
      %3288 = vst [vmem:[#allocation2 + $0x410] sm:$0xff] %v3280
      %3289 = vst [vmem:[#allocation2 + $0x418] sm:$0xff] %v3281
      %3290 = vst [vmem:[#allocation2 + $0x420] sm:$0xff] %v3282
      %3291 = vst [vmem:[#allocation2 + $0x428] sm:$0xff] %v3283
      %3292 = vst [vmem:[#allocation2 + $0x430] sm:$0xff] %v3284
      %3293 = vst [vmem:[#allocation2 + $0x438] sm:$0xff] %v3285
      %3294 = vrot.lane.b32.xlu0 %v2286, 119
      %v3295 = vpop.permute.xlu0 %3294
      %3296 = vrot.lane.b32.xlu0 %v2290, 119
      %v3297 = vpop.permute.xlu0 %3296
      %3298 = vrot.lane.b32.xlu0 %v2287, 119
      %v3299 = vpop.permute.xlu0 %3298
      %3300 = vrot.lane.b32.xlu0 %v2291, 119
      %v3301 = vpop.permute.xlu0 %3300
      %3302 = vrot.lane.b32.xlu0 %v2288, 119
      %v3303 = vpop.permute.xlu0 %3302
      %3304 = vrot.lane.b32.xlu0 %v2292, 119
      %v3305 = vpop.permute.xlu0 %3304
      %3306 = vrot.lane.b32.xlu0 %v2289, 119
      %v3307 = vpop.permute.xlu0 %3306
      %3308 = vrot.lane.b32.xlu0 %v2293, 119
      %v3309 = vpop.permute.xlu0 %3308
      %v3310 = vsel %vm1365, %v3303, %v3307
      %v3311 = vsel %vm1365, %v3305, %v3309
      %v3312 = vsel %vm1365, %v3299, %v3303
      %v3313 = vsel %vm1365, %v3301, %v3305
      %v3314 = vsel %vm1365, %v3295, %v3299
      %v3315 = vsel %vm1365, %v3297, %v3301
      %v3316 = vsel %vm1365, %v3307, %v3295
      %v3317 = vsel %vm1365, %v3309, %v3297
      %v3318 = vld [vmem:[%s1370] ss:$8 sm:$0xf]
      %v3320 = vlaneseq
      %v3321 = vshrl.u32 %v3320, 7
      %v3322 = vsub.s32 0, %v3321
      %v3323 = vrot.slane %v3318, %v3322
      %v3324 = vlaneseq
      %v3325 = vshrl.u32 %v3324, 7
      %v3326 = vsub.s32 1, %v3325
      %v3327 = vrot.slane %v3318, %v3326
      %v3328 = vlaneseq
      %v3329 = vshrl.u32 %v3328, 7
      %v3330 = vsub.s32 2, %v3329
      %v3331 = vrot.slane %v3318, %v3330
      %v3332 = vlaneseq
      %v3333 = vshrl.u32 %v3332, 7
      %v3334 = vsub.s32 3, %v3333
      %v3335 = vrot.slane %v3318, %v3334
      %v3340 = vmul.f32 %v3314, %v3323
      %v3341 = vmul.f32 %v3312, %v3327
      %v3342 = vmul.f32 %v3310, %v3331
      %v3343 = vmul.f32 %v3316, %v3335
      %v3344 = vmul.f32 %v3315, %v3323
      %v3345 = vmul.f32 %v3313, %v3327
      %v3346 = vmul.f32 %v3311, %v3331
      %v3347 = vmul.f32 %v3317, %v3335
      %3348 = vst [vmem:[#allocation2 + $0x440] sm:$0xff] %v3340
      %3349 = vst [vmem:[#allocation2 + $0x448] sm:$0xff] %v3341
      %3350 = vst [vmem:[#allocation2 + $0x450] sm:$0xff] %v3342
      %3351 = vst [vmem:[#allocation2 + $0x458] sm:$0xff] %v3343
      %3352 = vst [vmem:[#allocation2 + $0x460] sm:$0xff] %v3344
      %3353 = vst [vmem:[#allocation2 + $0x468] sm:$0xff] %v3345
      %3354 = vst [vmem:[#allocation2 + $0x470] sm:$0xff] %v3346
      %3355 = vst [vmem:[#allocation2 + $0x478] sm:$0xff] %v3347
      %v3356 = vld [vmem:[%s1401] ss:$8 sm:$0xf]
      %v3358 = vlaneseq
      %v3359 = vshrl.u32 %v3358, 7
      %v3360 = vsub.s32 0, %v3359
      %v3361 = vrot.slane %v3356, %v3360
      %v3362 = vlaneseq
      %v3363 = vshrl.u32 %v3362, 7
      %v3364 = vsub.s32 1, %v3363
      %v3365 = vrot.slane %v3356, %v3364
      %v3366 = vlaneseq
      %v3367 = vshrl.u32 %v3366, 7
      %v3368 = vsub.s32 2, %v3367
      %v3369 = vrot.slane %v3356, %v3368
      %v3370 = vlaneseq
      %v3371 = vshrl.u32 %v3370, 7
      %v3372 = vsub.s32 3, %v3371
      %v3373 = vrot.slane %v3356, %v3372
      %v3378 = vmul.f32 %v2314, %v3361
      %v3379 = vmul.f32 %v2312, %v3365
      %v3380 = vmul.f32 %v2310, %v3369
      %v3381 = vmul.f32 %v2316, %v3373
      %v3382 = vmul.f32 %v2315, %v3361
      %v3383 = vmul.f32 %v2313, %v3365
      %v3384 = vmul.f32 %v2311, %v3369
      %v3385 = vmul.f32 %v2317, %v3373
      %3386 = vst [vmem:[#allocation2 + $0x480] sm:$0xff] %v3378
      %3387 = vst [vmem:[#allocation2 + $0x488] sm:$0xff] %v3379
      %3388 = vst [vmem:[#allocation2 + $0x490] sm:$0xff] %v3380
      %3389 = vst [vmem:[#allocation2 + $0x498] sm:$0xff] %v3381
      %3390 = vst [vmem:[#allocation2 + $0x4a0] sm:$0xff] %v3382
      %3391 = vst [vmem:[#allocation2 + $0x4a8] sm:$0xff] %v3383
      %3392 = vst [vmem:[#allocation2 + $0x4b0] sm:$0xff] %v3384
      %3393 = vst [vmem:[#allocation2 + $0x4b8] sm:$0xff] %v3385
      %v3394 = vld [vmem:[%s1432] ss:$8 sm:$0xf]
      %v3396 = vlaneseq
      %v3397 = vshrl.u32 %v3396, 7
      %v3398 = vsub.s32 0, %v3397
      %v3399 = vrot.slane %v3394, %v3398
      %v3400 = vlaneseq
      %v3401 = vshrl.u32 %v3400, 7
      %v3402 = vsub.s32 1, %v3401
      %v3403 = vrot.slane %v3394, %v3402
      %v3404 = vlaneseq
      %v3405 = vshrl.u32 %v3404, 7
      %v3406 = vsub.s32 2, %v3405
      %v3407 = vrot.slane %v3394, %v3406
      %v3408 = vlaneseq
      %v3409 = vshrl.u32 %v3408, 7
      %v3410 = vsub.s32 3, %v3409
      %v3411 = vrot.slane %v3394, %v3410
      %v3416 = vmul.f32 %v2376, %v3399
      %v3417 = vmul.f32 %v2374, %v3403
      %v3418 = vmul.f32 %v2372, %v3407
      %v3419 = vmul.f32 %v2378, %v3411
      %v3420 = vmul.f32 %v2377, %v3399
      %v3421 = vmul.f32 %v2375, %v3403
      %v3422 = vmul.f32 %v2373, %v3407
      %v3423 = vmul.f32 %v2379, %v3411
      %3424 = vst [vmem:[#allocation2 + $0x4c0] sm:$0xff] %v3416
      %3425 = vst [vmem:[#allocation2 + $0x4c8] sm:$0xff] %v3417
      %3426 = vst [vmem:[#allocation2 + $0x4d0] sm:$0xff] %v3418
      %3427 = vst [vmem:[#allocation2 + $0x4d8] sm:$0xff] %v3419
      %3428 = vst [vmem:[#allocation2 + $0x4e0] sm:$0xff] %v3420
      %3429 = vst [vmem:[#allocation2 + $0x4e8] sm:$0xff] %v3421
      %3430 = vst [vmem:[#allocation2 + $0x4f0] sm:$0xff] %v3422
      %3431 = vst [vmem:[#allocation2 + $0x4f8] sm:$0xff] %v3423
      %v3432 = vld [vmem:[%s1463] ss:$8 sm:$0xf]
      %v3434 = vlaneseq
      %v3435 = vshrl.u32 %v3434, 7
      %v3436 = vsub.s32 0, %v3435
      %v3437 = vrot.slane %v3432, %v3436
      %v3438 = vlaneseq
      %v3439 = vshrl.u32 %v3438, 7
      %v3440 = vsub.s32 1, %v3439
      %v3441 = vrot.slane %v3432, %v3440
      %v3442 = vlaneseq
      %v3443 = vshrl.u32 %v3442, 7
      %v3444 = vsub.s32 2, %v3443
      %v3445 = vrot.slane %v3432, %v3444
      %v3446 = vlaneseq
      %v3447 = vshrl.u32 %v3446, 7
      %v3448 = vsub.s32 3, %v3447
      %v3449 = vrot.slane %v3432, %v3448
      %v3454 = vmul.f32 %v2438, %v3437
      %v3455 = vmul.f32 %v2436, %v3441
      %v3456 = vmul.f32 %v2434, %v3445
      %v3457 = vmul.f32 %v2440, %v3449
      %v3458 = vmul.f32 %v2439, %v3437
      %v3459 = vmul.f32 %v2437, %v3441
      %v3460 = vmul.f32 %v2435, %v3445
      %v3461 = vmul.f32 %v2441, %v3449
      %3462 = vst [vmem:[#allocation2 + $0x500] sm:$0xff] %v3454
      %3463 = vst [vmem:[#allocation2 + $0x508] sm:$0xff] %v3455
      %3464 = vst [vmem:[#allocation2 + $0x510] sm:$0xff] %v3456
      %3465 = vst [vmem:[#allocation2 + $0x518] sm:$0xff] %v3457
      %3466 = vst [vmem:[#allocation2 + $0x520] sm:$0xff] %v3458
      %3467 = vst [vmem:[#allocation2 + $0x528] sm:$0xff] %v3459
      %3468 = vst [vmem:[#allocation2 + $0x530] sm:$0xff] %v3460
      %3469 = vst [vmem:[#allocation2 + $0x538] sm:$0xff] %v3461
      %v3470 = vld [vmem:[%s1494] ss:$8 sm:$0xf]
      %v3472 = vlaneseq
      %v3473 = vshrl.u32 %v3472, 7
      %v3474 = vsub.s32 0, %v3473
      %v3475 = vrot.slane %v3470, %v3474
      %v3476 = vlaneseq
      %v3477 = vshrl.u32 %v3476, 7
      %v3478 = vsub.s32 1, %v3477
      %v3479 = vrot.slane %v3470, %v3478
      %v3480 = vlaneseq
      %v3481 = vshrl.u32 %v3480, 7
      %v3482 = vsub.s32 2, %v3481
      %v3483 = vrot.slane %v3470, %v3482
      %v3484 = vlaneseq
      %v3485 = vshrl.u32 %v3484, 7
      %v3486 = vsub.s32 3, %v3485
      %v3487 = vrot.slane %v3470, %v3486
      %v3492 = vmul.f32 %v2500, %v3475
      %v3493 = vmul.f32 %v2498, %v3479
      %v3494 = vmul.f32 %v2496, %v3483
      %v3495 = vmul.f32 %v2502, %v3487
      %v3496 = vmul.f32 %v2501, %v3475
      %v3497 = vmul.f32 %v2499, %v3479
      %v3498 = vmul.f32 %v2497, %v3483
      %v3499 = vmul.f32 %v2503, %v3487
      %3500 = vst [vmem:[#allocation2 + $0x540] sm:$0xff] %v3492
      %3501 = vst [vmem:[#allocation2 + $0x548] sm:$0xff] %v3493
      %3502 = vst [vmem:[#allocation2 + $0x550] sm:$0xff] %v3494
      %3503 = vst [vmem:[#allocation2 + $0x558] sm:$0xff] %v3495
      %3504 = vst [vmem:[#allocation2 + $0x560] sm:$0xff] %v3496
      %3505 = vst [vmem:[#allocation2 + $0x568] sm:$0xff] %v3497
      %3506 = vst [vmem:[#allocation2 + $0x570] sm:$0xff] %v3498
      %3507 = vst [vmem:[#allocation2 + $0x578] sm:$0xff] %v3499
      %v3508 = vld [vmem:[%s1525] ss:$8 sm:$0xf]
      %v3510 = vlaneseq
      %v3511 = vshrl.u32 %v3510, 7
      %v3512 = vsub.s32 0, %v3511
      %v3513 = vrot.slane %v3508, %v3512
      %v3514 = vlaneseq
      %v3515 = vshrl.u32 %v3514, 7
      %v3516 = vsub.s32 1, %v3515
      %v3517 = vrot.slane %v3508, %v3516
      %v3518 = vlaneseq
      %v3519 = vshrl.u32 %v3518, 7
      %v3520 = vsub.s32 2, %v3519
      %v3521 = vrot.slane %v3508, %v3520
      %v3522 = vlaneseq
      %v3523 = vshrl.u32 %v3522, 7
      %v3524 = vsub.s32 3, %v3523
      %v3525 = vrot.slane %v3508, %v3524
      %v3530 = vmul.f32 %v2562, %v3513
      %v3531 = vmul.f32 %v2560, %v3517
      %v3532 = vmul.f32 %v2558, %v3521
      %v3533 = vmul.f32 %v2564, %v3525
      %v3534 = vmul.f32 %v2563, %v3513
      %v3535 = vmul.f32 %v2561, %v3517
      %v3536 = vmul.f32 %v2559, %v3521
      %v3537 = vmul.f32 %v2565, %v3525
      %3538 = vst [vmem:[#allocation2 + $0x580] sm:$0xff] %v3530
      %3539 = vst [vmem:[#allocation2 + $0x588] sm:$0xff] %v3531
      %3540 = vst [vmem:[#allocation2 + $0x590] sm:$0xff] %v3532
      %3541 = vst [vmem:[#allocation2 + $0x598] sm:$0xff] %v3533
      %3542 = vst [vmem:[#allocation2 + $0x5a0] sm:$0xff] %v3534
      %3543 = vst [vmem:[#allocation2 + $0x5a8] sm:$0xff] %v3535
      %3544 = vst [vmem:[#allocation2 + $0x5b0] sm:$0xff] %v3536
      %3545 = vst [vmem:[#allocation2 + $0x5b8] sm:$0xff] %v3537
      %v3546 = vld [vmem:[%s1556] ss:$8 sm:$0xf]
      %v3548 = vlaneseq
      %v3549 = vshrl.u32 %v3548, 7
      %v3550 = vsub.s32 0, %v3549
      %v3551 = vrot.slane %v3546, %v3550
      %v3552 = vlaneseq
      %v3553 = vshrl.u32 %v3552, 7
      %v3554 = vsub.s32 1, %v3553
      %v3555 = vrot.slane %v3546, %v3554
      %v3556 = vlaneseq
      %v3557 = vshrl.u32 %v3556, 7
      %v3558 = vsub.s32 2, %v3557
      %v3559 = vrot.slane %v3546, %v3558
      %v3560 = vlaneseq
      %v3561 = vshrl.u32 %v3560, 7
      %v3562 = vsub.s32 3, %v3561
      %v3563 = vrot.slane %v3546, %v3562
      %v3568 = vmul.f32 %v2624, %v3551
      %v3569 = vmul.f32 %v2622, %v3555
      %v3570 = vmul.f32 %v2620, %v3559
      %v3571 = vmul.f32 %v2626, %v3563
      %v3572 = vmul.f32 %v2625, %v3551
      %v3573 = vmul.f32 %v2623, %v3555
      %v3574 = vmul.f32 %v2621, %v3559
      %v3575 = vmul.f32 %v2627, %v3563
      %3576 = vst [vmem:[#allocation2 + $0x5c0] sm:$0xff] %v3568
      %3577 = vst [vmem:[#allocation2 + $0x5c8] sm:$0xff] %v3569
      %3578 = vst [vmem:[#allocation2 + $0x5d0] sm:$0xff] %v3570
      %3579 = vst [vmem:[#allocation2 + $0x5d8] sm:$0xff] %v3571
      %3580 = vst [vmem:[#allocation2 + $0x5e0] sm:$0xff] %v3572
      %3581 = vst [vmem:[#allocation2 + $0x5e8] sm:$0xff] %v3573
      %3582 = vst [vmem:[#allocation2 + $0x5f0] sm:$0xff] %v3574
      %3583 = vst [vmem:[#allocation2 + $0x5f8] sm:$0xff] %v3575
      %v3584 = vld [vmem:[%s1587] ss:$8 sm:$0xf]
      %v3586 = vlaneseq
      %v3587 = vshrl.u32 %v3586, 7
      %v3588 = vsub.s32 0, %v3587
      %v3589 = vrot.slane %v3584, %v3588
      %v3590 = vlaneseq
      %v3591 = vshrl.u32 %v3590, 7
      %v3592 = vsub.s32 1, %v3591
      %v3593 = vrot.slane %v3584, %v3592
      %v3594 = vlaneseq
      %v3595 = vshrl.u32 %v3594, 7
      %v3596 = vsub.s32 2, %v3595
      %v3597 = vrot.slane %v3584, %v3596
      %v3598 = vlaneseq
      %v3599 = vshrl.u32 %v3598, 7
      %v3600 = vsub.s32 3, %v3599
      %v3601 = vrot.slane %v3584, %v3600
      %v3606 = vmul.f32 %v2686, %v3589
      %v3607 = vmul.f32 %v2684, %v3593
      %v3608 = vmul.f32 %v2682, %v3597
      %v3609 = vmul.f32 %v2688, %v3601
      %v3610 = vmul.f32 %v2687, %v3589
      %v3611 = vmul.f32 %v2685, %v3593
      %v3612 = vmul.f32 %v2683, %v3597
      %v3613 = vmul.f32 %v2689, %v3601
      %3614 = vst [vmem:[#allocation2 + $0x600] sm:$0xff] %v3606
      %3615 = vst [vmem:[#allocation2 + $0x608] sm:$0xff] %v3607
      %3616 = vst [vmem:[#allocation2 + $0x610] sm:$0xff] %v3608
      %3617 = vst [vmem:[#allocation2 + $0x618] sm:$0xff] %v3609
      %3618 = vst [vmem:[#allocation2 + $0x620] sm:$0xff] %v3610
      %3619 = vst [vmem:[#allocation2 + $0x628] sm:$0xff] %v3611
      %3620 = vst [vmem:[#allocation2 + $0x630] sm:$0xff] %v3612
      %3621 = vst [vmem:[#allocation2 + $0x638] sm:$0xff] %v3613
      %v3622 = vld [vmem:[%s1618] ss:$8 sm:$0xf]
      %v3624 = vlaneseq
      %v3625 = vshrl.u32 %v3624, 7
      %v3626 = vsub.s32 0, %v3625
      %v3627 = vrot.slane %v3622, %v3626
      %v3628 = vlaneseq
      %v3629 = vshrl.u32 %v3628, 7
      %v3630 = vsub.s32 1, %v3629
      %v3631 = vrot.slane %v3622, %v3630
      %v3632 = vlaneseq
      %v3633 = vshrl.u32 %v3632, 7
      %v3634 = vsub.s32 2, %v3633
      %v3635 = vrot.slane %v3622, %v3634
      %v3636 = vlaneseq
      %v3637 = vshrl.u32 %v3636, 7
      %v3638 = vsub.s32 3, %v3637
      %v3639 = vrot.slane %v3622, %v3638
      %v3644 = vmul.f32 %v2748, %v3627
      %v3645 = vmul.f32 %v2746, %v3631
      %v3646 = vmul.f32 %v2744, %v3635
      %v3647 = vmul.f32 %v2750, %v3639
      %v3648 = vmul.f32 %v2749, %v3627
      %v3649 = vmul.f32 %v2747, %v3631
      %v3650 = vmul.f32 %v2745, %v3635
      %v3651 = vmul.f32 %v2751, %v3639
      %3652 = vst [vmem:[#allocation2 + $0x640] sm:$0xff] %v3644
      %3653 = vst [vmem:[#allocation2 + $0x648] sm:$0xff] %v3645
      %3654 = vst [vmem:[#allocation2 + $0x650] sm:$0xff] %v3646
      %3655 = vst [vmem:[#allocation2 + $0x658] sm:$0xff] %v3647
      %3656 = vst [vmem:[#allocation2 + $0x660] sm:$0xff] %v3648
      %3657 = vst [vmem:[#allocation2 + $0x668] sm:$0xff] %v3649
      %3658 = vst [vmem:[#allocation2 + $0x670] sm:$0xff] %v3650
      %3659 = vst [vmem:[#allocation2 + $0x678] sm:$0xff] %v3651
      %v3660 = vld [vmem:[%s1649] ss:$8 sm:$0xf]
      %v3662 = vlaneseq
      %v3663 = vshrl.u32 %v3662, 7
      %v3664 = vsub.s32 0, %v3663
      %v3665 = vrot.slane %v3660, %v3664
      %v3666 = vlaneseq
      %v3667 = vshrl.u32 %v3666, 7
      %v3668 = vsub.s32 1, %v3667
      %v3669 = vrot.slane %v3660, %v3668
      %v3670 = vlaneseq
      %v3671 = vshrl.u32 %v3670, 7
      %v3672 = vsub.s32 2, %v3671
      %v3673 = vrot.slane %v3660, %v3672
      %v3674 = vlaneseq
      %v3675 = vshrl.u32 %v3674, 7
      %v3676 = vsub.s32 3, %v3675
      %v3677 = vrot.slane %v3660, %v3676
      %v3682 = vmul.f32 %v2810, %v3665
      %v3683 = vmul.f32 %v2808, %v3669
      %v3684 = vmul.f32 %v2806, %v3673
      %v3685 = vmul.f32 %v2812, %v3677
      %v3686 = vmul.f32 %v2811, %v3665
      %v3687 = vmul.f32 %v2809, %v3669
      %v3688 = vmul.f32 %v2807, %v3673
      %v3689 = vmul.f32 %v2813, %v3677
      %3690 = vst [vmem:[#allocation2 + $0x680] sm:$0xff] %v3682
      %3691 = vst [vmem:[#allocation2 + $0x688] sm:$0xff] %v3683
      %3692 = vst [vmem:[#allocation2 + $0x690] sm:$0xff] %v3684
      %3693 = vst [vmem:[#allocation2 + $0x698] sm:$0xff] %v3685
      %3694 = vst [vmem:[#allocation2 + $0x6a0] sm:$0xff] %v3686
      %3695 = vst [vmem:[#allocation2 + $0x6a8] sm:$0xff] %v3687
      %3696 = vst [vmem:[#allocation2 + $0x6b0] sm:$0xff] %v3688
      %3697 = vst [vmem:[#allocation2 + $0x6b8] sm:$0xff] %v3689
      %v3698 = vld [vmem:[%s408] sm:$0xff]
      %v3699 = vld [vmem:[%s408 + $0x8] sm:$0xff]
      %v3700 = vld [vmem:[%s408 + $0x10] sm:$0xff]
      %v3701 = vld [vmem:[%s408 + $0x18] sm:$0xff]
      %3702 = vst [vmem:[#allocation2 + $0x6c0] sm:$0xff] %v3698
      %3703 = vst [vmem:[#allocation2 + $0x6c8] sm:$0xff] %v3699
      %3704 = vst [vmem:[#allocation2 + $0x6d0] sm:$0xff] %v3700
      %3705 = vst [vmem:[#allocation2 + $0x6d8] sm:$0xff] %v3701
      %v3706 = vld [vmem:[%s10] sm:$0xff]
      %v3707 = vld [vmem:[%s10 + $0x8] sm:$0xff]
      %v3708 = vld [vmem:[%s10 + $0x10] sm:$0xff]
      %v3709 = vld [vmem:[%s10 + $0x18] sm:$0xff]
      %v3710 = vld [vmem:[%s10 + $0x20] sm:$0xff]
      %v3711 = vld [vmem:[%s10 + $0x28] sm:$0xff]
      %v3712 = vld [vmem:[%s10 + $0x30] sm:$0xff]
      %v3713 = vld [vmem:[%s10 + $0x38] sm:$0xff]
      %v3714 = vld [vmem:[#allocation2] sm:$0xff]
      %v3715 = vld [vmem:[#allocation2 + $0x8] sm:$0xff]
      %v3716 = vld [vmem:[#allocation2 + $0x10] sm:$0xff]
      %v3717 = vld [vmem:[#allocation2 + $0x18] sm:$0xff]
      %v3718 = vld [vmem:[#allocation2 + $0x20] sm:$0xff]
      %v3719 = vld [vmem:[#allocation2 + $0x28] sm:$0xff]
      %v3720 = vld [vmem:[#allocation2 + $0x30] sm:$0xff]
      %v3721 = vld [vmem:[#allocation2 + $0x38] sm:$0xff]
      %v3722 = vld [vmem:[#allocation2 + $0x40] sm:$0xff]
      %v3723 = vld [vmem:[#allocation2 + $0x48] sm:$0xff]
      %v3724 = vld [vmem:[#allocation2 + $0x50] sm:$0xff]
      %v3725 = vld [vmem:[#allocation2 + $0x58] sm:$0xff]
      %v3726 = vld [vmem:[#allocation2 + $0x60] sm:$0xff]
      %v3727 = vld [vmem:[#allocation2 + $0x68] sm:$0xff]
      %v3728 = vld [vmem:[#allocation2 + $0x70] sm:$0xff]
      %v3729 = vld [vmem:[#allocation2 + $0x78] sm:$0xff]
      %v3730 = vld [vmem:[#allocation2 + $0x80] sm:$0xff]
      %v3731 = vld [vmem:[#allocation2 + $0x88] sm:$0xff]
      %v3732 = vld [vmem:[#allocation2 + $0x90] sm:$0xff]
      %v3733 = vld [vmem:[#allocation2 + $0x98] sm:$0xff]
      %v3734 = vld [vmem:[#allocation2 + $0xa0] sm:$0xff]
      %v3735 = vld [vmem:[#allocation2 + $0xa8] sm:$0xff]
      %v3736 = vld [vmem:[#allocation2 + $0xb0] sm:$0xff]
      %v3737 = vld [vmem:[#allocation2 + $0xb8] sm:$0xff]
      %v3738 = vld [vmem:[#allocation2 + $0xc0] sm:$0xff]
      %v3739 = vld [vmem:[#allocation2 + $0xc8] sm:$0xff]
      %v3740 = vld [vmem:[#allocation2 + $0xd0] sm:$0xff]
      %v3741 = vld [vmem:[#allocation2 + $0xd8] sm:$0xff]
      %v3742 = vld [vmem:[#allocation2 + $0xe0] sm:$0xff]
      %v3743 = vld [vmem:[#allocation2 + $0xe8] sm:$0xff]
      %v3744 = vld [vmem:[#allocation2 + $0xf0] sm:$0xff]
      %v3745 = vld [vmem:[#allocation2 + $0xf8] sm:$0xff]
      %v3746 = vld [vmem:[#allocation2 + $0x100] sm:$0xff]
      %v3747 = vld [vmem:[#allocation2 + $0x108] sm:$0xff]
      %v3748 = vld [vmem:[#allocation2 + $0x110] sm:$0xff]
      %v3749 = vld [vmem:[#allocation2 + $0x118] sm:$0xff]
      %v3750 = vld [vmem:[#allocation2 + $0x120] sm:$0xff]
      %v3751 = vld [vmem:[#allocation2 + $0x128] sm:$0xff]
      %v3752 = vld [vmem:[#allocation2 + $0x130] sm:$0xff]
      %v3753 = vld [vmem:[#allocation2 + $0x138] sm:$0xff]
      %v3754 = vld [vmem:[#allocation2 + $0x140] sm:$0xff]
      %v3755 = vld [vmem:[#allocation2 + $0x148] sm:$0xff]
      %v3756 = vld [vmem:[#allocation2 + $0x150] sm:$0xff]
      %v3757 = vld [vmem:[#allocation2 + $0x158] sm:$0xff]
      %v3758 = vld [vmem:[#allocation2 + $0x160] sm:$0xff]
      %v3759 = vld [vmem:[#allocation2 + $0x168] sm:$0xff]
      %v3760 = vld [vmem:[#allocation2 + $0x170] sm:$0xff]
      %v3761 = vld [vmem:[#allocation2 + $0x178] sm:$0xff]
      %v3762 = vld [vmem:[#allocation2 + $0x180] sm:$0xff]
      %v3763 = vld [vmem:[#allocation2 + $0x188] sm:$0xff]
      %v3764 = vld [vmem:[#allocation2 + $0x190] sm:$0xff]
      %v3765 = vld [vmem:[#allocation2 + $0x198] sm:$0xff]
      %v3766 = vld [vmem:[#allocation2 + $0x1a0] sm:$0xff]
      %v3767 = vld [vmem:[#allocation2 + $0x1a8] sm:$0xff]
      %v3768 = vld [vmem:[#allocation2 + $0x1b0] sm:$0xff]
      %v3769 = vld [vmem:[#allocation2 + $0x1b8] sm:$0xff]
      %v3770 = vld [vmem:[#allocation2 + $0x1c0] sm:$0xff]
      %v3771 = vld [vmem:[#allocation2 + $0x1c8] sm:$0xff]
      %v3772 = vld [vmem:[#allocation2 + $0x1d0] sm:$0xff]
      %v3773 = vld [vmem:[#allocation2 + $0x1d8] sm:$0xff]
      %v3774 = vld [vmem:[#allocation2 + $0x1e0] sm:$0xff]
      %v3775 = vld [vmem:[#allocation2 + $0x1e8] sm:$0xff]
      %v3776 = vld [vmem:[#allocation2 + $0x1f0] sm:$0xff]
      %v3777 = vld [vmem:[#allocation2 + $0x1f8] sm:$0xff]
      %v3778 = vld [vmem:[#allocation2 + $0x200] sm:$0xff]
      %v3779 = vld [vmem:[#allocation2 + $0x208] sm:$0xff]
      %v3780 = vld [vmem:[#allocation2 + $0x210] sm:$0xff]
      %v3781 = vld [vmem:[#allocation2 + $0x218] sm:$0xff]
      %v3782 = vld [vmem:[#allocation2 + $0x220] sm:$0xff]
      %v3783 = vld [vmem:[#allocation2 + $0x228] sm:$0xff]
      %v3784 = vld [vmem:[#allocation2 + $0x230] sm:$0xff]
      %v3785 = vld [vmem:[#allocation2 + $0x238] sm:$0xff]
      %v3786 = vld [vmem:[#allocation2 + $0x240] sm:$0xff]
      %v3787 = vld [vmem:[#allocation2 + $0x248] sm:$0xff]
      %v3788 = vld [vmem:[#allocation2 + $0x250] sm:$0xff]
      %v3789 = vld [vmem:[#allocation2 + $0x258] sm:$0xff]
      %v3790 = vld [vmem:[#allocation2 + $0x260] sm:$0xff]
      %v3791 = vld [vmem:[#allocation2 + $0x268] sm:$0xff]
      %v3792 = vld [vmem:[#allocation2 + $0x270] sm:$0xff]
      %v3793 = vld [vmem:[#allocation2 + $0x278] sm:$0xff]
      %v3794 = vld [vmem:[#allocation2 + $0x280] sm:$0xff]
      %v3795 = vld [vmem:[#allocation2 + $0x288] sm:$0xff]
      %v3796 = vld [vmem:[#allocation2 + $0x290] sm:$0xff]
      %v3797 = vld [vmem:[#allocation2 + $0x298] sm:$0xff]
      %v3798 = vld [vmem:[#allocation2 + $0x2a0] sm:$0xff]
      %v3799 = vld [vmem:[#allocation2 + $0x2a8] sm:$0xff]
      %v3800 = vld [vmem:[#allocation2 + $0x2b0] sm:$0xff]
      %v3801 = vld [vmem:[#allocation2 + $0x2b8] sm:$0xff]
      %v3802 = vld [vmem:[#allocation2 + $0x2c0] sm:$0xff]
      %v3803 = vld [vmem:[#allocation2 + $0x2c8] sm:$0xff]
      %v3804 = vld [vmem:[#allocation2 + $0x2d0] sm:$0xff]
      %v3805 = vld [vmem:[#allocation2 + $0x2d8] sm:$0xff]
      %v3806 = vld [vmem:[#allocation2 + $0x2e0] sm:$0xff]
      %v3807 = vld [vmem:[#allocation2 + $0x2e8] sm:$0xff]
      %v3808 = vld [vmem:[#allocation2 + $0x2f0] sm:$0xff]
      %v3809 = vld [vmem:[#allocation2 + $0x2f8] sm:$0xff]
      %v3810 = vld [vmem:[#allocation2 + $0x300] sm:$0xff]
      %v3811 = vld [vmem:[#allocation2 + $0x308] sm:$0xff]
      %v3812 = vld [vmem:[#allocation2 + $0x310] sm:$0xff]
      %v3813 = vld [vmem:[#allocation2 + $0x318] sm:$0xff]
      %v3814 = vld [vmem:[#allocation2 + $0x320] sm:$0xff]
      %v3815 = vld [vmem:[#allocation2 + $0x328] sm:$0xff]
      %v3816 = vld [vmem:[#allocation2 + $0x330] sm:$0xff]
      %v3817 = vld [vmem:[#allocation2 + $0x338] sm:$0xff]
      %v3818 = vld [vmem:[#allocation2 + $0x340] sm:$0xff]
      %v3819 = vld [vmem:[#allocation2 + $0x348] sm:$0xff]
      %v3820 = vld [vmem:[#allocation2 + $0x350] sm:$0xff]
      %v3821 = vld [vmem:[#allocation2 + $0x358] sm:$0xff]
      %v3822 = vld [vmem:[#allocation2 + $0x360] sm:$0xff]
      %v3823 = vld [vmem:[#allocation2 + $0x368] sm:$0xff]
      %v3824 = vld [vmem:[#allocation2 + $0x370] sm:$0xff]
      %v3825 = vld [vmem:[#allocation2 + $0x378] sm:$0xff]
      %v3826 = vld [vmem:[#allocation2 + $0x380] sm:$0xff]
      %v3827 = vld [vmem:[#allocation2 + $0x388] sm:$0xff]
      %v3828 = vld [vmem:[#allocation2 + $0x390] sm:$0xff]
      %v3829 = vld [vmem:[#allocation2 + $0x398] sm:$0xff]
      %v3830 = vld [vmem:[#allocation2 + $0x3a0] sm:$0xff]
      %v3831 = vld [vmem:[#allocation2 + $0x3a8] sm:$0xff]
      %v3832 = vld [vmem:[#allocation2 + $0x3b0] sm:$0xff]
      %v3833 = vld [vmem:[#allocation2 + $0x3b8] sm:$0xff]
      %v3834 = vld [vmem:[#allocation2 + $0x3c0] sm:$0xff]
      %v3835 = vld [vmem:[#allocation2 + $0x3c8] sm:$0xff]
      %v3836 = vld [vmem:[#allocation2 + $0x3d0] sm:$0xff]
      %v3837 = vld [vmem:[#allocation2 + $0x3d8] sm:$0xff]
      %v3838 = vld [vmem:[#allocation2 + $0x3e0] sm:$0xff]
      %v3839 = vld [vmem:[#allocation2 + $0x3e8] sm:$0xff]
      %v3840 = vld [vmem:[#allocation2 + $0x3f0] sm:$0xff]
      %v3841 = vld [vmem:[#allocation2 + $0x3f8] sm:$0xff]
      %v3842 = vld [vmem:[#allocation2 + $0x400] sm:$0xff]
      %v3843 = vld [vmem:[#allocation2 + $0x408] sm:$0xff]
      %v3844 = vld [vmem:[#allocation2 + $0x410] sm:$0xff]
      %v3845 = vld [vmem:[#allocation2 + $0x418] sm:$0xff]
      %v3846 = vld [vmem:[#allocation2 + $0x420] sm:$0xff]
      %v3847 = vld [vmem:[#allocation2 + $0x428] sm:$0xff]
      %v3848 = vld [vmem:[#allocation2 + $0x430] sm:$0xff]
      %v3849 = vld [vmem:[#allocation2 + $0x438] sm:$0xff]
      %v3850 = vld [vmem:[#allocation2 + $0x440] sm:$0xff]
      %v3851 = vld [vmem:[#allocation2 + $0x448] sm:$0xff]
      %v3852 = vld [vmem:[#allocation2 + $0x450] sm:$0xff]
      %v3853 = vld [vmem:[#allocation2 + $0x458] sm:$0xff]
      %v3854 = vld [vmem:[#allocation2 + $0x460] sm:$0xff]
      %v3855 = vld [vmem:[#allocation2 + $0x468] sm:$0xff]
      %v3856 = vld [vmem:[#allocation2 + $0x470] sm:$0xff]
      %v3857 = vld [vmem:[#allocation2 + $0x478] sm:$0xff]
      %v3858 = vld [vmem:[#allocation2 + $0x480] sm:$0xff]
      %v3859 = vld [vmem:[#allocation2 + $0x488] sm:$0xff]
      %v3860 = vld [vmem:[#allocation2 + $0x490] sm:$0xff]
      %v3861 = vld [vmem:[#allocation2 + $0x498] sm:$0xff]
      %v3862 = vld [vmem:[#allocation2 + $0x4a0] sm:$0xff]
      %v3863 = vld [vmem:[#allocation2 + $0x4a8] sm:$0xff]
      %v3864 = vld [vmem:[#allocation2 + $0x4b0] sm:$0xff]
      %v3865 = vld [vmem:[#allocation2 + $0x4b8] sm:$0xff]
      %v3866 = vld [vmem:[#allocation2 + $0x4c0] sm:$0xff]
      %v3867 = vld [vmem:[#allocation2 + $0x4c8] sm:$0xff]
      %v3868 = vld [vmem:[#allocation2 + $0x4d0] sm:$0xff]
      %v3869 = vld [vmem:[#allocation2 + $0x4d8] sm:$0xff]
      %v3870 = vld [vmem:[#allocation2 + $0x4e0] sm:$0xff]
      %v3871 = vld [vmem:[#allocation2 + $0x4e8] sm:$0xff]
      %v3872 = vld [vmem:[#allocation2 + $0x4f0] sm:$0xff]
      %v3873 = vld [vmem:[#allocation2 + $0x4f8] sm:$0xff]
      %v3874 = vld [vmem:[#allocation2 + $0x500] sm:$0xff]
      %v3875 = vld [vmem:[#allocation2 + $0x508] sm:$0xff]
      %v3876 = vld [vmem:[#allocation2 + $0x510] sm:$0xff]
      %v3877 = vld [vmem:[#allocation2 + $0x518] sm:$0xff]
      %v3878 = vld [vmem:[#allocation2 + $0x520] sm:$0xff]
      %v3879 = vld [vmem:[#allocation2 + $0x528] sm:$0xff]
      %v3880 = vld [vmem:[#allocation2 + $0x530] sm:$0xff]
      %v3881 = vld [vmem:[#allocation2 + $0x538] sm:$0xff]
      %v3882 = vld [vmem:[#allocation2 + $0x540] sm:$0xff]
      %v3883 = vld [vmem:[#allocation2 + $0x548] sm:$0xff]
      %v3884 = vld [vmem:[#allocation2 + $0x550] sm:$0xff]
      %v3885 = vld [vmem:[#allocation2 + $0x558] sm:$0xff]
      %v3886 = vld [vmem:[#allocation2 + $0x560] sm:$0xff]
      %v3887 = vld [vmem:[#allocation2 + $0x568] sm:$0xff]
      %v3888 = vld [vmem:[#allocation2 + $0x570] sm:$0xff]
      %v3889 = vld [vmem:[#allocation2 + $0x578] sm:$0xff]
      %v3890 = vld [vmem:[#allocation2 + $0x580] sm:$0xff]
      %v3891 = vld [vmem:[#allocation2 + $0x588] sm:$0xff]
      %v3892 = vld [vmem:[#allocation2 + $0x590] sm:$0xff]
      %v3893 = vld [vmem:[#allocation2 + $0x598] sm:$0xff]
      %v3894 = vld [vmem:[#allocation2 + $0x5a0] sm:$0xff]
      %v3895 = vld [vmem:[#allocation2 + $0x5a8] sm:$0xff]
      %v3896 = vld [vmem:[#allocation2 + $0x5b0] sm:$0xff]
      %v3897 = vld [vmem:[#allocation2 + $0x5b8] sm:$0xff]
      %v3898 = vld [vmem:[#allocation2 + $0x5c0] sm:$0xff]
      %v3899 = vld [vmem:[#allocation2 + $0x5c8] sm:$0xff]
      %v3900 = vld [vmem:[#allocation2 + $0x5d0] sm:$0xff]
      %v3901 = vld [vmem:[#allocation2 + $0x5d8] sm:$0xff]
      %v3902 = vld [vmem:[#allocation2 + $0x5e0] sm:$0xff]
      %v3903 = vld [vmem:[#allocation2 + $0x5e8] sm:$0xff]
      %v3904 = vld [vmem:[#allocation2 + $0x5f0] sm:$0xff]
      %v3905 = vld [vmem:[#allocation2 + $0x5f8] sm:$0xff]
      %v3906 = vld [vmem:[#allocation2 + $0x600] sm:$0xff]
      %v3907 = vld [vmem:[#allocation2 + $0x608] sm:$0xff]
      %v3908 = vld [vmem:[#allocation2 + $0x610] sm:$0xff]
      %v3909 = vld [vmem:[#allocation2 + $0x618] sm:$0xff]
      %v3910 = vld [vmem:[#allocation2 + $0x620] sm:$0xff]
      %v3911 = vld [vmem:[#allocation2 + $0x628] sm:$0xff]
      %v3912 = vld [vmem:[#allocation2 + $0x630] sm:$0xff]
      %v3913 = vld [vmem:[#allocation2 + $0x638] sm:$0xff]
      %v3914 = vld [vmem:[#allocation2 + $0x640] sm:$0xff]
      %v3915 = vld [vmem:[#allocation2 + $0x648] sm:$0xff]
      %v3916 = vld [vmem:[#allocation2 + $0x650] sm:$0xff]
      %v3917 = vld [vmem:[#allocation2 + $0x658] sm:$0xff]
      %v3918 = vld [vmem:[#allocation2 + $0x660] sm:$0xff]
      %v3919 = vld [vmem:[#allocation2 + $0x668] sm:$0xff]
      %v3920 = vld [vmem:[#allocation2 + $0x670] sm:$0xff]
      %v3921 = vld [vmem:[#allocation2 + $0x678] sm:$0xff]
      %v3922 = vld [vmem:[#allocation2 + $0x680] sm:$0xff]
      %v3923 = vld [vmem:[#allocation2 + $0x688] sm:$0xff]
      %v3924 = vld [vmem:[#allocation2 + $0x690] sm:$0xff]
      %v3925 = vld [vmem:[#allocation2 + $0x698] sm:$0xff]
      %v3926 = vld [vmem:[#allocation2 + $0x6a0] sm:$0xff]
      %v3927 = vld [vmem:[#allocation2 + $0x6a8] sm:$0xff]
      %v3928 = vld [vmem:[#allocation2 + $0x6b0] sm:$0xff]
      %v3929 = vld [vmem:[#allocation2 + $0x6b8] sm:$0xff]
      %v3930 = vld [vmem:[#allocation2 + $0x6c0] sm:$0xff]
      %v3931 = vld [vmem:[#allocation2 + $0x6c8] sm:$0xff]
      %v3932 = vld [vmem:[#allocation2 + $0x6d0] sm:$0xff]
      %v3933 = vld [vmem:[#allocation2 + $0x6d8] sm:$0xff]
      %v3934 = vld [vmem:[%s11] sm:$0xff]
      %v3935 = vld [vmem:[%s11 + $0x8] sm:$0xff]
      %3937 = vset.pattern.permute.xlu0 0
      %3938 = vperm.xlu0 %3937, %v3934
      %v3939 = vpop.permute.xlu0 %3938
      %3942 = vset.pattern.permute.xlu0 0
      %3943 = vperm.xlu0 %3942, %v3935
      %v3944 = vpop.permute.xlu0 %3943
      %vm3946 = vcmask 457728
      %v3948 = vsel %vm3946, %v3709, 0
      %v3951 = vsel %vm3946, %v3713, 0
      %3953 = vmatprep.subr.mxu0 %v3715
      %3954 = vmatpush1.msra.mxu0 %v3714
      %3955 = vmatprep.subr.mxu0 %v3719
      %3956 = vmatpush1.msra.mxu0 %v3718
      %3957 = vmatprep.subr.mxu0 %v3723
      %3958 = vmatpush1.msra.mxu0 %v3722
      %3959 = vmatprep.subr.mxu0 %v3727
      %3960 = vmatpush1.msra.mxu0 %v3726
      %3961 = vmatprep.subr.mxu0 %v3731
      %3962 = vmatpush1.msra.mxu0 %v3730
      %3963 = vmatprep.subr.mxu0 %v3735
      %3964 = vmatpush1.msra.mxu0 %v3734
      %3965 = vmatprep.subr.mxu0 %v3739
      %3966 = vmatpush1.msra.mxu0 %v3738
      %3967 = vmatprep.subr.mxu0 %v3743
      %3968 = vmatpush1.msra.mxu0 %v3742
      %3969 = vmatprep.subr.mxu0 %v3747
      %3970 = vmatpush1.msra.mxu0 %v3746
      %3971 = vmatprep.subr.mxu0 %v3751
      %3972 = vmatpush1.msra.mxu0 %v3750
      %3973 = vmatprep.subr.mxu0 %v3755
      %3974 = vmatpush1.msra.mxu0 %v3754
      %3975 = vmatprep.subr.mxu0 %v3759
      %3976 = vmatpush1.msra.mxu0 %v3758
      %3977 = vmatprep.subr.mxu0 %v3763
      %3978 = vmatpush1.msra.mxu0 %v3762
      %3979 = vmatprep.subr.mxu0 %v3767
      %3980 = vmatpush1.msra.mxu0 %v3766
      %3981 = vmatprep.subr.mxu0 %v3771
      %3982 = vmatpush1.msra.mxu0 %v3770
      %3983 = vmatprep.subr.mxu0 %v3775
      %3984 = vmatpush1.msra.mxu0 %v3774
      %3985 = vmatprep.subr.mxu0 %v3779
      %3986 = vmatpush1.msra.mxu0 %v3778
      %3987 = vmatprep.subr.mxu0 %v3783
      %3988 = vmatpush1.msra.mxu0 %v3782
      %3989 = vmatprep.subr.mxu0 %v3787
      %3990 = vmatpush1.msra.mxu0 %v3786
      %3991 = vmatprep.subr.mxu0 %v3791
      %3992 = vmatpush1.msra.mxu0 %v3790
      %3993 = vmatprep.subr.mxu0 %v3795
      %3994 = vmatpush1.msra.mxu0 %v3794
      %3995 = vmatprep.subr.mxu0 %v3799
      %3996 = vmatpush1.msra.mxu0 %v3798
      %3997 = vmatprep.subr.mxu0 %v3803
      %3998 = vmatpush1.msra.mxu0 %v3802
      %3999 = vmatprep.subr.mxu0 %v3807
      %4000 = vmatpush1.msra.mxu0 %v3806
      %4001 = vmatprep.subr.mxu0 %v3811
      %4002 = vmatpush1.msra.mxu0 %v3810
      %4003 = vmatprep.subr.mxu0 %v3815
      %4004 = vmatpush1.msra.mxu0 %v3814
      %4005 = vmatprep.subr.mxu0 %v3819
      %4006 = vmatpush1.msra.mxu0 %v3818
      %4007 = vmatprep.subr.mxu0 %v3823
      %4008 = vmatpush1.msra.mxu0 %v3822
      %4009 = vmatprep.subr.mxu0 %v3827
      %4010 = vmatpush1.msra.mxu0 %v3826
      %4011 = vmatprep.subr.mxu0 %v3831
      %4012 = vmatpush1.msra.mxu0 %v3830
      %4013 = vmatprep.subr.mxu0 %v3835
      %4014 = vmatpush1.msra.mxu0 %v3834
      %4015 = vmatprep.subr.mxu0 %v3839
      %4016 = vmatpush1.msra.mxu0 %v3838
      %4017 = vmatprep.mubr.f32.mxu0 %v3707
      %4018 = vmatmul.mubr.f32.gmra.mrb[0].mxu0 %v3706
      %v4019 = vpop.f32.mrb[0].mxu0
      %v4020 = vadd.f32 %v3939, %v4019
      %v4021 = vpop.f32.mrb[0].mxu0
      %v4022 = vadd.f32 %v3939, %v4021
      %4023 = vmatprep.mubr.f32.mxu0 %v3711
      %4024 = vmatmul.mubr.f32.gmra.mrb[0].mxu0 %v3710
      %v4025 = vpop.f32.mrb[0].mxu0
      %v4026 = vadd.f32 %v3944, %v4025
      %v4027 = vpop.f32.mrb[0].mxu0
      %v4028 = vadd.f32 %v3944, %v4027
      %4029 = vdwg.mxu0
      %4030 = vmatprep.subr.mxu0 %v3843
      %4031 = vmatpush1.msra.mxu0 %v3842
      %4032 = vmatprep.subr.mxu0 %v3847
      %4033 = vmatpush1.msra.mxu0 %v3846
      %4034 = vmatprep.subr.mxu0 %v3851
      %4035 = vmatpush1.msra.mxu0 %v3850
      %4036 = vmatprep.subr.mxu0 %v3855
      %4037 = vmatpush1.msra.mxu0 %v3854
      %4038 = vmatprep.subr.mxu0 %v3859
      %4039 = vmatpush1.msra.mxu0 %v3858
      %4040 = vmatprep.subr.mxu0 %v3863
      %4041 = vmatpush1.msra.mxu0 %v3862
      %4042 = vmatprep.subr.mxu0 %v3867
      %4043 = vmatpush1.msra.mxu0 %v3866
      %4044 = vmatprep.subr.mxu0 %v3871
      %4045 = vmatpush1.msra.mxu0 %v3870
      %4046 = vmatprep.subr.mxu0 %v3875
      %4047 = vmatpush1.msra.mxu0 %v3874
      %4048 = vmatprep.subr.mxu0 %v3879
      %4049 = vmatpush1.msra.mxu0 %v3878
      %4050 = vmatprep.subr.mxu0 %v3883
      %4051 = vmatpush1.msra.mxu0 %v3882
      %4052 = vmatprep.subr.mxu0 %v3887
      %4053 = vmatpush1.msra.mxu0 %v3886
      %4054 = vmatprep.subr.mxu0 %v3891
      %4055 = vmatpush1.msra.mxu0 %v3890
      %4056 = vmatprep.subr.mxu0 %v3895
      %4057 = vmatpush1.msra.mxu0 %v3894
      %4058 = vmatprep.subr.mxu0 %v3899
      %4059 = vmatpush1.msra.mxu0 %v3898
      %4060 = vmatprep.subr.mxu0 %v3903
      %4061 = vmatpush1.msra.mxu0 %v3902
      %4062 = vmatprep.subr.mxu0 %v3907
      %4063 = vmatpush1.msra.mxu0 %v3906
      %4064 = vmatprep.subr.mxu0 %v3911
      %4065 = vmatpush1.msra.mxu0 %v3910
      %4066 = vmatprep.subr.mxu0 %v3915
      %4067 = vmatpush1.msra.mxu0 %v3914
      %4068 = vmatprep.subr.mxu0 %v3919
      %4069 = vmatpush1.msra.mxu0 %v3918
      %4070 = vmatprep.subr.mxu0 %v3923
      %4071 = vmatpush1.msra.mxu0 %v3922
      %4072 = vmatprep.subr.mxu0 %v3927
      %4073 = vmatpush1.msra.mxu0 %v3926
      %4074 = vmatprep.subr.mxu0 %v3931
      %4075 = vmatpush1.msra.mxu0 %v3930
      %4076 = vmatprep.subr.mxu0 0.0
      %4077 = vmatpush1.msra.mxu0 0.0
      %4078 = vmatprep.subr.mxu0 0.0
      %4079 = vmatpush1.msra.mxu0 0.0
      %4080 = vmatprep.subr.mxu0 0.0
      %4081 = vmatpush1.msra.mxu0 0.0
      %4082 = vmatprep.subr.mxu0 0.0
      %4083 = vmatpush1.msra.mxu0 0.0
      %4084 = vmatprep.subr.mxu0 0.0
      %4085 = vmatpush1.msra.mxu0 0.0
      %4086 = vmatprep.subr.mxu0 0.0
      %4087 = vmatpush1.msra.mxu0 0.0
      %4088 = vmatprep.subr.mxu0 0.0
      %4089 = vmatpush1.msra.mxu0 0.0
      %4090 = vmatprep.subr.mxu0 0.0
      %4091 = vmatpush1.msra.mxu0 0.0
      %4092 = vmatprep.subr.mxu0 0.0
      %4093 = vmatpush1.msra.mxu0 0.0
      %4094 = vmatprep.mubr.f32.mxu0 %v3948
      %4095 = vmatmul.mubr.f32.gmra.mrb[0].mxu0 %v3708
      %v4096 = vpop.f32.mrb[0].mxu0
      %v4097 = vadd.f32 %v4020, %v4096
      %v4098 = vpop.f32.mrb[0].mxu0
      %v4099 = vadd.f32 %v4022, %v4098
      %4100 = vmatprep.mubr.f32.mxu0 %v3951
      %4101 = vmatmul.mubr.f32.gmra.mrb[0].mxu0 %v3712
      %v4102 = vpop.f32.mrb[0].mxu0
      %v4103 = vadd.f32 %v4026, %v4102
      %v4104 = vpop.f32.mrb[0].mxu0
      %v4105 = vadd.f32 %v4028, %v4104
      %4106 = vdwg.mxu0
      %4107 = vmatprep.subr.mxu0 %v3717
      %4108 = vmatpush1.msra.mxu0 %v3716
      %4109 = vmatprep.subr.mxu0 %v3721
      %4110 = vmatpush1.msra.mxu0 %v3720
      %4111 = vmatprep.subr.mxu0 %v3725
      %4112 = vmatpush1.msra.mxu0 %v3724
      %4113 = vmatprep.subr.mxu0 %v3729
      %4114 = vmatpush1.msra.mxu0 %v3728
      %4115 = vmatprep.subr.mxu0 %v3733
      %4116 = vmatpush1.msra.mxu0 %v3732
      %4117 = vmatprep.subr.mxu0 %v3737
      %4118 = vmatpush1.msra.mxu0 %v3736
      %4119 = vmatprep.subr.mxu0 %v3741
      %4120 = vmatpush1.msra.mxu0 %v3740
      %4121 = vmatprep.subr.mxu0 %v3745
      %4122 = vmatpush1.msra.mxu0 %v3744
      %4123 = vmatprep.subr.mxu0 %v3749
      %4124 = vmatpush1.msra.mxu0 %v3748
      %4125 = vmatprep.subr.mxu0 %v3753
      %4126 = vmatpush1.msra.mxu0 %v3752
      %4127 = vmatprep.subr.mxu0 %v3757
      %4128 = vmatpush1.msra.mxu0 %v3756
      %4129 = vmatprep.subr.mxu0 %v3761
      %4130 = vmatpush1.msra.mxu0 %v3760
      %4131 = vmatprep.subr.mxu0 %v3765
      %4132 = vmatpush1.msra.mxu0 %v3764
      %4133 = vmatprep.subr.mxu0 %v3769
      %4134 = vmatpush1.msra.mxu0 %v3768
      %4135 = vmatprep.subr.mxu0 %v3773
      %4136 = vmatpush1.msra.mxu0 %v3772
      %4137 = vmatprep.subr.mxu0 %v3777
      %4138 = vmatpush1.msra.mxu0 %v3776
      %4139 = vmatprep.subr.mxu0 %v3781
      %4140 = vmatpush1.msra.mxu0 %v3780
      %4141 = vmatprep.subr.mxu0 %v3785
      %4142 = vmatpush1.msra.mxu0 %v3784
      %4143 = vmatprep.subr.mxu0 %v3789
      %4144 = vmatpush1.msra.mxu0 %v3788
      %4145 = vmatprep.subr.mxu0 %v3793
      %4146 = vmatpush1.msra.mxu0 %v3792
      %4147 = vmatprep.subr.mxu0 %v3797
      %4148 = vmatpush1.msra.mxu0 %v3796
      %4149 = vmatprep.subr.mxu0 %v3801
      %4150 = vmatpush1.msra.mxu0 %v3800
      %4151 = vmatprep.subr.mxu0 %v3805
      %4152 = vmatpush1.msra.mxu0 %v3804
      %4153 = vmatprep.subr.mxu0 %v3809
      %4154 = vmatpush1.msra.mxu0 %v3808
      %4155 = vmatprep.subr.mxu0 %v3813
      %4156 = vmatpush1.msra.mxu0 %v3812
      %4157 = vmatprep.subr.mxu0 %v3817
      %4158 = vmatpush1.msra.mxu0 %v3816
      %4159 = vmatprep.subr.mxu0 %v3821
      %4160 = vmatpush1.msra.mxu0 %v3820
      %4161 = vmatprep.subr.mxu0 %v3825
      %4162 = vmatpush1.msra.mxu0 %v3824
      %4163 = vmatprep.subr.mxu0 %v3829
      %4164 = vmatpush1.msra.mxu0 %v3828
      %4165 = vmatprep.subr.mxu0 %v3833
      %4166 = vmatpush1.msra.mxu0 %v3832
      %4167 = vmatprep.subr.mxu0 %v3837
      %4168 = vmatpush1.msra.mxu0 %v3836
      %4169 = vmatprep.subr.mxu0 %v3841
      %4170 = vmatpush1.msra.mxu0 %v3840
      %4171 = vmatprep.mubr.f32.mxu0 %v3707
      %4172 = vmatmul.mubr.f32.gmra.mrb[0].mxu0 %v3706
      %v4173 = vpop.f32.mrb[0].mxu0
      %v4174 = vadd.f32 %v3939, %v4173
      %v4175 = vpop.f32.mrb[0].mxu0
      %v4176 = vadd.f32 %v3939, %v4175
      %4177 = vmatprep.mubr.f32.mxu0 %v3711
      %4178 = vmatmul.mubr.f32.gmra.mrb[0].mxu0 %v3710
      %v4179 = vpop.f32.mrb[0].mxu0
      %v4180 = vadd.f32 %v3944, %v4179
      %v4181 = vpop.f32.mrb[0].mxu0
      %v4182 = vadd.f32 %v3944, %v4181
      %4183 = vdwg.mxu0
      %4184 = vmatprep.subr.mxu0 %v3845
      %4185 = vmatpush1.msra.mxu0 %v3844
      %4186 = vmatprep.subr.mxu0 %v3849
      %4187 = vmatpush1.msra.mxu0 %v3848
      %4188 = vmatprep.subr.mxu0 %v3853
      %4189 = vmatpush1.msra.mxu0 %v3852
      %4190 = vmatprep.subr.mxu0 %v3857
      %4191 = vmatpush1.msra.mxu0 %v3856
      %4192 = vmatprep.subr.mxu0 %v3861
      %4193 = vmatpush1.msra.mxu0 %v3860
      %4194 = vmatprep.subr.mxu0 %v3865
      %4195 = vmatpush1.msra.mxu0 %v3864
      %4196 = vmatprep.subr.mxu0 %v3869
      %4197 = vmatpush1.msra.mxu0 %v3868
      %4198 = vmatprep.subr.mxu0 %v3873
      %4199 = vmatpush1.msra.mxu0 %v3872
      %4200 = vmatprep.subr.mxu0 %v3877
      %4201 = vmatpush1.msra.mxu0 %v3876
      %4202 = vmatprep.subr.mxu0 %v3881
      %4203 = vmatpush1.msra.mxu0 %v3880
      %4204 = vmatprep.subr.mxu0 %v3885
      %4205 = vmatpush1.msra.mxu0 %v3884
      %4206 = vmatprep.subr.mxu0 %v3889
      %4207 = vmatpush1.msra.mxu0 %v3888
      %4208 = vmatprep.subr.mxu0 %v3893
      %4209 = vmatpush1.msra.mxu0 %v3892
      %4210 = vmatprep.subr.mxu0 %v3897
      %4211 = vmatpush1.msra.mxu0 %v3896
      %4212 = vmatprep.subr.mxu0 %v3901
      %4213 = vmatpush1.msra.mxu0 %v3900
      %4214 = vmatprep.subr.mxu0 %v3905
      %4215 = vmatpush1.msra.mxu0 %v3904
      %4216 = vmatprep.subr.mxu0 %v3909
      %4217 = vmatpush1.msra.mxu0 %v3908
      %4218 = vmatprep.subr.mxu0 %v3913
      %4219 = vmatpush1.msra.mxu0 %v3912
      %4220 = vmatprep.subr.mxu0 %v3917
      %4221 = vmatpush1.msra.mxu0 %v3916
      %4222 = vmatprep.subr.mxu0 %v3921
      %4223 = vmatpush1.msra.mxu0 %v3920
      %4224 = vmatprep.subr.mxu0 %v3925
      %4225 = vmatpush1.msra.mxu0 %v3924
      %4226 = vmatprep.subr.mxu0 %v3929
      %4227 = vmatpush1.msra.mxu0 %v3928
      %4228 = vmatprep.subr.mxu0 %v3933
      %4229 = vmatpush1.msra.mxu0 %v3932
      %4230 = vmatprep.subr.mxu0 0.0
      %4231 = vmatpush1.msra.mxu0 0.0
      %4232 = vmatprep.subr.mxu0 0.0
      %4233 = vmatpush1.msra.mxu0 0.0
      %4234 = vmatprep.subr.mxu0 0.0
      %4235 = vmatpush1.msra.mxu0 0.0
      %4236 = vmatprep.subr.mxu0 0.0
      %4237 = vmatpush1.msra.mxu0 0.0
      %4238 = vmatprep.subr.mxu0 0.0
      %4239 = vmatpush1.msra.mxu0 0.0
      %4240 = vmatprep.subr.mxu0 0.0
      %4241 = vmatpush1.msra.mxu0 0.0
      %4242 = vmatprep.subr.mxu0 0.0
      %4243 = vmatpush1.msra.mxu0 0.0
      %4244 = vmatprep.subr.mxu0 0.0
      %4245 = vmatpush1.msra.mxu0 0.0
      %4246 = vmatprep.subr.mxu0 0.0
      %4247 = vmatpush1.msra.mxu0 0.0
      %4248 = vmatprep.mubr.f32.mxu0 %v3948
      %4249 = vmatmul.mubr.f32.gmra.mrb[0].mxu0 %v3708
      %v4250 = vpop.f32.mrb[0].mxu0
      %v4251 = vadd.f32 %v4174, %v4250
      %v4252 = vpop.f32.mrb[0].mxu0
      %v4253 = vadd.f32 %v4176, %v4252
      %4254 = vmatprep.mubr.f32.mxu0 %v3951
      %4255 = vmatmul.mubr.f32.gmra.mrb[0].mxu0 %v3712
      %v4256 = vpop.f32.mrb[0].mxu0
      %v4257 = vadd.f32 %v4180, %v4256
      %v4258 = vpop.f32.mrb[0].mxu0
      %v4259 = vadd.f32 %v4182, %v4258
      %4260 = vdwg.mxu0
      %4261 = vst [vmem:[%s413] sm:$0xff] %v4097
      %4262 = vst [vmem:[%s413 + $0x8] sm:$0xff] %v4099
      %4263 = vst [vmem:[%s413 + $0x10] sm:$0xff] %v4251
      %4264 = vst [vmem:[%s413 + $0x18] sm:$0xff] %v4253
      %4265 = vst [vmem:[%s413 + $0x20] sm:$0xff] %v4103
      %4266 = vst [vmem:[%s413 + $0x28] sm:$0xff] %v4105
      %4267 = vst [vmem:[%s413 + $0x30] sm:$0xff] %v4257
      %4268 = vst [vmem:[%s413 + $0x38] sm:$0xff] %v4259
      %p4269 = scmp.lt.s32.totalorder %s23, 1
      %s4270 = scalar_select %p4269, %s23, 1
      %s4271 = smul.addr %s4270, 8
      %s4272 = smul.addr %s4271, 8
      %s4273 = scalar_lea.vmem %s12, %s4272
      // Predicated region
      $region69: #{resnet_bloc_with_attn.1} parent=67 // pred_check
        %p4274 = pneg %p298
      $region70: #{resnet_bloc_with_attn.1} parent=67 // pred_check_branch
        %4276 = sbr.rel (%p4274) target = $region72
      $region71: #{resnet_bloc_with_attn.1} parent=67 // pred_region
        _
      $region72: #{resnet_bloc_with_attn.1} parent=67 // pred_fallthru
        _
    $region68: #{resnet_bloc_with_attn.1} parent=5 // pred_fallthru
      _
    %p4277 = scmp.le.s32.totalorder 2, %s18
    // Predicated region
    $region73: #{resnet_bloc_with_attn.1} parent=5 // pred_check
      %p4278 = pneg %p4277
    $region74: #{resnet_bloc_with_attn.1} parent=5 // pred_check_branch
      %4280 = sbr.rel (%p4278) target = $region76
    $region75: #{resnet_bloc_with_attn.1} parent=5 // pred_region
      %s4281 = ssub.s32 %s18, 2
      // Predicated region
      $region77: #{resnet_bloc_with_attn.1} parent=75 // pred_check
        %p4282 = pneg %p304
      $region78: #{resnet_bloc_with_attn.1} parent=75 // pred_check_branch
        %4284 = sbr.rel (%p4282) target = $region80
      $region79: #{resnet_bloc_with_attn.1} parent=75 // pred_region
        %p4285 = scmp.lt.s32.totalorder %s24, 1
        %s4286 = scalar_select %p4285, %s24, 1
        %s4287 = smul.addr %s4286, 8
        %s4288 = smul.addr %s4287, 8
        %s4289 = scalar_lea.vmem %s12, %s4288
      $region80: #{resnet_bloc_with_attn.1} parent=75 // pred_fallthru
        _
    $region76: #{resnet_bloc_with_attn.1} parent=5 // pred_fallthru
      _
  $region6: #{resnet_bloc_with_attn.1} parent=0 // loop_footer
    %s22 = sadd.s32 1, %s18
  $region7: #{resnet_bloc_with_attn.1} parent=0 // loop_footer_branch
    %17 = sbr.rel target = $region3
  $region8: #{resnet_bloc_with_attn.1} parent=0 // loop_exit
    _

</llo_original>
